<compile_context>
chip_gen: v7x
topology: tpu7x:2x2x1
jax: 0.10.0
libtpu: 0.0.40
codegen_flags: <defaults>
</compile_context>

<pallas_src>
import functools

import jax
import jax.numpy as jnp
from jax.experimental import pallas as pl
from jax.experimental.pallas import tpu as pltpu


# --------------------------------------------------------------------------------------
# Kernel 1: fused C_Aggregation = patchify conv (MXU matmul) + sequential aliased sweep.
# Output layout (L, Btot*E): every row touched by the serial chain is lane-dense.
# --------------------------------------------------------------------------------------
def _cagg_kernel(p_ref, w_ref, b_ref, o_ref, *, patch_seq, pn, bpb):
    # Phase 1: per-batch patchify matmul; this lane block's batches are stacked in lanes.
    ys = [jnp.dot(p_ref[b], w_ref[...], preferred_element_type=jnp.float32) + b_ref[...]
          for b in range(bpb)]
    orig = ys[0] if bpb == 1 else jnp.concatenate(ys, axis=-1)      # (L, bpb*E) f32
    o_ref[...] = orig

    # Phase 2: the reference's sequential *aliased* in-place averaging.  Updated rows are
    # carried as SSA values instead of round-tripping through o_ref, which is bit-identical
    # to the sequential semantics but exposes the true (short) dependency DAG and removes
    # every false RAW dependency through VMEM.
    cur = {}

    def row(j):
        return cur[j] if j in cur else orig[j:j + 1, :]             # lane-dense (1, lanes)

    for idx in patch_seq:                                           # static unroll, order kept
        acc = (row(idx - pn) + row(idx + pn) + row(idx - 1) + row(idx + 1)
               + row(idx - pn - 1) + row(idx - pn + 1)
               + row(idx + pn - 1) + row(idx + pn + 1)) * 0.125
        cur[idx] = acc
        o_ref[idx:idx + 1, :] = acc


def cagg_fused(patches, wmat, bias, patch_seq, pn):
    btot, L, cpp = patches.shape
    embed = wmat.shape[1]
    # 2-way split of the lane dim ("parallel") so both v7x TensorCores run the sweep.
    nblk = 2 if (btot % 2 == 0 and ((btot // 2) * embed) % 128 == 0) else 1
    bpb = btot // nblk
    return pl.pallas_call(
        functools.partial(_cagg_kernel, patch_seq=tuple(patch_seq), pn=pn, bpb=bpb),
        out_shape=jax.ShapeDtypeStruct((L, btot * embed), jnp.float32),
        grid_spec=pltpu.PrefetchScalarGridSpec(
            num_scalar_prefetch=0,
            grid=(nblk,),
            in_specs=[
                pl.BlockSpec((bpb, L, cpp), lambda i: (i, 0, 0)),
                pl.BlockSpec((cpp, embed), lambda i: (0, 0)),
                pl.BlockSpec((1, embed), lambda i: (0, 0)),
            ],
            out_specs=pl.BlockSpec((L, bpb * embed), lambda i: (0, i)),
        ),
        compiler_params=pltpu.CompilerParams(
            dimension_semantics=("parallel",),
            vmem_limit_bytes=32 * 1024 * 1024,   # headroom; tile the lane dim further if B/H grow
        ),
    )(patches.astype(jnp.bfloat16), wmat.astype(jnp.bfloat16),
      bias.reshape(1, embed).astype(jnp.float32))


def c_aggregation(x, w, b, p):
    Bt, C, H0, W0 = x.shape
    pn = H0 // p                                   # reference 'patch_num' (loop stride, pre-pad)
    embed = p * p * C
    xp = jnp.pad(x, ((0, 0), (0, 0), (p, p), (p, p)))              # F.pad constant 0
    Hp = H0 + 2 * p
    G = Hp // p
    L = G * G
    # TODO(synk): im2col and the final raw-reinterpret + crop are layout scrambles kept as
    # tiny XLA glue; the conv + serial sweep run in a single Pallas kernel.
    patches = xp.reshape(Bt, C, G, p, G, p).transpose(0, 2, 4, 1, 3, 5).reshape(Bt, L, C * p * p)
    wmat = w.reshape(embed, C * p * p).T                            # (C*p*p, embed)
    patch_seq = [i * pn + j for i in range(1, pn - 1) for j in range(1, pn)]
    out = cagg_fused(patches, wmat, b, patch_seq, pn)               # (L, Bt*embed)
    x_final = out.reshape(L, Bt, embed).transpose(1, 2, 0).reshape(Bt, embed, G, G)
    x_reint = x_final.reshape(Bt, C, Hp, Hp)                        # raw reinterpret (as reference)
    return x_reint[:, :, p:H0 + p, p:H0 + p]


# --------------------------------------------------------------------------------------
# Kernel 2: fc1 = 1x1 conv + folded BatchNorm as ONE wide lane-dense matmul (Cin, Btot*HW).
# --------------------------------------------------------------------------------------
def _fc1_kernel(x_ref, w_ref, b_ref, o_ref):
    o_ref[...] = (jnp.dot(w_ref[...], x_ref[...], preferred_element_type=jnp.float32)
                  + b_ref[...])


def conv1x1_bn_cf(x_cf, w, b, gamma, beta, mean, var, eps=1e-5):
    # x_cf: (Cin, M) channels-first, M = Btot*H*W lanes.  BN (inference) folded into w/b.
    Cin, M = x_cf.shape
    Cout = w.shape[0]
    scale = gamma / jnp.sqrt(var + eps)
    wf = (w.reshape(Cout, Cin) * scale[:, None]).astype(jnp.bfloat16)
    bf = (b * scale + (beta - mean * scale)).reshape(Cout, 1).astype(jnp.float32)
    nblk = 2 if M % 256 == 0 else 1                 # 2-way lane split for v7x megacore
    mb = M // nblk
    return pl.pallas_call(
        _fc1_kernel,
        out_shape=jax.ShapeDtypeStruct((Cout, M), jnp.float32),
        grid_spec=pltpu.PrefetchScalarGridSpec(
            num_scalar_prefetch=0,
            grid=(nblk,),
            in_specs=[
                pl.BlockSpec((Cin, mb), lambda i: (0, i)),
                pl.BlockSpec((Cout, Cin), lambda i: (0, 0)),
                pl.BlockSpec((Cout, 1), lambda i: (0, 0)),
            ],
            out_specs=pl.BlockSpec((Cout, mb), lambda i: (0, i)),
        ),
        compiler_params=pltpu.CompilerParams(dimension_semantics=("parallel",)),
    )(x_cf.astype(jnp.bfloat16), wf, bf)


# --------------------------------------------------------------------------------------
# Kernel 3: kNN similarity with the L2 normalization fused in-kernel.
# On unit vectors dist = 2 - 2*inner, so top-k(-dist) == top-k(inner): the |.|^2 terms and
# the 1-D intermediate are dropped entirely.  bf16 MXU operands, f32 accumulation.
# --------------------------------------------------------------------------------------
def _knn_inner_kernel(x_ref, z_ref, o_ref, *, eps):
    x = x_ref[0]                                    # (N, C) f32
    z = z_ref[0]                                    # (C, Nr) f32
    xn = x / jnp.maximum(jnp.sqrt(jnp.sum(x * x, axis=-1, keepdims=True)), eps)
    zsq = z * z
    zs = zsq[0:1, :]
    for c in range(1, z.shape[0]):                  # static unroll: sublane-axis sum of squares
        zs = zs + zsq[c:c + 1, :]
    zn = z / jnp.maximum(jnp.sqrt(zs), eps)
    o_ref[0] = jnp.dot(xn.astype(jnp.bfloat16), zn.astype(jnp.bfloat16),
                       preferred_element_type=jnp.float32)           # (N, Nr)


def knn_inner(xt, z_b):
    B, N, C = xt.shape
    Nr = z_b.shape[2]
    return pl.pallas_call(
        functools.partial(_knn_inner_kernel, eps=1e-12),              # F.normalize default eps
        out_shape=jax.ShapeDtypeStruct((B, N, Nr), jnp.float32),
        grid_spec=pltpu.PrefetchScalarGridSpec(
            num_scalar_prefetch=0,
            grid=(B,),
            in_specs=[
                pl.BlockSpec((1, N, C), lambda b: (b, 0, 0)),
                pl.BlockSpec((1, C, Nr), lambda b: (b, 0, 0)),
            ],
            out_specs=pl.BlockSpec((1, N, Nr), lambda b: (b, 0, 0)),
        ),
        compiler_params=pltpu.CompilerParams(dimension_semantics=("parallel",)),
    )(xt.astype(jnp.float32), z_b.astype(jnp.float32))


# --------------------------------------------------------------------------------------
# Kernel 4 (channels-first): EdgeConv with the kNN gather fused as one-hot matmuls
# + max over k + fc2(+BN folded) + BOTH residual adds.  Lane axis = spatial (N).
#   W_e @ [x_i; x_j - x_i] = (W_a - W_b) @ x_i + (W_b @ z) @ onehot_j
# --------------------------------------------------------------------------------------
def _edge_fc2_res_kernel(idx_ref, x_ref, z_ref, xr_ref, yr_ref,
                         wd_ref, wb_ref, be_ref, w2_ref, b2_ref,
                         ox_ref, oy_ref, *, k, nr):
    x = x_ref[...].astype(jnp.bfloat16)              # (C, N)
    z = z_ref[0].astype(jnp.bfloat16)                # (C, Nr)  -- resident, tiny
    idx = idx_ref[0]                                 # (k, N) int32
    n = x.shape[1]
    a = jnp.dot(wd_ref[...], x, preferred_element_type=jnp.float32) + be_ref[...]   # (2C, N)
    zb = jnp.dot(wb_ref[...], z, preferred_element_type=jnp.float32
                 ).astype(jnp.bfloat16)              # (2C, Nr)
    rows = jax.lax.broadcasted_iota(jnp.int32, (nr, n), 0)
    m = None
    for j in range(k):                               # static unroll, k = 9
        onehot = jnp.where(rows == idx[j:j + 1, :], 1.0, 0.0).astype(jnp.bfloat16)   # (Nr, N)
        e = jnp.maximum(a + jnp.dot(zb, onehot, preferred_element_type=jnp.float32), 0.0)
        m = e if m is None else jnp.maximum(m, e)    # max over the k neighbours
    xy = (jnp.dot(w2_ref[...], m.astype(jnp.bfloat16), preferred_element_type=jnp.float32)
          + b2_ref[...])                             # fc2 (+BN folded), (C, N) f32
    ox_ref[0] = xy + xr_ref[0]                       # fused residuals, lane-dense stores
    oy_ref[0] = xy + yr_ref[0]


def edge_fc2_residual(nn_idx, x_all_cf, z_b, xres, yres, wd, wb, be, w2, b2):
    B, k, N = nn_idx.shape
    C = xres.shape[1]
    Nr = z_b.shape[2]
    C2 = wd.shape[0]
    return pl.pallas_call(
        functools.partial(_edge_fc2_res_kernel, k=k, nr=Nr),
        out_shape=(jax.ShapeDtypeStruct((B, C, N), jnp.float32),
                   jax.ShapeDtypeStruct((B, C, N), jnp.float32)),
        grid_spec=pltpu.PrefetchScalarGridSpec(
            num_scalar_prefetch=0,
            grid=(B,),
            in_specs=[
                pl.BlockSpec((1, k, N), lambda b: (b, 0, 0)),      # kNN indices
                pl.BlockSpec((C, N), lambda b: (0, b)),            # x = lane block of fc1 output
                pl.BlockSpec((1, C, Nr), lambda b: (b, 0, 0)),     # z (pooled y branch)
                pl.BlockSpec((1, C, N), lambda b: (b, 0, 0)),      # x residual (channels-first)
                pl.BlockSpec((1, C, N), lambda b: (b, 0, 0)),      # y residual (channels-first)
                pl.BlockSpec((C2, C), lambda b: (0, 0)),           # W_a - W_b
                pl.BlockSpec((C2, C), lambda b: (0, 0)),           # W_b
                pl.BlockSpec((C2, 1), lambda b: (0, 0)),           # edge-conv bias
                pl.BlockSpec((C, C2), lambda b: (0, 0)),           # fc2 (+BN) weight
                pl.BlockSpec((C, 1), lambda b: (0, 0)),            # fc2 (+BN) bias
            ],
            out_specs=(pl.BlockSpec((1, C, N), lambda b: (b, 0, 0)),
                       pl.BlockSpec((1, C, N), lambda b: (b, 0, 0))),
        ),
        compiler_params=pltpu.CompilerParams(dimension_semantics=("parallel",)),
    )(nn_idx, x_all_cf, z_b.astype(jnp.float32), xres, yres, wd, wb, be, w2, b2)


# --------------------------------------------------------------------------------------
# Module glue (tiny reshapes / pooling / top-k / parameter folding in plain JAX)
# --------------------------------------------------------------------------------------
def dy_graph_conv_fc2_res(fc1_out, x_orig, y_orig, params, k=9, r=2):
    # fc1_out: (C, 2B*N) channels-first; first B*N lanes = x branch, rest = y branch.
    B, C, H, W = x_orig.shape
    N = H * W
    Hr, Wr = H // r, W // r
    Nr = Hr * Wr
    # r > 1 branch of DyGraphConv2d: z = avg_pool2d(y_faam, r, r)  (tiny XLA glue)
    yh = fc1_out[:, B * N:]
    z_b = (yh.reshape(C, B, Hr, r, Wr, r).mean(axis=(3, 5))
           .reshape(C, B, Nr).transpose(1, 0, 2))                   # (B, C, Nr)
    # kNN graph: fused normalize + inner product (K3), then top-k of the similarity.
    xt = fc1_out[:, :B * N].reshape(C, B, N).transpose(1, 2, 0)     # (B, N, C)  (~8 KiB)
    inner = knn_inner(xt, z_b)                                      # (B, N, Nr)
    # TODO(synk): top-k neighbour selection has no clean Pallas equivalent -> lax.top_k glue
    _, nn_idx = jax.lax.top_k(inner, k)                             # (B, N, k)
    nn_idx = nn_idx.transpose(0, 2, 1).astype(jnp.int32)            # (B, k, N)

    # Host-side constant transforms: split edge-conv weight, fold BN2 into fc2.
    we = params["edge_w"].reshape(2 * C, 2 * C)                     # (out, in)
    w_a, w_b = we[:, :C], we[:, C:]
    wd = (w_a - w_b).astype(jnp.bfloat16)
    wbb = w_b.astype(jnp.bfloat16)
    be = params["edge_b"].reshape(2 * C, 1).astype(jnp.float32)
    scale2 = params["bn2_gamma"] / jnp.sqrt(params["bn2_var"] + 1e-5)
    w2 = (params["fc2_w"].reshape(C, 2 * C) * scale2[:, None]).astype(jnp.bfloat16)
    b2 = (params["fc2_b"] * scale2 + (params["bn2_beta"] - params["bn2_mean"] * scale2)
          ).reshape(C, 1).astype(jnp.float32)

    # Residuals stay channels-first: plain reshapes, no transposes.
    xres = x_orig.reshape(B, C, N).astype(jnp.float32)
    yres = y_orig.reshape(B, C, N).astype(jnp.float32)
    ox, oy = edge_fc2_residual(nn_idx, fc1_out, z_b, xres, yres, wd, wbb, be, w2, b2)
    return ox.reshape(B, C, H, W), oy.reshape(B, C, H, W)


def align_grapher_forward(x, y, params, patch_size=4, r=2, k=9):
    B, C, H, W = x.shape
    N = H * W
    # x- and y-branches of C_Aggregation + fc1 run as one stacked batch (one launch each,
    # every grid has >=2 parallel blocks for v7x's two TensorCores).
    xy_in = jnp.concatenate([x, y], axis=0)                         # (2B, C, H, W)
    faam = c_aggregation(xy_in, params["cagg_w"], params["cagg_b"], patch_size)
    # Channels-first lane-dense layout for the rest of the pipeline.
    faam_cf = faam.transpose(1, 0, 2, 3).reshape(C, 2 * B * N)      # (C, 2B*HW)
    fc1_out = conv1x1_bn_cf(faam_cf, params["fc1_w"], params["fc1_b"],
                            params["bn1_gamma"], params["bn1_beta"],
                            params["bn1_mean"], params["bn1_var"])  # (C, 2B*HW) f32
    # graph conv + fc2 + BN + residuals (drop_path = 0.0 -> Identity) fused in one kernel.
    return dy_graph_conv_fc2_res(fc1_out, x, y, params, k=k, r=r)


def init_params(key, C, p):
    embed = p * p * C
    ks = jax.random.split(key, 8)
    return {
        "cagg_w": jax.random.normal(ks[0], (embed, C, p, p), jnp.float32) * 0.05,
        "cagg_b": jax.random.normal(ks[1], (embed,), jnp.float32) * 0.05,
        "fc1_w": jax.random.normal(ks[2], (C, C, 1, 1), jnp.float32) * 0.2,
        "fc1_b": jax.random.normal(ks[3], (C,), jnp.float32) * 0.1,
        "edge_w": jax.random.normal(ks[4], (2 * C, 2 * C, 1, 1), jnp.float32) * 0.2,
        "edge_b": jax.random.normal(ks[5], (2 * C,), jnp.float32) * 0.1,
        "fc2_w": jax.random.normal(ks[6], (C, 2 * C, 1, 1), jnp.float32) * 0.2,
        "fc2_b": jax.random.normal(ks[7], (C,), jnp.float32) * 0.1,
        # BatchNorm2d (inference mode, PyTorch default init)
        "bn1_gamma": jnp.ones((C,), jnp.float32), "bn1_beta": jnp.zeros((C,), jnp.float32),
        "bn1_mean": jnp.zeros((C,), jnp.float32), "bn1_var": jnp.ones((C,), jnp.float32),
        "bn2_gamma": jnp.ones((C,), jnp.float32), "bn2_beta": jnp.zeros((C,), jnp.float32),
        "bn2_mean": jnp.zeros((C,), jnp.float32), "bn2_var": jnp.ones((C,), jnp.float32),
    }


if __name__ == "__main__":
    B, C, H, W = 2, 4, 16, 16
    patch_size, r, k = 4, 2, 9      # r=2: the reference requires r>1 (z undefined for r=1)
    key = jax.random.PRNGKey(0)
    kx, ky, kp = jax.random.split(key, 3)
    x = jax.random.normal(kx, (B, C, H, W), jnp.float32)
    y = jax.random.normal(ky, (B, C, H, W), jnp.float32)
    params = init_params(kp, C, patch_size)

    fwd = jax.jit(functools.partial(align_grapher_forward, patch_size=patch_size, r=r, k=k))
    xo, yo = fwd(x, y, params)
    jax.block_until_ready((xo, yo))
    assert xo.shape == (B, C, H, W) and yo.shape == (B, C, H, W)
    assert jnp.all(jnp.isfinite(xo)) and jnp.all(jnp.isfinite(yo))
    print("KERNEL_OK")
</pallas_src>

<mosaic_0001>
module attributes {stable_mosaic.version = 11 : i64} {
  func.func @_cagg_kernel(%arg0: i32, %arg1: memref<2x36x64xbf16, #tpu.memory_space<vmem>>, %arg2: memref<64x64xbf16, #tpu.memory_space<vmem>>, %arg3: memref<1x64xf32, #tpu.memory_space<vmem>>, %arg4: memref<36x128xf32, #tpu.memory_space<vmem>>) attributes {dimension_semantics = [#tpu.dimension_semantics<parallel>], iteration_bounds = array<i64: 2>, scalar_prefetch = 0 : i64, scratch_operands = 0 : i64, tpu.core_type = #tpu.core_type<tc>, window_params = [{transform_indices = @transform_0, window_bounds = array<i64: 2, 36, 64>}, {pipeline_mode = #tpu.pipeline_mode<synchronous>, transform_indices = @transform_1, window_bounds = array<i64: 64, 64>}, {pipeline_mode = #tpu.pipeline_mode<synchronous>, transform_indices = @transform_2, window_bounds = array<i64: 1, 64>}, {transform_indices = @transform_3, window_bounds = array<i64: 36, 128>}]} {
    %c0 = arith.constant 0 : index
    %c0_0 = arith.constant 0 : index
    %c0_1 = arith.constant 0 : index
    %0 = vector.load %arg1[%c0, %c0_0, %c0_1] : memref<2x36x64xbf16, #tpu.memory_space<vmem>>, vector<1x36x64xbf16>
    %1 = vector.shape_cast %0 : vector<1x36x64xbf16> to vector<36x64xbf16>
    %c0_2 = arith.constant 0 : index
    %c0_3 = arith.constant 0 : index
    %2 = vector.load %arg2[%c0_2, %c0_3] : memref<64x64xbf16, #tpu.memory_space<vmem>>, vector<64x64xbf16>
    %cst = arith.constant dense<0.000000e+00> : vector<36x64xf32>
    %3 = tpu.matmul %1, %2, %cst {dimension_numbers = #tpu.dot_dimension_numbers<[1], [0], [0], [1], [0, 0, 1, 1], [], []>} : vector<36x64xbf16>, vector<64x64xbf16>, vector<36x64xf32> -> vector<36x64xf32>
    %c0_4 = arith.constant 0 : index
    %c0_5 = arith.constant 0 : index
    %4 = vector.load %arg3[%c0_4, %c0_5] : memref<1x64xf32, #tpu.memory_space<vmem>>, vector<1x64xf32>
    %5 = vector.broadcast %4 : vector<1x64xf32> to vector<36x64xf32>
    %6 = arith.addf %3, %5 : vector<36x64xf32>
    %c1 = arith.constant 1 : index
    %c0_6 = arith.constant 0 : index
    %c0_7 = arith.constant 0 : index
    %7 = vector.load %arg1[%c1, %c0_6, %c0_7] : memref<2x36x64xbf16, #tpu.memory_space<vmem>>, vector<1x36x64xbf16>
    %8 = vector.shape_cast %7 : vector<1x36x64xbf16> to vector<36x64xbf16>
    %c0_8 = arith.constant 0 : index
    %c0_9 = arith.constant 0 : index
    %9 = vector.load %arg2[%c0_8, %c0_9] : memref<64x64xbf16, #tpu.memory_space<vmem>>, vector<64x64xbf16>
    %cst_10 = arith.constant dense<0.000000e+00> : vector<36x64xf32>
    %10 = tpu.matmul %8, %9, %cst_10 {dimension_numbers = #tpu.dot_dimension_numbers<[1], [0], [0], [1], [0, 0, 1, 1], [], []>} : vector<36x64xbf16>, vector<64x64xbf16>, vector<36x64xf32> -> vector<36x64xf32>
    %c0_11 = arith.constant 0 : index
    %c0_12 = arith.constant 0 : index
    %11 = vector.load %arg3[%c0_11, %c0_12] : memref<1x64xf32, #tpu.memory_space<vmem>>, vector<1x64xf32>
    %12 = vector.broadcast %11 : vector<1x64xf32> to vector<36x64xf32>
    %13 = arith.addf %10, %12 : vector<36x64xf32>
    %14 = tpu.concatenate %6, %13 in 1 : vector<36x64xf32>, vector<36x64xf32> -> vector<36x128xf32>
    %c0_13 = arith.constant 0 : index
    %c0_14 = arith.constant 0 : index
    %15 = vector.load %arg4[%c0_13, %c0_14] : memref<36x128xf32, #tpu.memory_space<vmem>>, vector<36x128xf32>
    tpu.vector_store %arg4[%c0_13, %c0_14], %14 {strides = array<i32>} : memref<36x128xf32, #tpu.memory_space<vmem>>, vector<36x128xf32>,
    %16 = vector.extract_strided_slice %14 {offsets = [1, 0], sizes = [1, 128], strides = [1, 1]} : vector<36x128xf32> to vector<1x128xf32>
    %17 = vector.extract_strided_slice %14 {offsets = [9, 0], sizes = [1, 128], strides = [1, 1]} : vector<36x128xf32> to vector<1x128xf32>
    %18 = arith.addf %16, %17 : vector<1x128xf32>
    %19 = vector.extract_strided_slice %14 {offsets = [4, 0], sizes = [1, 128], strides = [1, 1]} : vector<36x128xf32> to vector<1x128xf32>
    %20 = arith.addf %18, %19 : vector<1x128xf32>
    %21 = vector.extract_strided_slice %14 {offsets = [6, 0], sizes = [1, 128], strides = [1, 1]} : vector<36x128xf32> to vector<1x128xf32>
    %22 = arith.addf %20, %21 : vector<1x128xf32>
    %23 = vector.extract_strided_slice %14 {offsets = [0, 0], sizes = [1, 128], strides = [1, 1]} : vector<36x128xf32> to vector<1x128xf32>
    %24 = arith.addf %22, %23 : vector<1x128xf32>
    %25 = vector.extract_strided_slice %14 {offsets = [2, 0], sizes = [1, 128], strides = [1, 1]} : vector<36x128xf32> to vector<1x128xf32>
    %26 = arith.addf %24, %25 : vector<1x128xf32>
    %27 = vector.extract_strided_slice %14 {offsets = [8, 0], sizes = [1, 128], strides = [1, 1]} : vector<36x128xf32> to vector<1x128xf32>
    %28 = arith.addf %26, %27 : vector<1x128xf32>
    %29 = vector.extract_strided_slice %14 {offsets = [10, 0], sizes = [1, 128], strides = [1, 1]} : vector<36x128xf32> to vector<1x128xf32>
    %30 = arith.addf %28, %29 : vector<1x128xf32>
    %cst_15 = arith.constant 1.250000e-01 : f32
    %31 = vector.broadcast %cst_15 : f32 to vector<1x128xf32>
    %32 = arith.mulf %30, %31 : vector<1x128xf32>
    %c5 = arith.constant 5 : index
    %c0_16 = arith.constant 0 : index
    %33 = vector.load %arg4[%c5, %c0_16] : memref<36x128xf32, #tpu.memory_space<vmem>>, vector<1x128xf32>
    tpu.vector_store %arg4[%c5, %c0_16], %32 {strides = array<i32>} : memref<36x128xf32, #tpu.memory_space<vmem>>, vector<1x128xf32>,
    %34 = vector.extract_strided_slice %14 {offsets = [2, 0], sizes = [1, 128], strides = [1, 1]} : vector<36x128xf32> to vector<1x128xf32>
    %35 = vector.extract_strided_slice %14 {offsets = [10, 0], sizes = [1, 128], strides = [1, 1]} : vector<36x128xf32> to vector<1x128xf32>
    %36 = arith.addf %34, %35 : vector<1x128xf32>
    %37 = arith.addf %36, %32 : vector<1x128xf32>
    %38 = vector.extract_strided_slice %14 {offsets = [7, 0], sizes = [1, 128], strides = [1, 1]} : vector<36x128xf32> to vector<1x128xf32>
    %39 = arith.addf %37, %38 : vector<1x128xf32>
    %40 = vector.extract_strided_slice %14 {offsets = [1, 0], sizes = [1, 128], strides = [1, 1]} : vector<36x128xf32> to vector<1x128xf32>
    %41 = arith.addf %39, %40 : vector<1x128xf32>
    %42 = vector.extract_strided_slice %14 {offsets = [3, 0], sizes = [1, 128], strides = [1, 1]} : vector<36x128xf32> to vector<1x128xf32>
    %43 = arith.addf %41, %42 : vector<1x128xf32>
    %44 = vector.extract_strided_slice %14 {offsets = [9, 0], sizes = [1, 128], strides = [1, 1]} : vector<36x128xf32> to vector<1x128xf32>
    %45 = arith.addf %43, %44 : vector<1x128xf32>
    %46 = vector.extract_strided_slice %14 {offsets = [11, 0], sizes = [1, 128], strides = [1, 1]} : vector<36x128xf32> to vector<1x128xf32>
    %47 = arith.addf %45, %46 : vector<1x128xf32>
    %cst_17 = arith.constant 1.250000e-01 : f32
    %48 = vector.broadcast %cst_17 : f32 to vector<1x128xf32>
    %49 = arith.mulf %47, %48 : vector<1x128xf32>
    %c6 = arith.constant 6 : index
    %c0_18 = arith.constant 0 : index
    %50 = vector.load %arg4[%c6, %c0_18] : memref<36x128xf32, #tpu.memory_space<vmem>>, vector<1x128xf32>
    tpu.vector_store %arg4[%c6, %c0_18], %49 {strides = array<i32>} : memref<36x128xf32, #tpu.memory_space<vmem>>, vector<1x128xf32>,
    %51 = vector.extract_strided_slice %14 {offsets = [3, 0], sizes = [1, 128], strides = [1, 1]} : vector<36x128xf32> to vector<1x128xf32>
    %52 = vector.extract_strided_slice %14 {offsets = [11, 0], sizes = [1, 128], strides = [1, 1]} : vector<36x128xf32> to vector<1x128xf32>
    %53 = arith.addf %51, %52 : vector<1x128xf32>
    %54 = arith.addf %53, %49 : vector<1x128xf32>
    %55 = vector.extract_strided_slice %14 {offsets = [8, 0], sizes = [1, 128], strides = [1, 1]} : vector<36x128xf32> to vector<1x128xf32>
    %56 = arith.addf %54, %55 : vector<1x128xf32>
    %57 = vector.extract_strided_slice %14 {offsets = [2, 0], sizes = [1, 128], strides = [1, 1]} : vector<36x128xf32> to vector<1x128xf32>
    %58 = arith.addf %56, %57 : vector<1x128xf32>
    %59 = vector.extract_strided_slice %14 {offsets = [4, 0], sizes = [1, 128], strides = [1, 1]} : vector<36x128xf32> to vector<1x128xf32>
    %60 = arith.addf %58, %59 : vector<1x128xf32>
    %61 = vector.extract_strided_slice %14 {offsets = [10, 0], sizes = [1, 128], strides = [1, 1]} : vector<36x128xf32> to vector<1x128xf32>
    %62 = arith.addf %60, %61 : vector<1x128xf32>
    %63 = vector.extract_strided_slice %14 {offsets = [12, 0], sizes = [1, 128], strides = [1, 1]} : vector<36x128xf32> to vector<1x128xf32>
    %64 = arith.addf %62, %63 : vector<1x128xf32>
    %cst_19 = arith.constant 1.250000e-01 : f32
    %65 = vector.broadcast %cst_19 : f32 to vector<1x128xf32>
    %66 = arith.mulf %64, %65 : vector<1x128xf32>
    %c7 = arith.constant 7 : index
    %c0_20 = arith.constant 0 : index
    %67 = vector.load %arg4[%c7, %c0_20] : memref<36x128xf32, #tpu.memory_space<vmem>>, vector<1x128xf32>
    tpu.vector_store %arg4[%c7, %c0_20], %66 {strides = array<i32>} : memref<36x128xf32, #tpu.memory_space<vmem>>, vector<1x128xf32>,
    %68 = vector.extract_strided_slice %14 {offsets = [13, 0], sizes = [1, 128], strides = [1, 1]} : vector<36x128xf32> to vector<1x128xf32>
    %69 = arith.addf %32, %68 : vector<1x128xf32>
    %70 = vector.extract_strided_slice %14 {offsets = [8, 0], sizes = [1, 128], strides = [1, 1]} : vector<36x128xf32> to vector<1x128xf32>
    %71 = arith.addf %69, %70 : vector<1x128xf32>
    %72 = vector.extract_strided_slice %14 {offsets = [10, 0], sizes = [1, 128], strides = [1, 1]} : vector<36x128xf32> to vector<1x128xf32>
    %73 = arith.addf %71, %72 : vector<1x128xf32>
    %74 = vector.extract_strided_slice %14 {offsets = [4, 0], sizes = [1, 128], strides = [1, 1]} : vector<36x128xf32> to vector<1x128xf32>
    %75 = arith.addf %73, %74 : vector<1x128xf32>
    %76 = arith.addf %75, %49 : vector<1x128xf32>
    %77 = vector.extract_strided_slice %14 {offsets = [12, 0], sizes = [1, 128], strides = [1, 1]} : vector<36x128xf32> to vector<1x128xf32>
    %78 = arith.addf %76, %77 : vector<1x128xf32>
    %79 = vector.extract_strided_slice %14 {offsets = [14, 0], sizes = [1, 128], strides = [1, 1]} : vector<36x128xf32> to vector<1x128xf32>
    %80 = arith.addf %78, %79 : vector<1x128xf32>
    %cst_21 = arith.constant 1.250000e-01 : f32
    %81 = vector.broadcast %cst_21 : f32 to vector<1x128xf32>
    %82 = arith.mulf %80, %81 : vector<1x128xf32>
    %c9 = arith.constant 9 : index
    %c0_22 = arith.constant 0 : index
    %83 = vector.load %arg4[%c9, %c0_22] : memref<36x128xf32, #tpu.memory_space<vmem>>, vector<1x128xf32>
    tpu.vector_store %arg4[%c9, %c0_22], %82 {strides = array<i32>} : memref<36x128xf32, #tpu.memory_space<vmem>>, vector<1x128xf32>,
    %84 = vector.extract_strided_slice %14 {offsets = [14, 0], sizes = [1, 128], strides = [1, 1]} : vector<36x128xf32> to vector<1x128xf32>
    %85 = arith.addf %49, %84 : vector<1x128xf32>
    %86 = arith.addf %85, %82 : vector<1x128xf32>
    %87 = vector.extract_strided_slice %14 {offsets = [11, 0], sizes = [1, 128], strides = [1, 1]} : vector<36x128xf32> to vector<1x128xf32>
    %88 = arith.addf %86, %87 : vector<1x128xf32>
    %89 = arith.addf %88, %32 : vector<1x128xf32>
    %90 = arith.addf %89, %66 : vector<1x128xf32>
    %91 = vector.extract_strided_slice %14 {offsets = [13, 0], sizes = [1, 128], strides = [1, 1]} : vector<36x128xf32> to vector<1x128xf32>
    %92 = arith.addf %90, %91 : vector<1x128xf32>
    %93 = vector.extract_strided_slice %14 {offsets = [15, 0], sizes = [1, 128], strides = [1, 1]} : vector<36x128xf32> to vector<1x128xf32>
    %94 = arith.addf %92, %93 : vector<1x128xf32>
    %cst_23 = arith.constant 1.250000e-01 : f32
    %95 = vector.broadcast %cst_23 : f32 to vector<1x128xf32>
    %96 = arith.mulf %94, %95 : vector<1x128xf32>
    %c10 = arith.constant 10 : index
    %c0_24 = arith.constant 0 : index
    %97 = vector.load %arg4[%c10, %c0_24] : memref<36x128xf32, #tpu.memory_space<vmem>>, vector<1x128xf32>
    tpu.vector_store %arg4[%c10, %c0_24], %96 {strides = array<i32>} : memref<36x128xf32, #tpu.memory_space<vmem>>, vector<1x128xf32>,
    %98 = vector.extract_strided_slice %14 {offsets = [15, 0], sizes = [1, 128], strides = [1, 1]} : vector<36x128xf32> to vector<1x128xf32>
    %99 = arith.addf %66, %98 : vector<1x128xf32>
    %100 = arith.addf %99, %96 : vector<1x128xf32>
    %101 = vector.extract_strided_slice %14 {offsets = [12, 0], sizes = [1, 128], strides = [1, 1]} : vector<36x128xf32> to vector<1x128xf32>
    %102 = arith.addf %100, %101 : vector<1x128xf32>
    %103 = arith.addf %102, %49 : vector<1x128xf32>
    %104 = vector.extract_strided_slice %14 {offsets = [8, 0], sizes = [1, 128], strides = [1, 1]} : vector<36x128xf32> to vector<1x128xf32>
    %105 = arith.addf %103, %104 : vector<1x128xf32>
    %106 = vector.extract_strided_slice %14 {offsets = [14, 0], sizes = [1, 128], strides = [1, 1]} : vector<36x128xf32> to vector<1x128xf32>
    %107 = arith.addf %105, %106 : vector<1x128xf32>
    %108 = vector.extract_strided_slice %14 {offsets = [16, 0], sizes = [1, 128], strides = [1, 1]} : vector<36x128xf32> to vector<1x128xf32>
    %109 = arith.addf %107, %108 : vector<1x128xf32>
    %cst_25 = arith.constant 1.250000e-01 : f32
    %110 = vector.broadcast %cst_25 : f32 to vector<1x128xf32>
    %111 = arith.mulf %109, %110 : vector<1x128xf32>
    %c11 = arith.constant 11 : index
    %c0_26 = arith.constant 0 : index
    %112 = vector.load %arg4[%c11, %c0_26] : memref<36x128xf32, #tpu.memory_space<vmem>>, vector<1x128xf32>
    tpu.vector_store %arg4[%c11, %c0_26], %111 {strides = array<i32>} : memref<36x128xf32, #tpu.memory_space<vmem>>, vector<1x128xf32>,
    return
  }
  func.func @transform_0(%arg0: i32) -> (i32, i32, i32) {
    %c0_i32 = arith.constant 0 : i32
    %c0_i32_0 = arith.constant 0 : i32
    %c0_i32_1 = arith.constant 0 : i32
    return %arg0, %c0_i32, %c0_i32_0 : i32, i32, i32
  }
  func.func @transform_1(%arg0: i32) -> (i32, i32) {
    %c0_i32 = arith.constant 0 : i32
    %c0_i32_0 = arith.constant 0 : i32
    %c0_i32_1 = arith.constant 0 : i32
    return %c0_i32, %c0_i32_0 : i32, i32
  }
  func.func @transform_2(%arg0: i32) -> (i32, i32) {
    %c0_i32 = arith.constant 0 : i32
    %c0_i32_0 = arith.constant 0 : i32
    %c0_i32_1 = arith.constant 0 : i32
    return %c0_i32, %c0_i32_0 : i32, i32
  }
  func.func @transform_3(%arg0: i32) -> (i32, i32) {
    %c0_i32 = arith.constant 0 : i32
    %c0_i32_0 = arith.constant 0 : i32
    return %c0_i32, %arg0 : i32, i32
  }
}

module attributes {stable_mosaic.version = 11 : i64} {
  func.func @_fc1_kernel(%arg0: i32, %arg1: memref<4x512xbf16, #tpu.memory_space<vmem>>, %arg2: memref<4x4xbf16, #tpu.memory_space<vmem>>, %arg3: memref<4x1xf32, #tpu.memory_space<vmem>>, %arg4: memref<4x512xf32, #tpu.memory_space<vmem>>) attributes {dimension_semantics = [#tpu.dimension_semantics<parallel>], iteration_bounds = array<i64: 2>, scalar_prefetch = 0 : i64, scratch_operands = 0 : i64, tpu.core_type = #tpu.core_type<tc>, window_params = [{transform_indices = @transform_0, window_bounds = array<i64: 4, 512>}, {pipeline_mode = #tpu.pipeline_mode<synchronous>, transform_indices = @transform_1, window_bounds = array<i64: 4, 4>}, {pipeline_mode = #tpu.pipeline_mode<synchronous>, transform_indices = @transform_2, window_bounds = array<i64: 4, 1>}, {transform_indices = @transform_3, window_bounds = array<i64: 4, 512>}]} {
    %c0 = arith.constant 0 : index
    %c0_0 = arith.constant 0 : index
    %0 = vector.load %arg2[%c0, %c0_0] : memref<4x4xbf16, #tpu.memory_space<vmem>>, vector<4x4xbf16>
    %c0_1 = arith.constant 0 : index
    %c0_2 = arith.constant 0 : index
    %1 = vector.load %arg1[%c0_1, %c0_2] : memref<4x512xbf16, #tpu.memory_space<vmem>>, vector<4x512xbf16>
    %cst = arith.constant dense<0.000000e+00> : vector<4x512xf32>
    %2 = tpu.matmul %0, %1, %cst {dimension_numbers = #tpu.dot_dimension_numbers<[1], [0], [0], [1], [0, 0, 1, 1], [], []>} : vector<4x4xbf16>, vector<4x512xbf16>, vector<4x512xf32> -> vector<4x512xf32>
    %c0_3 = arith.constant 0 : index
    %c0_4 = arith.constant 0 : index
    %3 = vector.load %arg3[%c0_3, %c0_4] : memref<4x1xf32, #tpu.memory_space<vmem>>, vector<4x1xf32>
    %4 = vector.broadcast %3 : vector<4x1xf32> to vector<4x512xf32>
    %5 = arith.addf %2, %4 : vector<4x512xf32>
    %c0_5 = arith.constant 0 : index
    %c0_6 = arith.constant 0 : index
    %6 = vector.load %arg4[%c0_5, %c0_6] : memref<4x512xf32, #tpu.memory_space<vmem>>, vector<4x512xf32>
    tpu.vector_store %arg4[%c0_5, %c0_6], %5 {strides = array<i32>} : memref<4x512xf32, #tpu.memory_space<vmem>>, vector<4x512xf32>,
    return
  }
  func.func @transform_0(%arg0: i32) -> (i32, i32) {
    %c0_i32 = arith.constant 0 : i32
    %c0_i32_0 = arith.constant 0 : i32
    return %c0_i32, %arg0 : i32, i32
  }
  func.func @transform_1(%arg0: i32) -> (i32, i32) {
    %c0_i32 = arith.constant 0 : i32
    %c0_i32_0 = arith.constant 0 : i32
    %c0_i32_1 = arith.constant 0 : i32
    return %c0_i32, %c0_i32_0 : i32, i32
  }
  func.func @transform_2(%arg0: i32) -> (i32, i32) {
    %c0_i32 = arith.constant 0 : i32
    %c0_i32_0 = arith.constant 0 : i32
    %c0_i32_1 = arith.constant 0 : i32
    return %c0_i32, %c0_i32_0 : i32, i32
  }
  func.func @transform_3(%arg0: i32) -> (i32, i32) {
    %c0_i32 = arith.constant 0 : i32
    %c0_i32_0 = arith.constant 0 : i32
    return %c0_i32, %arg0 : i32, i32
  }
}

module attributes {stable_mosaic.version = 11 : i64} {
  func.func @_knn_inner_kernel(%arg0: i32, %arg1: memref<1x256x4xf32, #tpu.memory_space<vmem>>, %arg2: memref<1x4x64xf32, #tpu.memory_space<vmem>>, %arg3: memref<1x256x64xf32, #tpu.memory_space<vmem>>) attributes {dimension_semantics = [#tpu.dimension_semantics<parallel>], iteration_bounds = array<i64: 2>, scalar_prefetch = 0 : i64, scratch_operands = 0 : i64, tpu.core_type = #tpu.core_type<tc>, window_params = [{transform_indices = @transform_0, window_bounds = array<i64: 1, 256, 4>}, {transform_indices = @transform_1, window_bounds = array<i64: 1, 4, 64>}, {transform_indices = @transform_2, window_bounds = array<i64: 1, 256, 64>}]} {
    %c0 = arith.constant 0 : index
    %c0_0 = arith.constant 0 : index
    %c0_1 = arith.constant 0 : index
    %0 = vector.load %arg1[%c0, %c0_0, %c0_1] : memref<1x256x4xf32, #tpu.memory_space<vmem>>, vector<1x256x4xf32>
    %1 = vector.shape_cast %0 : vector<1x256x4xf32> to vector<256x4xf32>
    %c0_2 = arith.constant 0 : index
    %c0_3 = arith.constant 0 : index
    %c0_4 = arith.constant 0 : index
    %2 = vector.load %arg2[%c0_2, %c0_3, %c0_4] : memref<1x4x64xf32, #tpu.memory_space<vmem>>, vector<1x4x64xf32>
    %3 = vector.shape_cast %2 : vector<1x4x64xf32> to vector<4x64xf32>
    %4 = arith.mulf %1, %1 : vector<256x4xf32>
    %cst = arith.constant dense<0.000000e+00> : vector<256xf32>
    %5 = vector.multi_reduction <add>, %4, %cst [1] : vector<256x4xf32> to vector<256xf32>
    %6 = vector.shape_cast %5 : vector<256xf32> to vector<256x1xf32>
    %7 = math.sqrt %6 : vector<256x1xf32>
    %cst_5 = arith.constant 9.99999996E-13 : f32
    %8 = vector.broadcast %cst_5 : f32 to vector<256x1xf32>
    %9 = arith.maximumf %7, %8 : vector<256x1xf32>
    %10 = vector.broadcast %9 : vector<256x1xf32> to vector<256x4xf32>
    %11 = arith.divf %1, %10 : vector<256x4xf32>
    %12 = arith.mulf %3, %3 : vector<4x64xf32>
    %13 = vector.extract_strided_slice %12 {offsets = [0, 0], sizes = [1, 64], strides = [1, 1]} : vector<4x64xf32> to vector<1x64xf32>
    %14 = vector.extract_strided_slice %12 {offsets = [1, 0], sizes = [1, 64], strides = [1, 1]} : vector<4x64xf32> to vector<1x64xf32>
    %15 = arith.addf %13, %14 : vector<1x64xf32>
    %16 = vector.extract_strided_slice %12 {offsets = [2, 0], sizes = [1, 64], strides = [1, 1]} : vector<4x64xf32> to vector<1x64xf32>
    %17 = arith.addf %15, %16 : vector<1x64xf32>
    %18 = vector.extract_strided_slice %12 {offsets = [3, 0], sizes = [1, 64], strides = [1, 1]} : vector<4x64xf32> to vector<1x64xf32>
    %19 = arith.addf %17, %18 : vector<1x64xf32>
    %20 = math.sqrt %19 : vector<1x64xf32>
    %cst_6 = arith.constant 9.99999996E-13 : f32
    %21 = vector.broadcast %cst_6 : f32 to vector<1x64xf32>
    %22 = arith.maximumf %20, %21 : vector<1x64xf32>
    %23 = vector.broadcast %22 : vector<1x64xf32> to vector<4x64xf32>
    %24 = arith.divf %3, %23 : vector<4x64xf32>
    %25 = arith.truncf %11 : vector<256x4xf32> to vector<256x4xbf16>
    %26 = arith.truncf %24 : vector<4x64xf32> to vector<4x64xbf16>
    %cst_7 = arith.constant dense<0.000000e+00> : vector<256x64xf32>
    %27 = tpu.matmul %25, %26, %cst_7 {dimension_numbers = #tpu.dot_dimension_numbers<[1], [0], [0], [1], [0, 0, 1, 1], [], []>} : vector<256x4xbf16>, vector<4x64xbf16>, vector<256x64xf32> -> vector<256x64xf32>
    %c0_8 = arith.constant 0 : index
    %c0_9 = arith.constant 0 : index
    %c0_10 = arith.constant 0 : index
    %28 = vector.load %arg3[%c0_8, %c0_9, %c0_10] : memref<1x256x64xf32, #tpu.memory_space<vmem>>, vector<1x256x64xf32>
    %29 = vector.shape_cast %28 : vector<1x256x64xf32> to vector<256x64xf32>
    %30 = vector.shape_cast %27 : vector<256x64xf32> to vector<1x256x64xf32>
    tpu.vector_store %arg3[%c0_8, %c0_9, %c0_10], %30 {strides = array<i32>} : memref<1x256x64xf32, #tpu.memory_space<vmem>>, vector<1x256x64xf32>,
    return
  }
  func.func @transform_0(%arg0: i32) -> (i32, i32, i32) {
    %c0_i32 = arith.constant 0 : i32
    %c0_i32_0 = arith.constant 0 : i32
    %c0_i32_1 = arith.constant 0 : i32
    return %arg0, %c0_i32, %c0_i32_0 : i32, i32, i32
  }
  func.func @transform_1(%arg0: i32) -> (i32, i32, i32) {
    %c0_i32 = arith.constant 0 : i32
    %c0_i32_0 = arith.constant 0 : i32
    %c0_i32_1 = arith.constant 0 : i32
    return %arg0, %c0_i32, %c0_i32_0 : i32, i32, i32
  }
  func.func @transform_2(%arg0: i32) -> (i32, i32, i32) {
    %c0_i32 = arith.constant 0 : i32
    %c0_i32_0 = arith.constant 0 : i32
    %c0_i32_1 = arith.constant 0 : i32
    return %arg0, %c0_i32, %c0_i32_0 : i32, i32, i32
  }
}

module attributes {stable_mosaic.version = 11 : i64} {
  func.func @_edge_fc2_res_kernel(%arg0: i32, %arg1: memref<1x9x256xi32, #tpu.memory_space<vmem>>, %arg2: memref<4x256xf32, #tpu.memory_space<vmem>>, %arg3: memref<1x4x64xf32, #tpu.memory_space<vmem>>, %arg4: memref<1x4x256xf32, #tpu.memory_space<vmem>>, %arg5: memref<1x4x256xf32, #tpu.memory_space<vmem>>, %arg6: memref<8x4xbf16, #tpu.memory_space<vmem>>, %arg7: memref<8x4xbf16, #tpu.memory_space<vmem>>, %arg8: memref<8x1xf32, #tpu.memory_space<vmem>>, %arg9: memref<4x8xbf16, #tpu.memory_space<vmem>>, %arg10: memref<4x1xf32, #tpu.memory_space<vmem>>, %arg11: memref<1x4x256xf32, #tpu.memory_space<vmem>>, %arg12: memref<1x4x256xf32, #tpu.memory_space<vmem>>) attributes {dimension_semantics = [#tpu.dimension_semantics<parallel>], iteration_bounds = array<i64: 2>, scalar_prefetch = 0 : i64, scratch_operands = 0 : i64, tpu.core_type = #tpu.core_type<tc>, window_params = [{transform_indices = @transform_0, window_bounds = array<i64: 1, 9, 256>}, {transform_indices = @transform_1, window_bounds = array<i64: 4, 256>}, {transform_indices = @transform_2, window_bounds = array<i64: 1, 4, 64>}, {transform_indices = @transform_3, window_bounds = array<i64: 1, 4, 256>}, {transform_indices = @transform_4, window_bounds = array<i64: 1, 4, 256>}, {pipeline_mode = #tpu.pipeline_mode<synchronous>, transform_indices = @transform_5, window_bounds = array<i64: 8, 4>}, {pipeline_mode = #tpu.pipeline_mode<synchronous>, transform_indices = @transform_6, window_bounds = array<i64: 8, 4>}, {pipeline_mode = #tpu.pipeline_mode<synchronous>, transform_indices = @transform_7, window_bounds = array<i64: 8, 1>}, {pipeline_mode = #tpu.pipeline_mode<synchronous>, transform_indices = @transform_8, window_bounds = array<i64: 4, 8>}, {pipeline_mode = #tpu.pipeline_mode<synchronous>, transform_indices = @transform_9, window_bounds = array<i64: 4, 1>}, {transform_indices = @transform_10, window_bounds = array<i64: 1, 4, 256>}, {transform_indices = @transform_11, window_bounds = array<i64: 1, 4, 256>}]} {
    %c0 = arith.constant 0 : index
    %c0_0 = arith.constant 0 : index
    %0 = vector.load %arg2[%c0, %c0_0] : memref<4x256xf32, #tpu.memory_space<vmem>>, vector<4x256xf32>
    %1 = arith.truncf %0 : vector<4x256xf32> to vector<4x256xbf16>
    %c0_1 = arith.constant 0 : index
    %c0_2 = arith.constant 0 : index
    %c0_3 = arith.constant 0 : index
    %2 = vector.load %arg3[%c0_1, %c0_2, %c0_3] : memref<1x4x64xf32, #tpu.memory_space<vmem>>, vector<1x4x64xf32>
    %3 = vector.shape_cast %2 : vector<1x4x64xf32> to vector<4x64xf32>
    %4 = arith.truncf %3 : vector<4x64xf32> to vector<4x64xbf16>
    %c0_4 = arith.constant 0 : index
    %c0_5 = arith.constant 0 : index
    %c0_6 = arith.constant 0 : index
    %5 = vector.load %arg1[%c0_4, %c0_5, %c0_6] : memref<1x9x256xi32, #tpu.memory_space<vmem>>, vector<1x9x256xi32>
    %6 = vector.shape_cast %5 : vector<1x9x256xi32> to vector<9x256xi32>
    %c0_7 = arith.constant 0 : index
    %c0_8 = arith.constant 0 : index
    %7 = vector.load %arg6[%c0_7, %c0_8] : memref<8x4xbf16, #tpu.memory_space<vmem>>, vector<8x4xbf16>
    %cst = arith.constant dense<0.000000e+00> : vector<8x256xf32>
    %8 = tpu.matmul %7, %1, %cst {dimension_numbers = #tpu.dot_dimension_numbers<[1], [0], [0], [1], [0, 0, 1, 1], [], []>} : vector<8x4xbf16>, vector<4x256xbf16>, vector<8x256xf32> -> vector<8x256xf32>
    %c0_9 = arith.constant 0 : index
    %c0_10 = arith.constant 0 : index
    %9 = vector.load %arg8[%c0_9, %c0_10] : memref<8x1xf32, #tpu.memory_space<vmem>>, vector<8x1xf32>
    %10 = vector.broadcast %9 : vector<8x1xf32> to vector<8x256xf32>
    %11 = arith.addf %8, %10 : vector<8x256xf32>
    %c0_11 = arith.constant 0 : index
    %c0_12 = arith.constant 0 : index
    %12 = vector.load %arg7[%c0_11, %c0_12] : memref<8x4xbf16, #tpu.memory_space<vmem>>, vector<8x4xbf16>
    %cst_13 = arith.constant dense<0.000000e+00> : vector<8x64xf32>
    %13 = tpu.matmul %12, %4, %cst_13 {dimension_numbers = #tpu.dot_dimension_numbers<[1], [0], [0], [1], [0, 0, 1, 1], [], []>} : vector<8x4xbf16>, vector<4x64xbf16>, vector<8x64xf32> -> vector<8x64xf32>
    %14 = arith.truncf %13 : vector<8x64xf32> to vector<8x64xbf16>
    %15 = tpu.iota {dimensions = array<i32: 0>} : vector<64x256xi32>
    %16 = vector.extract_strided_slice %6 {offsets = [0, 0], sizes = [1, 256], strides = [1, 1]} : vector<9x256xi32> to vector<1x256xi32>
    %17 = vector.broadcast %16 : vector<1x256xi32> to vector<64x256xi32>
    %18 = arith.cmpi eq, %15, %17 : vector<64x256xi32>
    %cst_14 = arith.constant 1.000000e+00 : f32
    %cst_15 = arith.constant 0.000000e+00 : f32
    %19 = vector.broadcast %cst_14 : f32 to vector<64x256xf32>
    %20 = vector.broadcast %cst_15 : f32 to vector<64x256xf32>
    %21 = arith.select %18, %19, %20 : vector<64x256xi1>, vector<64x256xf32>
    %22 = arith.truncf %21 : vector<64x256xf32> to vector<64x256xbf16>
    %cst_16 = arith.constant dense<0.000000e+00> : vector<8x256xf32>
    %23 = tpu.matmul %14, %22, %cst_16 {dimension_numbers = #tpu.dot_dimension_numbers<[1], [0], [0], [1], [0, 0, 1, 1], [], []>} : vector<8x64xbf16>, vector<64x256xbf16>, vector<8x256xf32> -> vector<8x256xf32>
    %24 = arith.addf %11, %23 : vector<8x256xf32>
    %cst_17 = arith.constant 0.000000e+00 : f32
    %25 = vector.broadcast %cst_17 : f32 to vector<8x256xf32>
    %26 = arith.maximumf %24, %25 : vector<8x256xf32>
    %27 = vector.extract_strided_slice %6 {offsets = [1, 0], sizes = [1, 256], strides = [1, 1]} : vector<9x256xi32> to vector<1x256xi32>
    %28 = vector.broadcast %27 : vector<1x256xi32> to vector<64x256xi32>
    %29 = arith.cmpi eq, %15, %28 : vector<64x256xi32>
    %cst_18 = arith.constant 1.000000e+00 : f32
    %cst_19 = arith.constant 0.000000e+00 : f32
    %30 = vector.broadcast %cst_18 : f32 to vector<64x256xf32>
    %31 = vector.broadcast %cst_19 : f32 to vector<64x256xf32>
    %32 = arith.select %29, %30, %31 : vector<64x256xi1>, vector<64x256xf32>
    %33 = arith.truncf %32 : vector<64x256xf32> to vector<64x256xbf16>
    %cst_20 = arith.constant dense<0.000000e+00> : vector<8x256xf32>
    %34 = tpu.matmul %14, %33, %cst_20 {dimension_numbers = #tpu.dot_dimension_numbers<[1], [0], [0], [1], [0, 0, 1, 1], [], []>} : vector<8x64xbf16>, vector<64x256xbf16>, vector<8x256xf32> -> vector<8x256xf32>
    %35 = arith.addf %11, %34 : vector<8x256xf32>
    %cst_21 = arith.constant 0.000000e+00 : f32
    %36 = vector.broadcast %cst_21 : f32 to vector<8x256xf32>
    %37 = arith.maximumf %35, %36 : vector<8x256xf32>
    %38 = arith.maximumf %26, %37 : vector<8x256xf32>
    %39 = vector.extract_strided_slice %6 {offsets = [2, 0], sizes = [1, 256], strides = [1, 1]} : vector<9x256xi32> to vector<1x256xi32>
    %40 = vector.broadcast %39 : vector<1x256xi32> to vector<64x256xi32>
    %41 = arith.cmpi eq, %15, %40 : vector<64x256xi32>
    %cst_22 = arith.constant 1.000000e+00 : f32
    %cst_23 = arith.constant 0.000000e+00 : f32
    %42 = vector.broadcast %cst_22 : f32 to vector<64x256xf32>
    %43 = vector.broadcast %cst_23 : f32 to vector<64x256xf32>
    %44 = arith.select %41, %42, %43 : vector<64x256xi1>, vector<64x256xf32>
    %45 = arith.truncf %44 : vector<64x256xf32> to vector<64x256xbf16>
    %cst_24 = arith.constant dense<0.000000e+00> : vector<8x256xf32>
    %46 = tpu.matmul %14, %45, %cst_24 {dimension_numbers = #tpu.dot_dimension_numbers<[1], [0], [0], [1], [0, 0, 1, 1], [], []>} : vector<8x64xbf16>, vector<64x256xbf16>, vector<8x256xf32> -> vector<8x256xf32>
    %47 = arith.addf %11, %46 : vector<8x256xf32>
    %cst_25 = arith.constant 0.000000e+00 : f32
    %48 = vector.broadcast %cst_25 : f32 to vector<8x256xf32>
    %49 = arith.maximumf %47, %48 : vector<8x256xf32>
    %50 = arith.maximumf %38, %49 : vector<8x256xf32>
    %51 = vector.extract_strided_slice %6 {offsets = [3, 0], sizes = [1, 256], strides = [1, 1]} : vector<9x256xi32> to vector<1x256xi32>
    %52 = vector.broadcast %51 : vector<1x256xi32> to vector<64x256xi32>
    %53 = arith.cmpi eq, %15, %52 : vector<64x256xi32>
    %cst_26 = arith.constant 1.000000e+00 : f32
    %cst_27 = arith.constant 0.000000e+00 : f32
    %54 = vector.broadcast %cst_26 : f32 to vector<64x256xf32>
    %55 = vector.broadcast %cst_27 : f32 to vector<64x256xf32>
    %56 = arith.select %53, %54, %55 : vector<64x256xi1>, vector<64x256xf32>
    %57 = arith.truncf %56 : vector<64x256xf32> to vector<64x256xbf16>
    %cst_28 = arith.constant dense<0.000000e+00> : vector<8x256xf32>
    %58 = tpu.matmul %14, %57, %cst_28 {dimension_numbers = #tpu.dot_dimension_numbers<[1], [0], [0], [1], [0, 0, 1, 1], [], []>} : vector<8x64xbf16>, vector<64x256xbf16>, vector<8x256xf32> -> vector<8x256xf32>
    %59 = arith.addf %11, %58 : vector<8x256xf32>
    %cst_29 = arith.constant 0.000000e+00 : f32
    %60 = vector.broadcast %cst_29 : f32 to vector<8x256xf32>
    %61 = arith.maximumf %59, %60 : vector<8x256xf32>
    %62 = arith.maximumf %50, %61 : vector<8x256xf32>
    %63 = vector.extract_strided_slice %6 {offsets = [4, 0], sizes = [1, 256], strides = [1, 1]} : vector<9x256xi32> to vector<1x256xi32>
    %64 = vector.broadcast %63 : vector<1x256xi32> to vector<64x256xi32>
    %65 = arith.cmpi eq, %15, %64 : vector<64x256xi32>
    %cst_30 = arith.constant 1.000000e+00 : f32
    %cst_31 = arith.constant 0.000000e+00 : f32
    %66 = vector.broadcast %cst_30 : f32 to vector<64x256xf32>
    %67 = vector.broadcast %cst_31 : f32 to vector<64x256xf32>
    %68 = arith.select %65, %66, %67 : vector<64x256xi1>, vector<64x256xf32>
    %69 = arith.truncf %68 : vector<64x256xf32> to vector<64x256xbf16>
    %cst_32 = arith.constant dense<0.000000e+00> : vector<8x256xf32>
    %70 = tpu.matmul %14, %69, %cst_32 {dimension_numbers = #tpu.dot_dimension_numbers<[1], [0], [0], [1], [0, 0, 1, 1], [], []>} : vector<8x64xbf16>, vector<64x256xbf16>, vector<8x256xf32> -> vector<8x256xf32>
    %71 = arith.addf %11, %70 : vector<8x256xf32>
    %cst_33 = arith.constant 0.000000e+00 : f32
    %72 = vector.broadcast %cst_33 : f32 to vector<8x256xf32>
    %73 = arith.maximumf %71, %72 : vector<8x256xf32>
    %74 = arith.maximumf %62, %73 : vector<8x256xf32>
    %75 = vector.extract_strided_slice %6 {offsets = [5, 0], sizes = [1, 256], strides = [1, 1]} : vector<9x256xi32> to vector<1x256xi32>
    %76 = vector.broadcast %75 : vector<1x256xi32> to vector<64x256xi32>
    %77 = arith.cmpi eq, %15, %76 : vector<64x256xi32>
    %cst_34 = arith.constant 1.000000e+00 : f32
    %cst_35 = arith.constant 0.000000e+00 : f32
    %78 = vector.broadcast %cst_34 : f32 to vector<64x256xf32>
    %79 = vector.broadcast %cst_35 : f32 to vector<64x256xf32>
    %80 = arith.select %77, %78, %79 : vector<64x256xi1>, vector<64x256xf32>
    %81 = arith.truncf %80 : vector<64x256xf32> to vector<64x256xbf16>
    %cst_36 = arith.constant dense<0.000000e+00> : vector<8x256xf32>
    %82 = tpu.matmul %14, %81, %cst_36 {dimension_numbers = #tpu.dot_dimension_numbers<[1], [0], [0], [1], [0, 0, 1, 1], [], []>} : vector<8x64xbf16>, vector<64x256xbf16>, vector<8x256xf32> -> vector<8x256xf32>
    %83 = arith.addf %11, %82 : vector<8x256xf32>
    %cst_37 = arith.constant 0.000000e+00 : f32
    %84 = vector.broadcast %cst_37 : f32 to vector<8x256xf32>
    %85 = arith.maximumf %83, %84 : vector<8x256xf32>
    %86 = arith.maximumf %74, %85 : vector<8x256xf32>
    %87 = vector.extract_strided_slice %6 {offsets = [6, 0], sizes = [1, 256], strides = [1, 1]} : vector<9x256xi32> to vector<1x256xi32>
    %88 = vector.broadcast %87 : vector<1x256xi32> to vector<64x256xi32>
    %89 = arith.cmpi eq, %15, %88 : vector<64x256xi32>
    %cst_38 = arith.constant 1.000000e+00 : f32
    %cst_39 = arith.constant 0.000000e+00 : f32
    %90 = vector.broadcast %cst_38 : f32 to vector<64x256xf32>
    %91 = vector.broadcast %cst_39 : f32 to vector<64x256xf32>
    %92 = arith.select %89, %90, %91 : vector<64x256xi1>, vector<64x256xf32>
    %93 = arith.truncf %92 : vector<64x256xf32> to vector<64x256xbf16>
    %cst_40 = arith.constant dense<0.000000e+00> : vector<8x256xf32>
    %94 = tpu.matmul %14, %93, %cst_40 {dimension_numbers = #tpu.dot_dimension_numbers<[1], [0], [0], [1], [0, 0, 1, 1], [], []>} : vector<8x64xbf16>, vector<64x256xbf16>, vector<8x256xf32> -> vector<8x256xf32>
    %95 = arith.addf %11, %94 : vector<8x256xf32>
    %cst_41 = arith.constant 0.000000e+00 : f32
    %96 = vector.broadcast %cst_41 : f32 to vector<8x256xf32>
    %97 = arith.maximumf %95, %96 : vector<8x256xf32>
    %98 = arith.maximumf %86, %97 : vector<8x256xf32>
    %99 = vector.extract_strided_slice %6 {offsets = [7, 0], sizes = [1, 256], strides = [1, 1]} : vector<9x256xi32> to vector<1x256xi32>
    %100 = vector.broadcast %99 : vector<1x256xi32> to vector<64x256xi32>
    %101 = arith.cmpi eq, %15, %100 : vector<64x256xi32>
    %cst_42 = arith.constant 1.000000e+00 : f32
    %cst_43 = arith.constant 0.000000e+00 : f32
    %102 = vector.broadcast %cst_42 : f32 to vector<64x256xf32>
    %103 = vector.broadcast %cst_43 : f32 to vector<64x256xf32>
    %104 = arith.select %101, %102, %103 : vector<64x256xi1>, vector<64x256xf32>
    %105 = arith.truncf %104 : vector<64x256xf32> to vector<64x256xbf16>
    %cst_44 = arith.constant dense<0.000000e+00> : vector<8x256xf32>
    %106 = tpu.matmul %14, %105, %cst_44 {dimension_numbers = #tpu.dot_dimension_numbers<[1], [0], [0], [1], [0, 0, 1, 1], [], []>} : vector<8x64xbf16>, vector<64x256xbf16>, vector<8x256xf32> -> vector<8x256xf32>
    %107 = arith.addf %11, %106 : vector<8x256xf32>
    %cst_45 = arith.constant 0.000000e+00 : f32
    %108 = vector.broadcast %cst_45 : f32 to vector<8x256xf32>
    %109 = arith.maximumf %107, %108 : vector<8x256xf32>
    %110 = arith.maximumf %98, %109 : vector<8x256xf32>
    %111 = vector.extract_strided_slice %6 {offsets = [8, 0], sizes = [1, 256], strides = [1, 1]} : vector<9x256xi32> to vector<1x256xi32>
    %112 = vector.broadcast %111 : vector<1x256xi32> to vector<64x256xi32>
    %113 = arith.cmpi eq, %15, %112 : vector<64x256xi32>
    %cst_46 = arith.constant 1.000000e+00 : f32
    %cst_47 = arith.constant 0.000000e+00 : f32
    %114 = vector.broadcast %cst_46 : f32 to vector<64x256xf32>
    %115 = vector.broadcast %cst_47 : f32 to vector<64x256xf32>
    %116 = arith.select %113, %114, %115 : vector<64x256xi1>, vector<64x256xf32>
    %117 = arith.truncf %116 : vector<64x256xf32> to vector<64x256xbf16>
    %cst_48 = arith.constant dense<0.000000e+00> : vector<8x256xf32>
    %118 = tpu.matmul %14, %117, %cst_48 {dimension_numbers = #tpu.dot_dimension_numbers<[1], [0], [0], [1], [0, 0, 1, 1], [], []>} : vector<8x64xbf16>, vector<64x256xbf16>, vector<8x256xf32> -> vector<8x256xf32>
    %119 = arith.addf %11, %118 : vector<8x256xf32>
    %cst_49 = arith.constant 0.000000e+00 : f32
    %120 = vector.broadcast %cst_49 : f32 to vector<8x256xf32>
    %121 = arith.maximumf %119, %120 : vector<8x256xf32>
    %122 = arith.maximumf %110, %121 : vector<8x256xf32>
    %c0_50 = arith.constant 0 : index
    %c0_51 = arith.constant 0 : index
    %123 = vector.load %arg9[%c0_50, %c0_51] : memref<4x8xbf16, #tpu.memory_space<vmem>>, vector<4x8xbf16>
    %124 = arith.truncf %122 : vector<8x256xf32> to vector<8x256xbf16>
    %cst_52 = arith.constant dense<0.000000e+00> : vector<4x256xf32>
    %125 = tpu.matmul %123, %124, %cst_52 {dimension_numbers = #tpu.dot_dimension_numbers<[1], [0], [0], [1], [0, 0, 1, 1], [], []>} : vector<4x8xbf16>, vector<8x256xbf16>, vector<4x256xf32> -> vector<4x256xf32>
    %c0_53 = arith.constant 0 : index
    %c0_54 = arith.constant 0 : index
    %126 = vector.load %arg10[%c0_53, %c0_54] : memref<4x1xf32, #tpu.memory_space<vmem>>, vector<4x1xf32>
    %127 = vector.broadcast %126 : vector<4x1xf32> to vector<4x256xf32>
    %128 = arith.addf %125, %127 : vector<4x256xf32>
    %c0_55 = arith.constant 0 : index
    %c0_56 = arith.constant 0 : index
    %c0_57 = arith.constant 0 : index
    %129 = vector.load %arg4[%c0_55, %c0_56, %c0_57] : memref<1x4x256xf32, #tpu.memory_space<vmem>>, vector<1x4x256xf32>
    %130 = vector.shape_cast %129 : vector<1x4x256xf32> to vector<4x256xf32>
    %131 = arith.addf %128, %130 : vector<4x256xf32>
    %c0_58 = arith.constant 0 : index
    %c0_59 = arith.constant 0 : index
    %c0_60 = arith.constant 0 : index
    %132 = vector.load %arg11[%c0_58, %c0_59, %c0_60] : memref<1x4x256xf32, #tpu.memory_space<vmem>>, vector<1x4x256xf32>
    %133 = vector.shape_cast %132 : vector<1x4x256xf32> to vector<4x256xf32>
    %134 = vector.shape_cast %131 : vector<4x256xf32> to vector<1x4x256xf32>
    tpu.vector_store %arg11[%c0_58, %c0_59, %c0_60], %134 {strides = array<i32>} : memref<1x4x256xf32, #tpu.memory_space<vmem>>, vector<1x4x256xf32>,
    %c0_61 = arith.constant 0 : index
    %c0_62 = arith.constant 0 : index
    %c0_63 = arith.constant 0 : index
    %135 = vector.load %arg5[%c0_61, %c0_62, %c0_63] : memref<1x4x256xf32, #tpu.memory_space<vmem>>, vector<1x4x256xf32>
    %136 = vector.shape_cast %135 : vector<1x4x256xf32> to vector<4x256xf32>
    %137 = arith.addf %128, %136 : vector<4x256xf32>
    %c0_64 = arith.constant 0 : index
    %c0_65 = arith.constant 0 : index
    %c0_66 = arith.constant 0 : index
    %138 = vector.load %arg12[%c0_64, %c0_65, %c0_66] : memref<1x4x256xf32, #tpu.memory_space<vmem>>, vector<1x4x256xf32>
    %139 = vector.shape_cast %138 : vector<1x4x256xf32> to vector<4x256xf32>
    %140 = vector.shape_cast %137 : vector<4x256xf32> to vector<1x4x256xf32>
    tpu.vector_store %arg12[%c0_64, %c0_65, %c0_66], %140 {strides = array<i32>} : memref<1x4x256xf32, #tpu.memory_space<vmem>>, vector<1x4x256xf32>,
    return
  }
  func.func @transform_0(%arg0: i32) -> (i32, i32, i32) {
    %c0_i32 = arith.constant 0 : i32
    %c0_i32_0 = arith.constant 0 : i32
    %c0_i32_1 = arith.constant 0 : i32
    return %arg0, %c0_i32, %c0_i32_0 : i32, i32, i32
  }
  func.func @transform_1(%arg0: i32) -> (i32, i32) {
    %c0_i32 = arith.constant 0 : i32
    %c0_i32_0 = arith.constant 0 : i32
    return %c0_i32, %arg0 : i32, i32
  }
  func.func @transform_2(%arg0: i32) -> (i32, i32, i32) {
    %c0_i32 = arith.constant 0 : i32
    %c0_i32_0 = arith.constant 0 : i32
    %c0_i32_1 = arith.constant 0 : i32
    return %arg0, %c0_i32, %c0_i32_0 : i32, i32, i32
  }
  func.func @transform_3(%arg0: i32) -> (i32, i32, i32) {
    %c0_i32 = arith.constant 0 : i32
    %c0_i32_0 = arith.constant 0 : i32
    %c0_i32_1 = arith.constant 0 : i32
    return %arg0, %c0_i32, %c0_i32_0 : i32, i32, i32
  }
  func.func @transform_4(%arg0: i32) -> (i32, i32, i32) {
    %c0_i32 = arith.constant 0 : i32
    %c0_i32_0 = arith.constant 0 : i32
    %c0_i32_1 = arith.constant 0 : i32
    return %arg0, %c0_i32, %c0_i32_0 : i32, i32, i32
  }
  func.func @transform_5(%arg0: i32) -> (i32, i32) {
    %c0_i32 = arith.constant 0 : i32
    %c0_i32_0 = arith.constant 0 : i32
    %c0_i32_1 = arith.constant 0 : i32
    return %c0_i32, %c0_i32_0 : i32, i32
  }
  func.func @transform_6(%arg0: i32) -> (i32, i32) {
    %c0_i32 = arith.constant 0 : i32
    %c0_i32_0 = arith.constant 0 : i32
    %c0_i32_1 = arith.constant 0 : i32
    return %c0_i32, %c0_i32_0 : i32, i32
  }
  func.func @transform_7(%arg0: i32) -> (i32, i32) {
    %c0_i32 = arith.constant 0 : i32
    %c0_i32_0 = arith.constant 0 : i32
    %c0_i32_1 = arith.constant 0 : i32
    return %c0_i32, %c0_i32_0 : i32, i32
  }
  func.func @transform_8(%arg0: i32) -> (i32, i32) {
    %c0_i32 = arith.constant 0 : i32
    %c0_i32_0 = arith.constant 0 : i32
    %c0_i32_1 = arith.constant 0 : i32
    return %c0_i32, %c0_i32_0 : i32, i32
  }
  func.func @transform_9(%arg0: i32) -> (i32, i32) {
    %c0_i32 = arith.constant 0 : i32
    %c0_i32_0 = arith.constant 0 : i32
    %c0_i32_1 = arith.constant 0 : i32
    return %c0_i32, %c0_i32_0 : i32, i32
  }
  func.func @transform_10(%arg0: i32) -> (i32, i32, i32) {
    %c0_i32 = arith.constant 0 : i32
    %c0_i32_0 = arith.constant 0 : i32
    %c0_i32_1 = arith.constant 0 : i32
    return %arg0, %c0_i32, %c0_i32_0 : i32, i32, i32
  }
  func.func @transform_11(%arg0: i32) -> (i32, i32, i32) {
    %c0_i32 = arith.constant 0 : i32
    %c0_i32_0 = arith.constant 0 : i32
    %c0_i32_1 = arith.constant 0 : i32
    return %arg0, %c0_i32, %c0_i32_0 : i32, i32, i32
  }
}

</mosaic_0001>

<llo_original>
// kernel: align_grapher_forward.4
$region0: #{align_grapher_forward.4}
  #allocation0 [shape = 'u32[]', space=smem, size = 0x4, offset = 0x4, fixed_abs, tag = 'smem constant byte address 0x4 - core index']
  #allocation1 [shape = 'u32[144,128]{1,0:T(1,128)}', space=vmem, size = 0x12000, scoped, tag = 'internal scratch']
  %s0 = inlined_call_operand.vmem [shape: bf16[4,36,64], index: 0, kind: input, shape index: {}]
  %s1 = inlined_call_operand.vmem [shape: bf16[64,64], index: 1, kind: input, shape index: {}]
  %s2 = inlined_call_operand.vmem [shape: f32[1,64], index: 2, kind: input, shape index: {}]
  %s3 = inlined_call_operand.vmem [shape: f32[36,256], index: 3, kind: output, shape index: {}]
  %s4 = sld [smem:[#allocation0]]
  $region79: #{align_grapher_forward.4} parent=0
    _
  %s6 = ssub.s32 1, %s4
  %s7 = scalar_select 0, %s6, %s4
  $region1: #{align_grapher_forward.4} parent=0
    #allocation2 [shape = 'u8[40960]{0}', space=vmem, size = 0xa000, scoped, tag = 'output window, operand 0']
    loop: start=0, step=1, limit=4
    $region2: #{align_grapher_forward.4} parent=1 // loop_pre_header
      _
    $region3: #{align_grapher_forward.4} parent=1 // loop_header
      %s9 = sphi 0, %s13
      %p10 = scmp.ge.s32.totalorder %s9, 4
      %s19 = sphi 0, %s21
      %s22 = sphi 0, %s19
      %s23 = sphi 0, %s22
      %s39 = sphi 0, %s23
      %s43 = sphi 0, %s43
      %s45 = sphi 0, %s43
      %s46 = sphi 0, %s45
      %s60 = sphi 0, %s46
      %s64 = sphi 0, %s64
      %s66 = sphi 0, %s64
      %s67 = sphi 0, %s66
      %s81 = sphi 0, %s67
      %s87 = sphi 0, %s89
      %s90 = sphi 0, %s87
      %s91 = sphi 0, %s90
      %s107 = sphi 0, %s91
    $region4: #{align_grapher_forward.4} parent=1 // loop_header_branch
      %12 = sbr.rel (%p10) target = $region8
    $region5: #{align_grapher_forward.4} parent=1 // loop_body
      %s14 = ssub.s32 %s9, 1
      %s15 = ssub.s32 %s9, 2
      %s16 = sadd.s32 %s9, 1
      %s17 = ssub.s32 %s9, %s16
      %p18 = scmp.eq.s32.totalorder %s17, 0
      %s20 = sadd.s32 %s19, 1
      %s21 = scalar_select %p18, %s19, %s20
      %p24 = pneg %p18
      %p25 = scmp.eq.s32.totalorder %s9, 1
      %p26 = por %p24, %p25
      %p27 = scmp.ne.s32.totalorder %s19, %s22
      %p28 = scmp.eq.s32.totalorder %s9, 0
      %p29 = por %p27, %p28
      %p30 = scmp.ne.s32.totalorder %s19, %s22
      %p31 = scmp.eq.s32.totalorder %s14, 1
      %p32 = por %p30, %p31
      %p33 = scmp.ne.s32.totalorder %s22, %s23
      %p34 = scmp.eq.s32.totalorder %s14, 0
      %p35 = por %p33, %p34
      %p36 = scmp.ne.s32.totalorder %s22, %s23
      %p37 = scmp.eq.s32.totalorder %s15, 1
      %p38 = por %p36, %p37
      %p40 = scmp.ne.s32.totalorder %s23, %s39
      %p41 = scmp.eq.s32.totalorder %s15, 0
      %p42 = por %p40, %p41
      %s44 = sadd.s32 %s43, 1
      %p47 = scmp.eq.s32.totalorder %s9, 1
      %p48 = scmp.ne.s32.totalorder %s43, %s45
      %p49 = scmp.eq.s32.totalorder %s9, 0
      %p50 = por %p48, %p49
      %p51 = scmp.ne.s32.totalorder %s43, %s45
      %p52 = scmp.eq.s32.totalorder %s14, 1
      %p53 = por %p51, %p52
      %p54 = scmp.ne.s32.totalorder %s45, %s46
      %p55 = scmp.eq.s32.totalorder %s14, 0
      %p56 = por %p54, %p55
      %p57 = scmp.ne.s32.totalorder %s45, %s46
      %p58 = scmp.eq.s32.totalorder %s15, 1
      %p59 = por %p57, %p58
      %p61 = scmp.ne.s32.totalorder %s46, %s60
      %p62 = scmp.eq.s32.totalorder %s15, 0
      %p63 = por %p61, %p62
      %s65 = sadd.s32 %s64, 1
      %p68 = scmp.eq.s32.totalorder %s9, 1
      %p69 = scmp.ne.s32.totalorder %s64, %s66
      %p70 = scmp.eq.s32.totalorder %s9, 0
      %p71 = por %p69, %p70
      %p72 = scmp.ne.s32.totalorder %s64, %s66
      %p73 = scmp.eq.s32.totalorder %s14, 1
      %p74 = por %p72, %p73
      %p75 = scmp.ne.s32.totalorder %s66, %s67
      %p76 = scmp.eq.s32.totalorder %s14, 0
      %p77 = por %p75, %p76
      %p78 = scmp.ne.s32.totalorder %s66, %s67
      %p79 = scmp.eq.s32.totalorder %s15, 1
      %p80 = por %p78, %p79
      %p82 = scmp.ne.s32.totalorder %s67, %s81
      %p83 = scmp.eq.s32.totalorder %s15, 0
      %p84 = por %p82, %p83
      %s85 = ssub.s32 %s9, %s16
      %p86 = scmp.eq.s32.totalorder %s85, 0
      %s88 = sadd.s32 %s87, 1
      %s89 = scalar_select %p86, %s87, %s88
      %p92 = pneg %p86
      %p93 = scmp.eq.s32.totalorder %s9, 1
      %p94 = por %p92, %p93
      %p95 = scmp.ne.s32.totalorder %s87, %s90
      %p96 = scmp.eq.s32.totalorder %s9, 0
      %p97 = por %p95, %p96
      %p98 = scmp.ne.s32.totalorder %s87, %s90
      %p99 = scmp.eq.s32.totalorder %s14, 1
      %p100 = por %p98, %p99
      %p101 = scmp.ne.s32.totalorder %s90, %s91
      %p102 = scmp.eq.s32.totalorder %s14, 0
      %p103 = por %p101, %p102
      %p104 = scmp.ne.s32.totalorder %s90, %s91
      %p105 = scmp.eq.s32.totalorder %s15, 1
      %p106 = por %p104, %p105
      %p108 = scmp.ne.s32.totalorder %s91, %s107
      %p109 = scmp.eq.s32.totalorder %s15, 0
      %p110 = por %p108, %p109
      %p111 = scmp.le.s32.totalorder 1, %s9
      %p112 = scmp.lt.s32.totalorder %s9, 3
      %p113 = pnand %p111, %p112
      %p114 = pneg %p113
      // Predicated region
      $region9: #{align_grapher_forward.4} parent=5 // pred_check
        _
      $region10: #{align_grapher_forward.4} parent=5 // pred_check_branch
        %116 = sbr.rel (%p113) target = $region12
      $region11: #{align_grapher_forward.4} parent=5 // pred_region
        %s117 = ssub.s32 %s9, 1
        // Predicated region
        $region13: #{align_grapher_forward.4} parent=11 // pred_check
          %p118 = pneg %p56
        $region14: #{align_grapher_forward.4} parent=11 // pred_check_branch
          %120 = sbr.rel (%p118) target = $region16
        $region15: #{align_grapher_forward.4} parent=11 // pred_region
          _
        $region16: #{align_grapher_forward.4} parent=11 // pred_fallthru
          _
        // Predicated region
        $region17: #{align_grapher_forward.4} parent=11 // pred_check
          %p121 = pneg %p77
        $region18: #{align_grapher_forward.4} parent=11 // pred_check_branch
          %123 = sbr.rel (%p121) target = $region20
        $region19: #{align_grapher_forward.4} parent=11 // pred_region
          _
        $region20: #{align_grapher_forward.4} parent=11 // pred_fallthru
          _
      $region12: #{align_grapher_forward.4} parent=5 // pred_fallthru
        _
      %p124 = scmp.lt.s32.totalorder %s9, 2
      // Predicated region
      $region21: #{align_grapher_forward.4} parent=5 // pred_check
        %p125 = pneg %p124
      $region22: #{align_grapher_forward.4} parent=5 // pred_check_branch
        %127 = sbr.rel (%p125) target = $region24
      $region23: #{align_grapher_forward.4} parent=5 // pred_region
        // Predicated region
        $region25: #{align_grapher_forward.4} parent=23 // pred_check
          %p128 = pneg %p29
        $region26: #{align_grapher_forward.4} parent=23 // pred_check_branch
          %130 = sbr.rel (%p128) target = $region28
        $region27: #{align_grapher_forward.4} parent=23 // pred_region
          %s131 = smul.u32 2, %s9
          %p132 = scmp.lt.s32.totalorder %s131, 3
          %s133 = scalar_select %p132, %s131, 3
          %s134 = smul.addr %s133, 5
          %s135 = smul.addr %s134, 4
          %s136 = scalar_lea.vmem %s0, %s135
          %s137 = smul.u32 2, %s9
        $region28: #{align_grapher_forward.4} parent=23 // pred_fallthru
          _
      $region24: #{align_grapher_forward.4} parent=5 // pred_fallthru
        _
      %p138 = scmp.le.s32.totalorder 1, %s9
      %p139 = scmp.lt.s32.totalorder %s9, 3
      %p140 = pnand %p138, %p139
      %p141 = pneg %p140
      // Predicated region
      $region29: #{align_grapher_forward.4} parent=5 // pred_check
        _
      $region30: #{align_grapher_forward.4} parent=5 // pred_check_branch
        %143 = sbr.rel (%p140) target = $region32
      $region31: #{align_grapher_forward.4} parent=5 // pred_region
        %s144 = ssub.s32 %s9, 1
        %s145 = smul.u32 2, %s14
        %p146 = scmp.lt.s32.totalorder %s145, 3
        %s147 = scalar_select %p146, %s145, 3
        %s148 = smul.addr %s147, 5
        %s149 = smul.addr %s148, 4
        %s150 = scalar_lea.vmem %s0, %s149
        %p151 = pneg %p35
        %p152 = pneg %p32
        %p153 = pneg %p56
        %p154 = pneg %p53
        %p155 = pneg %p77
        %p156 = pneg %p74
        %p157 = pneg %p103
        %p158 = pneg %p100
        %s159 = sand.u32 %s90, 1
        %s160 = sand.u32 %s90, 1
        %s161 = smul.addr %s160, 40
        %s162 = scalar_lea.vmem [#allocation2], %s161
        %s163 = smul.u32 2, %s14
        %p164 = scmp.lt.s32.totalorder %s163, 3
        %s165 = scalar_select %p164, %s163, 3
        %s166 = smul.addr %s165, 5
        %s167 = smul.addr %s166, 4
        %s168 = scalar_lea.vmem %s0, %s167
        %s169 = smul.u32 2, %s14
        %v171 = vld [vmem:[%s168] sm:$0xf]
        %v172 = vld [vmem:[%s168 + $0x4] sm:$0xf]
        %v173 = vld [vmem:[%s168 + $0x8] sm:$0xf]
        %v174 = vld [vmem:[%s168 + $0xc] sm:$0xf]
        %v175 = vld [vmem:[%s168 + $0x10] sm:$0x3]
        %v176 = vld [vmem:[%s1] sm:$0xf]
        %v177 = vld [vmem:[%s1 + $0x4] sm:$0xf]
        %v178 = vld [vmem:[%s1 + $0x8] sm:$0xf]
        %v179 = vld [vmem:[%s1 + $0xc] sm:$0xf]
        %v180 = vld [vmem:[%s1 + $0x10] sm:$0xf]
        %v181 = vld [vmem:[%s1 + $0x14] sm:$0xf]
        %v182 = vld [vmem:[%s1 + $0x18] sm:$0xf]
        %v183 = vld [vmem:[%s1 + $0x1c] sm:$0xf]
        %v184 = vld [vmem:[%s2] sm:$0x1]
        %v186 = vlaneseq
        %v187 = vshrl.u32 %v186, 7
        %v188 = vsub.s32 0, %v187
        %v189 = vrot.slane %v184, %v188
        %v196 = vunpack.c.l.b16 %v171
        %v197 = vunpack.c.l.b16 %v172
        %v198 = vunpack.c.l.b16 %v173
        %v199 = vunpack.c.l.b16 %v174
        %v200 = vunpack.c.l.b16 %v175
        %v201 = vpack.c.b16 %v197, %v196
        %v202 = vpack.c.b16 %v199, %v198
        %v203 = vpack.c.b16 %v200, %v200
        %v212 = vunpack.c.l.b16 %v176
        %v213 = vunpack.c.l.b16 %v177
        %v214 = vunpack.c.l.b16 %v178
        %v215 = vunpack.c.l.b16 %v179
        %v216 = vunpack.c.l.b16 %v180
        %v217 = vunpack.c.l.b16 %v181
        %v218 = vunpack.c.l.b16 %v182
        %v219 = vunpack.c.l.b16 %v183
        %v220 = vpack.c.b16 %v213, %v212
        %v221 = vpack.c.b16 %v215, %v214
        %v222 = vpack.c.b16 %v217, %v216
        %v223 = vpack.c.b16 %v219, %v218
        %vm228 = vcmask 523264
        %v230 = vsel %vm228, %v201, 0
        %v233 = vsel %vm228, %v202, 0
        %v236 = vsel %vm228, %v203, 0
        %238 = vmatprep.subr.bf16.mxu0 0
        %239 = vmatpush1.bf16.msra.mxu0 %v220
        %240 = vmatprep.subr.bf16.mxu0 0
        %241 = vmatpush1.bf16.msra.mxu0 %v221
        %242 = vmatprep.subr.bf16.mxu0 0
        %243 = vmatpush1.bf16.msra.mxu0 %v222
        %244 = vmatprep.subr.bf16.mxu0 0
        %245 = vmatpush1.bf16.msra.mxu0 %v223
        %246 = vmatprep.subr.bf16.mxu0 0
        %247 = vmatpush1.bf16.msra.mxu0 0
        %248 = vmatprep.subr.bf16.mxu0 0
        %249 = vmatpush1.bf16.msra.mxu0 0
        %250 = vmatprep.subr.bf16.mxu0 0
        %251 = vmatpush1.bf16.msra.mxu0 0
        %252 = vmatprep.subr.bf16.mxu0 0
        %253 = vmatpush1.bf16.msra.mxu0 0
        %254 = vmatprep.subr.bf16.mxu0 0
        %255 = vmatpush1.bf16.msra.mxu0 0
        %256 = vmatprep.subr.bf16.mxu0 0
        %257 = vmatpush1.bf16.msra.mxu0 0
        %258 = vmatprep.subr.bf16.mxu0 0
        %259 = vmatpush1.bf16.msra.mxu0 0
        %260 = vmatprep.subr.bf16.mxu0 0
        %261 = vmatpush1.bf16.msra.mxu0 0
        %262 = vmatprep.subr.bf16.mxu0 0
        %263 = vmatpush1.bf16.msra.mxu0 0
        %264 = vmatprep.subr.bf16.mxu0 0
        %265 = vmatpush1.bf16.msra.mxu0 0
        %266 = vmatprep.subr.bf16.mxu0 0
        %267 = vmatpush1.bf16.msra.mxu0 0
        %268 = vmatprep.subr.bf16.mxu0 0
        %269 = vmatpush1.bf16.msra.mxu0 0
        %270 = vmatprep.mubr.bf16.mxu0 0
        %271 = vmatmul.mubr.bf16.gmra.mrb[0].mxu0 %v230
        %v272 = vpop.f32.mrb[0].mxu0
        %v273 = vadd.f32 %v189, %v272
        %v274 = vpop.f32.mrb[0].mxu0
        %v275 = vpop.f32.mrb[0].mxu0
        %v276 = vadd.f32 %v189, %v275
        %v277 = vpop.f32.mrb[0].mxu0
        %278 = vmatprep.mubr.bf16.mxu0 0
        %279 = vmatmul.mubr.bf16.gmra.mrb[0].mxu0 %v233
        %v280 = vpop.f32.mrb[0].mxu0
        %v281 = vadd.f32 %v189, %v280
        %v282 = vpop.f32.mrb[0].mxu0
        %v283 = vpop.f32.mrb[0].mxu0
        %v284 = vadd.f32 %v189, %v283
        %v285 = vpop.f32.mrb[0].mxu0
        %286 = vmatprep.mubr.bf16.mxu0 0
        %287 = vmatmul.mubr.bf16.gmra.mrb[0].mxu0 %v236
        %v288 = vpop.f32.mrb[0].mxu0
        %v289 = vadd.f32 %v189, %v288
        %v290 = vpop.f32.mrb[0].mxu0
        %v291 = vpop.f32.mrb[0].mxu0
        %v292 = vpop.f32.mrb[0].mxu0
        %293 = vdwg.mxu0
        %s294 = scalar_lea.vmem %s168, 20
        %v295 = vld [vmem:[%s294] sm:$0xf]
        %v296 = vld [vmem:[%s294 + $0x4] sm:$0xf]
        %v297 = vld [vmem:[%s294 + $0x8] sm:$0xf]
        %v298 = vld [vmem:[%s294 + $0xc] sm:$0xf]
        %v299 = vld [vmem:[%s294 + $0x10] sm:$0x3]
        %v305 = vunpack.c.l.b16 %v295
        %v306 = vunpack.c.l.b16 %v296
        %v307 = vunpack.c.l.b16 %v297
        %v308 = vunpack.c.l.b16 %v298
        %v309 = vunpack.c.l.b16 %v299
        %v310 = vpack.c.b16 %v306, %v305
        %v311 = vpack.c.b16 %v308, %v307
        %v312 = vpack.c.b16 %v309, %v309
        %v314 = vsel %vm228, %v310, 0
        %v317 = vsel %vm228, %v311, 0
        %v320 = vsel %vm228, %v312, 0
        %322 = vmatprep.subr.bf16.mxu0 0
        %323 = vmatpush1.bf16.msra.mxu0 %v220
        %324 = vmatprep.subr.bf16.mxu0 0
        %325 = vmatpush1.bf16.msra.mxu0 %v221
        %326 = vmatprep.subr.bf16.mxu0 0
        %327 = vmatpush1.bf16.msra.mxu0 %v222
        %328 = vmatprep.subr.bf16.mxu0 0
        %329 = vmatpush1.bf16.msra.mxu0 %v223
        %330 = vmatprep.subr.bf16.mxu0 0
        %331 = vmatpush1.bf16.msra.mxu0 0
        %332 = vmatprep.subr.bf16.mxu0 0
        %333 = vmatpush1.bf16.msra.mxu0 0
        %334 = vmatprep.subr.bf16.mxu0 0
        %335 = vmatpush1.bf16.msra.mxu0 0
        %336 = vmatprep.subr.bf16.mxu0 0
        %337 = vmatpush1.bf16.msra.mxu0 0
        %338 = vmatprep.subr.bf16.mxu0 0
        %339 = vmatpush1.bf16.msra.mxu0 0
        %340 = vmatprep.subr.bf16.mxu0 0
        %341 = vmatpush1.bf16.msra.mxu0 0
        %342 = vmatprep.subr.bf16.mxu0 0
        %343 = vmatpush1.bf16.msra.mxu0 0
        %344 = vmatprep.subr.bf16.mxu0 0
        %345 = vmatpush1.bf16.msra.mxu0 0
        %346 = vmatprep.subr.bf16.mxu0 0
        %347 = vmatpush1.bf16.msra.mxu0 0
        %348 = vmatprep.subr.bf16.mxu0 0
        %349 = vmatpush1.bf16.msra.mxu0 0
        %350 = vmatprep.subr.bf16.mxu0 0
        %351 = vmatpush1.bf16.msra.mxu0 0
        %352 = vmatprep.subr.bf16.mxu0 0
        %353 = vmatpush1.bf16.msra.mxu0 0
        %354 = vmatprep.mubr.bf16.mxu0 0
        %355 = vmatmul.mubr.bf16.gmra.mrb[0].mxu0 %v314
        %v356 = vpop.f32.mrb[0].mxu0
        %v357 = vadd.f32 %v189, %v356
        %v358 = vpop.f32.mrb[0].mxu0
        %v359 = vpop.f32.mrb[0].mxu0
        %v360 = vadd.f32 %v189, %v359
        %v361 = vpop.f32.mrb[0].mxu0
        %362 = vmatprep.mubr.bf16.mxu0 0
        %363 = vmatmul.mubr.bf16.gmra.mrb[0].mxu0 %v317
        %v364 = vpop.f32.mrb[0].mxu0
        %v365 = vadd.f32 %v189, %v364
        %v366 = vpop.f32.mrb[0].mxu0
        %v367 = vpop.f32.mrb[0].mxu0
        %v368 = vadd.f32 %v189, %v367
        %v369 = vpop.f32.mrb[0].mxu0
        %370 = vmatprep.mubr.bf16.mxu0 0
        %371 = vmatmul.mubr.bf16.gmra.mrb[0].mxu0 %v320
        %v372 = vpop.f32.mrb[0].mxu0
        %v373 = vadd.f32 %v189, %v372
        %v374 = vpop.f32.mrb[0].mxu0
        %v375 = vpop.f32.mrb[0].mxu0
        %v376 = vpop.f32.mrb[0].mxu0
        %377 = vdwg.mxu0
        %383 = vrot.lane.b32.xlu0 %v357, 64
        %v384 = vpop.permute.xlu0 %383
        %385 = vrot.lane.b32.xlu0 %v360, 64
        %v386 = vpop.permute.xlu0 %385
        %387 = vrot.lane.b32.xlu0 %v365, 64
        %v388 = vpop.permute.xlu0 %387
        %389 = vrot.lane.b32.xlu0 %v368, 64
        %v390 = vpop.permute.xlu0 %389
        %391 = vrot.lane.b32.xlu0 %v373, 64
        %v392 = vpop.permute.xlu0 %391
        %v398 = vsel %vm228, %v273, %v384
        %v399 = vsel %vm228, %v276, %v386
        %v400 = vsel %vm228, %v281, %v388
        %v401 = vsel %vm228, %v284, %v390
        %v402 = vsel %vm228, %v289, %v392
        %403 = vst [vmem:[%s162] sm:$0xff] %v398
        %404 = vst [vmem:[%s162 + $0x8] sm:$0xff] %v399
        %405 = vst [vmem:[%s162 + $0x10] sm:$0xff] %v400
        %406 = vst [vmem:[%s162 + $0x18] sm:$0xff] %v401
        %407 = vst [vmem:[%s162 + $0x20] sm:$0xf] %v402
        %v408 = vadd.f32 %v398, %v399
        %v410 = vrot.slane %v398, 3
        %v412 = vadd.f32 %v408, %v410
        %v413 = vrot.slane %v398, 5
        %v415 = vadd.f32 %v412, %v413
        %v416 = vrot.slane %v398, 7
        %v418 = vadd.f32 %v415, %v416
        %v419 = vrot.slane %v398, 1
        %v421 = vadd.f32 %v418, %v419
        %v423 = vrot.slane %v399, 7
        %v425 = vadd.f32 %v421, %v423
        %v426 = vrot.slane %v399, 1
        %v428 = vadd.f32 %v425, %v426
        %v429 = vmul.f32 %v428, 0.125
        %430 = vst [vmem:[%s162 + $0x4] sm:$0x2] %v429
        %v432 = vrot.slane %v429, 7
        %v434 = vadd.f32 %v408, %v432
        %v435 = vadd.f32 %v434, %v413
        %v436 = vadd.f32 %v435, %v416
        %v437 = vadd.f32 %v436, %v419
        %v438 = vadd.f32 %v437, %v423
        %v439 = vadd.f32 %v438, %v426
        %v440 = vmul.f32 %v439, 0.125
        %441 = vst [vmem:[%s162 + $0x4] sm:$0x4] %v440
        %v443 = vrot.slane %v440, 7
        %v445 = vadd.f32 %v408, %v443
        %v446 = vrot.slane %v399, 5
        %v448 = vadd.f32 %v445, %v446
        %v449 = vadd.f32 %v448, %v416
        %v450 = vadd.f32 %v449, %v419
        %v451 = vadd.f32 %v450, %v423
        %v452 = vadd.f32 %v451, %v426
        %v453 = vmul.f32 %v452, 0.125
        %454 = vst [vmem:[%s162 + $0x4] sm:$0x8] %v453
        %v455 = vrot.slane %v399, 4
        %v457 = vadd.f32 %v429, %v455
        %v458 = vadd.f32 %v457, %v423
        %v459 = vadd.f32 %v458, %v426
        %v460 = vadd.f32 %v459, %v410
        %v461 = vrot.slane %v440, 1
        %v463 = vadd.f32 %v460, %v461
        %v464 = vrot.slane %v399, 3
        %v466 = vadd.f32 %v463, %v464
        %v467 = vadd.f32 %v466, %v446
        %v468 = vmul.f32 %v467, 0.125
        %469 = vst [vmem:[%s162 + $0x8] sm:$0x2] %v468
        %v470 = vadd.f32 %v440, %v455
        %v472 = vrot.slane %v468, 7
        %v474 = vadd.f32 %v470, %v472
        %v475 = vadd.f32 %v474, %v426
        %v476 = vadd.f32 %v475, %v432
        %v478 = vrot.slane %v453, 1
        %v480 = vadd.f32 %v476, %v478
        %v481 = vadd.f32 %v480, %v464
        %v482 = vadd.f32 %v481, %v446
        %v483 = vmul.f32 %v482, 0.125
        %484 = vst [vmem:[%s162 + $0x8] sm:$0x4] %v483
        %v485 = vadd.f32 %v453, %v455
        %v487 = vrot.slane %v483, 7
        %v489 = vadd.f32 %v485, %v487
        %v490 = vadd.f32 %v489, %v426
        %v491 = vadd.f32 %v490, %v443
        %v492 = vadd.f32 %v491, %v446
        %v493 = vadd.f32 %v492, %v464
        %v495 = vrot.slane %v400, 5
        %v497 = vadd.f32 %v493, %v495
        %v498 = vmul.f32 %v497, 0.125
        %499 = vst [vmem:[%s162 + $0x8] sm:$0x8] %v498
        %s500 = sand.u32 %s90, 1
        %s501 = sand.u32 %s90, 1
        %s502 = smul.addr %s501, 40
        %s503 = scalar_lea.vmem [#allocation2], %s502
        // Predicated region
        $region33: #{align_grapher_forward.4} parent=31 // pred_check
          %p504 = pneg %p100
        $region34: #{align_grapher_forward.4} parent=31 // pred_check_branch
          %506 = sbr.rel (%p504) target = $region36
        $region35: #{align_grapher_forward.4} parent=31 // pred_region
          %s507 = smul.addr %s14, 8
          %s508 = scalar_lea.vmem %s3, %s507
          // Predicated region
          $region37: #{align_grapher_forward.4} parent=35 // pred_check
            _
          $region38: #{align_grapher_forward.4} parent=35 // pred_check_branch
            %510 = sbr.rel (0) target = $region40
          $region39: #{align_grapher_forward.4} parent=35 // pred_region
            // Predicated region
            $region41: #{align_grapher_forward.4} parent=39 // pred_check
              _
            $region42: #{align_grapher_forward.4} parent=39 // pred_check_branch
              %512 = sbr.rel (0) target = $region44
            $region43: #{align_grapher_forward.4} parent=39 // pred_region
              // Predicated region
              $region56: #{align_grapher_forward.4} parent=43 // pred_check
                _
              $region57: #{align_grapher_forward.4} parent=43 // pred_check_branch
                %535 = sbr.rel (0) target = $region59
              $region58: #{align_grapher_forward.4} parent=43 // pred_region
                loop: start=0, step=1, limit=1
                $region60: #{align_grapher_forward.4} parent=58 // loop_pre_header
                  _
                $region61: #{align_grapher_forward.4} parent=58 // loop_header
                  %s537 = sphi 0, %s541
                  %p538 = scmp.ge.s32.totalorder %s537, 1
                  %s542 = sphi %s503, %s503
                  %s543 = sphi %s508, %s508
                $region62: #{align_grapher_forward.4} parent=58 // loop_header_branch
                  %540 = sbr.rel (%p538) target = $region66
                $region63: #{align_grapher_forward.4} parent=58 // loop_body
                  %v544 = vld [vmem:[%s542] sm:$0xff]
                  %545 = vst [vmem:[%s543] sm:$0xff] %v544
                  %v546 = vld [vmem:[%s542 + $0x8] sm:$0xff]
                  %547 = vst [vmem:[%s543 + $0x10] sm:$0xff] %v546
                  %v548 = vld [vmem:[%s542 + $0x10] sm:$0xff]
                  %549 = vst [vmem:[%s543 + $0x20] sm:$0xff] %v548
                  %v550 = vld [vmem:[%s542 + $0x18] sm:$0xff]
                  %551 = vst [vmem:[%s543 + $0x30] sm:$0xff] %v550
                  %v552 = vld [vmem:[%s542 + $0x20] sm:$0xff]
                  %553 = vst [vmem:[%s543 + $0x40] sm:$0xff] %v552
                $region64: #{align_grapher_forward.4} parent=58 // loop_footer
                  %s541 = sadd.s32 1, %s537
                $region65: #{align_grapher_forward.4} parent=58 // loop_footer_branch
                  %536 = sbr.rel target = $region61
                $region66: #{align_grapher_forward.4} parent=58 // loop_exit
                  _
              $region59: #{align_grapher_forward.4} parent=43 // pred_fallthru
                _
              // Predicated region
              $region67: #{align_grapher_forward.4} parent=43 // pred_check
                _
              $region68: #{align_grapher_forward.4} parent=43 // pred_check_branch
                %555 = sbr.rel target = $region70
              $region69: #{align_grapher_forward.4} parent=43 // pred_region
                _
              $region70: #{align_grapher_forward.4} parent=43 // pred_fallthru
                _
            $region44: #{align_grapher_forward.4} parent=39 // pred_fallthru
              _
            // Predicated region
            $region45: #{align_grapher_forward.4} parent=39 // pred_check
              _
            $region46: #{align_grapher_forward.4} parent=39 // pred_check_branch
              %514 = sbr.rel target = $region48
            $region47: #{align_grapher_forward.4} parent=39 // pred_region
              loop: start=0, step=1, limit=1
              $region49: #{align_grapher_forward.4} parent=47 // loop_pre_header
                _
              $region50: #{align_grapher_forward.4} parent=47 // loop_header
                %s517 = sphi 0, %s521
                %p518 = scmp.ge.s32.totalorder %s517, 1
                %s522 = sphi %s503, %s503
                %s523 = sphi %s508, %s508
              $region51: #{align_grapher_forward.4} parent=47 // loop_header_branch
                %520 = sbr.rel (%p518) target = $region55
              $region52: #{align_grapher_forward.4} parent=47 // loop_body
                %v524 = vld [vmem:[%s522] sm:$0xff]
                %525 = vst [vmem:[%s523] sm:$0xff] %v524
                %v526 = vld [vmem:[%s522 + $0x8] sm:$0xff]
                %527 = vst [vmem:[%s523 + $0x10] sm:$0xff] %v526
                %v528 = vld [vmem:[%s522 + $0x10] sm:$0xff]
                %529 = vst [vmem:[%s523 + $0x20] sm:$0xff] %v528
                %v530 = vld [vmem:[%s522 + $0x18] sm:$0xff]
                %531 = vst [vmem:[%s523 + $0x30] sm:$0xff] %v530
                %v532 = vld [vmem:[%s522 + $0x20] sm:$0xff]
                %533 = vst [vmem:[%s523 + $0x40] sm:$0xff] %v532
              $region53: #{align_grapher_forward.4} parent=47 // loop_footer
                %s521 = sadd.s32 1, %s517
              $region54: #{align_grapher_forward.4} parent=47 // loop_footer_branch
                %516 = sbr.rel target = $region50
              $region55: #{align_grapher_forward.4} parent=47 // loop_exit
                _
            $region48: #{align_grapher_forward.4} parent=39 // pred_fallthru
              _
          $region40: #{align_grapher_forward.4} parent=35 // pred_fallthru
            _
          %556 = vnop
        $region36: #{align_grapher_forward.4} parent=31 // pred_fallthru
          _
      $region32: #{align_grapher_forward.4} parent=5 // pred_fallthru
        _
      %p557 = scmp.le.s32.totalorder 2, %s9
      // Predicated region
      $region71: #{align_grapher_forward.4} parent=5 // pred_check
        %p558 = pneg %p557
      $region72: #{align_grapher_forward.4} parent=5 // pred_check_branch
        %560 = sbr.rel (%p558) target = $region74
      $region73: #{align_grapher_forward.4} parent=5 // pred_region
        %s561 = ssub.s32 %s9, 2
        // Predicated region
        $region75: #{align_grapher_forward.4} parent=73 // pred_check
          %p562 = pneg %p106
        $region76: #{align_grapher_forward.4} parent=73 // pred_check_branch
          %564 = sbr.rel (%p562) target = $region78
        $region77: #{align_grapher_forward.4} parent=73 // pred_region
          %s565 = sand.u32 %s91, 1
          %s566 = sand.u32 %s91, 1
          %s567 = smul.addr %s566, 40
          %s568 = scalar_lea.vmem [#allocation2], %s567
        $region78: #{align_grapher_forward.4} parent=73 // pred_fallthru
          _
      $region74: #{align_grapher_forward.4} parent=5 // pred_fallthru
        _
    $region6: #{align_grapher_forward.4} parent=1 // loop_footer
      %s13 = sadd.s32 1, %s9
    $region7: #{align_grapher_forward.4} parent=1 // loop_footer_branch
      %8 = sbr.rel target = $region3
    $region8: #{align_grapher_forward.4} parent=1 // loop_exit
      _

// kernel: align_grapher_forward.5
$region0: #{align_grapher_forward.5}
  #allocation0 [shape = 'u32[]', space=smem, size = 0x4, offset = 0x4, fixed_abs, tag = 'smem constant byte address 0x4 - core index']
  #allocation1 [shape = 'u32[144,128]{1,0:T(1,128)}', space=vmem, size = 0x12000, scoped, tag = 'internal scratch']
  %s0 = inlined_call_operand.vmem [shape: bf16[4,1024], index: 0, kind: input, shape index: {}]
  %s1 = inlined_call_operand.vmem [shape: bf16[4,4], index: 1, kind: input, shape index: {}]
  %s2 = inlined_call_operand.vmem [shape: f32[4,1], index: 2, kind: input, shape index: {}]
  %s3 = inlined_call_operand.vmem [shape: f32[4,1024], index: 3, kind: output, shape index: {}]
  %s4 = sld [smem:[#allocation0]]
  $region45: #{align_grapher_forward.5} parent=0
    _
  %s6 = ssub.s32 1, %s4
  %s7 = scalar_select 0, %s6, %s4
  loop: start=0, step=1, limit=4
  $region2: #{align_grapher_forward.5} parent=0 // loop_pre_header
    _
  $region3: #{align_grapher_forward.5} parent=0 // loop_header
    %s9 = sphi 0, %s13
    %p10 = scmp.ge.s32.totalorder %s9, 4
    %s19 = sphi 0, %s21
    %s22 = sphi 0, %s19
    %s23 = sphi 0, %s22
    %s39 = sphi 0, %s23
    %s43 = sphi 0, %s43
    %s45 = sphi 0, %s43
    %s46 = sphi 0, %s45
    %s60 = sphi 0, %s46
    %s64 = sphi 0, %s64
    %s66 = sphi 0, %s64
    %s67 = sphi 0, %s66
    %s81 = sphi 0, %s67
    %s87 = sphi 0, %s89
    %s90 = sphi 0, %s87
    %s91 = sphi 0, %s90
    %s107 = sphi 0, %s91
  $region4: #{align_grapher_forward.5} parent=0 // loop_header_branch
    %12 = sbr.rel (%p10) target = $region8
  $region5: #{align_grapher_forward.5} parent=0 // loop_body
    %s14 = ssub.s32 %s9, 1
    %s15 = ssub.s32 %s9, 2
    %s16 = sadd.s32 %s9, 1
    %s17 = ssub.s32 %s9, %s16
    %p18 = scmp.eq.s32.totalorder %s17, 0
    %s20 = sadd.s32 %s19, 1
    %s21 = scalar_select %p18, %s19, %s20
    %p24 = pneg %p18
    %p25 = scmp.eq.s32.totalorder %s9, 1
    %p26 = por %p24, %p25
    %p27 = scmp.ne.s32.totalorder %s19, %s22
    %p28 = scmp.eq.s32.totalorder %s9, 0
    %p29 = por %p27, %p28
    %p30 = scmp.ne.s32.totalorder %s19, %s22
    %p31 = scmp.eq.s32.totalorder %s14, 1
    %p32 = por %p30, %p31
    %p33 = scmp.ne.s32.totalorder %s22, %s23
    %p34 = scmp.eq.s32.totalorder %s14, 0
    %p35 = por %p33, %p34
    %p36 = scmp.ne.s32.totalorder %s22, %s23
    %p37 = scmp.eq.s32.totalorder %s15, 1
    %p38 = por %p36, %p37
    %p40 = scmp.ne.s32.totalorder %s23, %s39
    %p41 = scmp.eq.s32.totalorder %s15, 0
    %p42 = por %p40, %p41
    %s44 = sadd.s32 %s43, 1
    %p47 = scmp.eq.s32.totalorder %s9, 1
    %p48 = scmp.ne.s32.totalorder %s43, %s45
    %p49 = scmp.eq.s32.totalorder %s9, 0
    %p50 = por %p48, %p49
    %p51 = scmp.ne.s32.totalorder %s43, %s45
    %p52 = scmp.eq.s32.totalorder %s14, 1
    %p53 = por %p51, %p52
    %p54 = scmp.ne.s32.totalorder %s45, %s46
    %p55 = scmp.eq.s32.totalorder %s14, 0
    %p56 = por %p54, %p55
    %p57 = scmp.ne.s32.totalorder %s45, %s46
    %p58 = scmp.eq.s32.totalorder %s15, 1
    %p59 = por %p57, %p58
    %p61 = scmp.ne.s32.totalorder %s46, %s60
    %p62 = scmp.eq.s32.totalorder %s15, 0
    %p63 = por %p61, %p62
    %s65 = sadd.s32 %s64, 1
    %p68 = scmp.eq.s32.totalorder %s9, 1
    %p69 = scmp.ne.s32.totalorder %s64, %s66
    %p70 = scmp.eq.s32.totalorder %s9, 0
    %p71 = por %p69, %p70
    %p72 = scmp.ne.s32.totalorder %s64, %s66
    %p73 = scmp.eq.s32.totalorder %s14, 1
    %p74 = por %p72, %p73
    %p75 = scmp.ne.s32.totalorder %s66, %s67
    %p76 = scmp.eq.s32.totalorder %s14, 0
    %p77 = por %p75, %p76
    %p78 = scmp.ne.s32.totalorder %s66, %s67
    %p79 = scmp.eq.s32.totalorder %s15, 1
    %p80 = por %p78, %p79
    %p82 = scmp.ne.s32.totalorder %s67, %s81
    %p83 = scmp.eq.s32.totalorder %s15, 0
    %p84 = por %p82, %p83
    %s85 = ssub.s32 %s9, %s16
    %p86 = scmp.eq.s32.totalorder %s85, 0
    %s88 = sadd.s32 %s87, 1
    %s89 = scalar_select %p86, %s87, %s88
    %p92 = pneg %p86
    %p93 = scmp.eq.s32.totalorder %s9, 1
    %p94 = por %p92, %p93
    %p95 = scmp.ne.s32.totalorder %s87, %s90
    %p96 = scmp.eq.s32.totalorder %s9, 0
    %p97 = por %p95, %p96
    %p98 = scmp.ne.s32.totalorder %s87, %s90
    %p99 = scmp.eq.s32.totalorder %s14, 1
    %p100 = por %p98, %p99
    %p101 = scmp.ne.s32.totalorder %s90, %s91
    %p102 = scmp.eq.s32.totalorder %s14, 0
    %p103 = por %p101, %p102
    %p104 = scmp.ne.s32.totalorder %s90, %s91
    %p105 = scmp.eq.s32.totalorder %s15, 1
    %p106 = por %p104, %p105
    %p108 = scmp.ne.s32.totalorder %s91, %s107
    %p109 = scmp.eq.s32.totalorder %s15, 0
    %p110 = por %p108, %p109
    %p111 = scmp.le.s32.totalorder 1, %s9
    %p112 = scmp.lt.s32.totalorder %s9, 3
    %p113 = pnand %p111, %p112
    %p114 = pneg %p113
    // Predicated region
    $region9: #{align_grapher_forward.5} parent=5 // pred_check
      _
    $region10: #{align_grapher_forward.5} parent=5 // pred_check_branch
      %116 = sbr.rel (%p113) target = $region12
    $region11: #{align_grapher_forward.5} parent=5 // pred_region
      %s117 = ssub.s32 %s9, 1
      // Predicated region
      $region13: #{align_grapher_forward.5} parent=11 // pred_check
        %p118 = pneg %p56
      $region14: #{align_grapher_forward.5} parent=11 // pred_check_branch
        %120 = sbr.rel (%p118) target = $region16
      $region15: #{align_grapher_forward.5} parent=11 // pred_region
        _
      $region16: #{align_grapher_forward.5} parent=11 // pred_fallthru
        _
      // Predicated region
      $region17: #{align_grapher_forward.5} parent=11 // pred_check
        %p121 = pneg %p77
      $region18: #{align_grapher_forward.5} parent=11 // pred_check_branch
        %123 = sbr.rel (%p121) target = $region20
      $region19: #{align_grapher_forward.5} parent=11 // pred_region
        _
      $region20: #{align_grapher_forward.5} parent=11 // pred_fallthru
        _
    $region12: #{align_grapher_forward.5} parent=5 // pred_fallthru
      _
    %p124 = scmp.lt.s32.totalorder %s9, 2
    // Predicated region
    $region21: #{align_grapher_forward.5} parent=5 // pred_check
      %p125 = pneg %p124
    $region22: #{align_grapher_forward.5} parent=5 // pred_check_branch
      %127 = sbr.rel (%p125) target = $region24
    $region23: #{align_grapher_forward.5} parent=5 // pred_region
      // Predicated region
      $region25: #{align_grapher_forward.5} parent=23 // pred_check
        %p128 = pneg %p29
      $region26: #{align_grapher_forward.5} parent=23 // pred_check_branch
        %130 = sbr.rel (%p128) target = $region28
      $region27: #{align_grapher_forward.5} parent=23 // pred_region
        %s131 = smul.u32 4, %s9
        %p132 = scmp.lt.s32.totalorder %s131, 7
        %s133 = scalar_select %p132, %s131, 7
        %s134 = smul.addr %s133, 2
        %s135 = scalar_lea.vmem %s0, %s134
        %s136 = smul.u32 4, %s9
      $region28: #{align_grapher_forward.5} parent=23 // pred_fallthru
        _
    $region24: #{align_grapher_forward.5} parent=5 // pred_fallthru
      _
    %p137 = scmp.le.s32.totalorder 1, %s9
    %p138 = scmp.lt.s32.totalorder %s9, 3
    %p139 = pnand %p137, %p138
    %p140 = pneg %p139
    // Predicated region
    $region29: #{align_grapher_forward.5} parent=5 // pred_check
      _
    $region30: #{align_grapher_forward.5} parent=5 // pred_check_branch
      %142 = sbr.rel (%p139) target = $region32
    $region31: #{align_grapher_forward.5} parent=5 // pred_region
      %s143 = ssub.s32 %s9, 1
      %s144 = smul.u32 4, %s14
      %p145 = scmp.lt.s32.totalorder %s144, 7
      %s146 = scalar_select %p145, %s144, 7
      %s147 = smul.addr %s146, 2
      %s148 = scalar_lea.vmem %s0, %s147
      %p149 = pneg %p35
      %p150 = pneg %p32
      %p151 = pneg %p56
      %p152 = pneg %p53
      %p153 = pneg %p77
      %p154 = pneg %p74
      %p155 = pneg %p103
      %p156 = pneg %p100
      %s157 = smul.u32 4, %s14
      %p158 = scmp.lt.s32.totalorder %s157, 7
      %s159 = scalar_select %p158, %s157, 7
      %s160 = smul.addr %s159, 4
      %s161 = scalar_lea.vmem %s3, %s160
      %s162 = smul.u32 4, %s14
      %p163 = scmp.lt.s32.totalorder %s162, 7
      %s164 = scalar_select %p163, %s162, 7
      %s165 = smul.addr %s164, 2
      %s166 = scalar_lea.vmem %s0, %s165
      %s167 = smul.u32 4, %s14
      %s168 = smul.u32 4, %s14
      %p169 = scmp.lt.s32.totalorder %s168, 7
      %s170 = scalar_select %p169, %s168, 7
      %s171 = smul.addr %s170, 4
      %s172 = scalar_lea.vmem %s3, %s171
      %s173 = smul.u32 4, %s14
      %v175 = vld [vmem:[%s1] sm:$0x3]
      %v176 = vld [vmem:[%s166] sm:$0xff]
      %v177 = vld [vmem:[%s2] sm:$0xf]
      %179 = vset.pattern.permute.xlu0 0
      %180 = vperm.xlu0 %179, %v177
      %v181 = vpop.permute.xlu0 %180
      %v184 = vcombine.high %v176, %v176
      %v186 = vunpack.c.l.s4 1983009808
      %v187 = vunpack.c.0.s8 %v186
      %v188 = vlaneseq
      %v189 = vshrl.u32 %v188, 7
      %v190 = vsub.s32 %v187, %v189
      %v191 = vrot.slane %v176, %v190
      %v193 = vunpack.c.l.s4 1983009808
      %v194 = vunpack.c.0.s8 %v193
      %v195 = vlaneseq
      %v196 = vshrl.u32 %v195, 7
      %v197 = vsub.s32 %v194, %v196
      %v198 = vrot.slane %v184, %v197
      %v199 = vcombine.high %v191, %v191
      %v200 = vcombine.high %v198, %v198
      %vm201 = vcmask 31744
      %v203 = vsel %vm201, %v175, 0
      %vm205 = vcmask 1041408
      %v207 = vsel %vm205, %v191, 0
      %v210 = vsel %vm205, %v199, 0
      %v213 = vsel %vm205, %v198, 0
      %v216 = vsel %vm205, %v200, 0
      %218 = vmatprep.subr.bf16.mxu0 %v210
      %219 = vmatpush1.bf16.msra.mxu0 %v207
      %220 = vmatprep.subr.bf16.mxu0 0
      %221 = vmatpush1.bf16.msra.mxu0 0
      %222 = vmatprep.subr.bf16.mxu0 0
      %223 = vmatpush1.bf16.msra.mxu0 0
      %224 = vmatprep.subr.bf16.mxu0 0
      %225 = vmatpush1.bf16.msra.mxu0 0
      %226 = vmatprep.subr.bf16.mxu0 0
      %227 = vmatpush1.bf16.msra.mxu0 0
      %228 = vmatprep.subr.bf16.mxu0 0
      %229 = vmatpush1.bf16.msra.mxu0 0
      %230 = vmatprep.subr.bf16.mxu0 0
      %231 = vmatpush1.bf16.msra.mxu0 0
      %232 = vmatprep.subr.bf16.mxu0 0
      %233 = vmatpush1.bf16.msra.mxu0 0
      %234 = vmatprep.subr.bf16.mxu0 0
      %235 = vmatpush1.bf16.msra.mxu0 0
      %236 = vmatprep.subr.bf16.mxu0 0
      %237 = vmatpush1.bf16.msra.mxu0 0
      %238 = vmatprep.subr.bf16.mxu0 0
      %239 = vmatpush1.bf16.msra.mxu0 0
      %240 = vmatprep.subr.bf16.mxu0 0
      %241 = vmatpush1.bf16.msra.mxu0 0
      %242 = vmatprep.subr.bf16.mxu0 0
      %243 = vmatpush1.bf16.msra.mxu0 0
      %244 = vmatprep.subr.bf16.mxu0 0
      %245 = vmatpush1.bf16.msra.mxu0 0
      %246 = vmatprep.subr.bf16.mxu0 0
      %247 = vmatpush1.bf16.msra.mxu0 0
      %248 = vmatprep.subr.bf16.mxu0 0
      %249 = vmatpush1.bf16.msra.mxu0 0
      %250 = vmatprep.mubr.bf16.mxu0 0
      %251 = vmatmul.mubr.bf16.gmra.mrb[0].mxu0 %v203
      %v252 = vpop.f32.mrb[0].mxu0
      %v253 = vadd.f32 %v181, %v252
      %v254 = vpop.f32.mrb[0].mxu0
      %v255 = vadd.f32 %v181, %v254
      %v256 = vpop.f32.mrb[0].mxu0
      %v257 = vpop.f32.mrb[0].mxu0
      %258 = vdwg.mxu0
      %259 = vmatprep.subr.bf16.mxu0 %v216
      %260 = vmatpush1.bf16.msra.mxu0 %v213
      %261 = vmatprep.subr.bf16.mxu0 0
      %262 = vmatpush1.bf16.msra.mxu0 0
      %263 = vmatprep.subr.bf16.mxu0 0
      %264 = vmatpush1.bf16.msra.mxu0 0
      %265 = vmatprep.subr.bf16.mxu0 0
      %266 = vmatpush1.bf16.msra.mxu0 0
      %267 = vmatprep.subr.bf16.mxu0 0
      %268 = vmatpush1.bf16.msra.mxu0 0
      %269 = vmatprep.subr.bf16.mxu0 0
      %270 = vmatpush1.bf16.msra.mxu0 0
      %271 = vmatprep.subr.bf16.mxu0 0
      %272 = vmatpush1.bf16.msra.mxu0 0
      %273 = vmatprep.subr.bf16.mxu0 0
      %274 = vmatpush1.bf16.msra.mxu0 0
      %275 = vmatprep.subr.bf16.mxu0 0
      %276 = vmatpush1.bf16.msra.mxu0 0
      %277 = vmatprep.subr.bf16.mxu0 0
      %278 = vmatpush1.bf16.msra.mxu0 0
      %279 = vmatprep.subr.bf16.mxu0 0
      %280 = vmatpush1.bf16.msra.mxu0 0
      %281 = vmatprep.subr.bf16.mxu0 0
      %282 = vmatpush1.bf16.msra.mxu0 0
      %283 = vmatprep.subr.bf16.mxu0 0
      %284 = vmatpush1.bf16.msra.mxu0 0
      %285 = vmatprep.subr.bf16.mxu0 0
      %286 = vmatpush1.bf16.msra.mxu0 0
      %287 = vmatprep.subr.bf16.mxu0 0
      %288 = vmatpush1.bf16.msra.mxu0 0
      %289 = vmatprep.subr.bf16.mxu0 0
      %290 = vmatpush1.bf16.msra.mxu0 0
      %291 = vmatprep.mubr.bf16.mxu0 0
      %292 = vmatmul.mubr.bf16.gmra.mrb[0].mxu0 %v203
      %v293 = vpop.f32.mrb[0].mxu0
      %v294 = vadd.f32 %v181, %v293
      %v295 = vpop.f32.mrb[0].mxu0
      %v296 = vadd.f32 %v181, %v295
      %v297 = vpop.f32.mrb[0].mxu0
      %v298 = vpop.f32.mrb[0].mxu0
      %299 = vdwg.mxu0
      %v304 = vcombine.low %v253, %v255
      %v305 = vcombine.low %v294, %v296
      %308 = vst [vmem:[%s172] sm:$0xff] %v304
      %309 = vst [vmem:[%s172 + $0x8] sm:$0xff] %v305
      %s310 = smul.u32 4, %s14
      %p311 = scmp.lt.s32.totalorder %s310, 7
      %s312 = scalar_select %p311, %s310, 7
      %s313 = smul.addr %s312, 4
      %s314 = scalar_lea.vmem %s3, %s313
      // Predicated region
      $region33: #{align_grapher_forward.5} parent=31 // pred_check
        %p315 = pneg %p100
      $region34: #{align_grapher_forward.5} parent=31 // pred_check_branch
        %317 = sbr.rel (%p315) target = $region36
      $region35: #{align_grapher_forward.5} parent=31 // pred_region
        %s318 = smul.u32 4, %s14
      $region36: #{align_grapher_forward.5} parent=31 // pred_fallthru
        _
    $region32: #{align_grapher_forward.5} parent=5 // pred_fallthru
      _
    %p319 = scmp.le.s32.totalorder 2, %s9
    // Predicated region
    $region37: #{align_grapher_forward.5} parent=5 // pred_check
      %p320 = pneg %p319
    $region38: #{align_grapher_forward.5} parent=5 // pred_check_branch
      %322 = sbr.rel (%p320) target = $region40
    $region39: #{align_grapher_forward.5} parent=5 // pred_region
      %s323 = ssub.s32 %s9, 2
      // Predicated region
      $region41: #{align_grapher_forward.5} parent=39 // pred_check
        %p324 = pneg %p106
      $region42: #{align_grapher_forward.5} parent=39 // pred_check_branch
        %326 = sbr.rel (%p324) target = $region44
      $region43: #{align_grapher_forward.5} parent=39 // pred_region
        %s327 = smul.u32 4, %s15
        %p328 = scmp.lt.s32.totalorder %s327, 7
        %s329 = scalar_select %p328, %s327, 7
        %s330 = smul.addr %s329, 4
        %s331 = scalar_lea.vmem %s3, %s330
      $region44: #{align_grapher_forward.5} parent=39 // pred_fallthru
        _
    $region40: #{align_grapher_forward.5} parent=5 // pred_fallthru
      _
  $region6: #{align_grapher_forward.5} parent=0 // loop_footer
    %s13 = sadd.s32 1, %s9
  $region7: #{align_grapher_forward.5} parent=0 // loop_footer_branch
    %8 = sbr.rel target = $region3
  $region8: #{align_grapher_forward.5} parent=0 // loop_exit
    _

// kernel: align_grapher_forward.6
$region0: #{align_grapher_forward.6}
  #allocation0 [shape = 'u32[]', space=smem, size = 0x4, offset = 0x4, fixed_abs, tag = 'smem constant byte address 0x4 - core index']
  #allocation1 [shape = 'u32[144,128]{1,0:T(1,128)}', space=vmem, size = 0x12000, scoped, tag = 'internal scratch']
  %s0 = inlined_call_operand.vmem [shape: f32[2,256,4], index: 0, kind: input, shape index: {}]
  %s1 = inlined_call_operand.vmem [shape: f32[2,4,64], index: 1, kind: input, shape index: {}]
  %s2 = inlined_call_operand.vmem [shape: f32[2,256,64], index: 2, kind: output, shape index: {}]
  %s3 = sld [smem:[#allocation0]]
  $region41: #{align_grapher_forward.6} parent=0
    _
  %s5 = ssub.s32 1, %s3
  %s6 = scalar_select 0, %s5, %s3
  loop: start=0, step=1, limit=4
  $region2: #{align_grapher_forward.6} parent=0 // loop_pre_header
    _
  $region3: #{align_grapher_forward.6} parent=0 // loop_header
    %s8 = sphi 0, %s12
    %p9 = scmp.ge.s32.totalorder %s8, 4
    %s18 = sphi 0, %s20
    %s21 = sphi 0, %s18
    %s22 = sphi 0, %s21
    %s38 = sphi 0, %s22
    %s44 = sphi 0, %s46
    %s47 = sphi 0, %s44
    %s48 = sphi 0, %s47
    %s64 = sphi 0, %s48
    %s70 = sphi 0, %s72
    %s73 = sphi 0, %s70
    %s74 = sphi 0, %s73
    %s90 = sphi 0, %s74
  $region4: #{align_grapher_forward.6} parent=0 // loop_header_branch
    %11 = sbr.rel (%p9) target = $region8
  $region5: #{align_grapher_forward.6} parent=0 // loop_body
    %s13 = ssub.s32 %s8, 1
    %s14 = ssub.s32 %s8, 2
    %s15 = sadd.s32 %s8, 1
    %s16 = ssub.s32 %s8, %s15
    %p17 = scmp.eq.s32.totalorder %s16, 0
    %s19 = sadd.s32 %s18, 1
    %s20 = scalar_select %p17, %s18, %s19
    %p23 = pneg %p17
    %p24 = scmp.eq.s32.totalorder %s8, 1
    %p25 = por %p23, %p24
    %p26 = scmp.ne.s32.totalorder %s18, %s21
    %p27 = scmp.eq.s32.totalorder %s8, 0
    %p28 = por %p26, %p27
    %p29 = scmp.ne.s32.totalorder %s18, %s21
    %p30 = scmp.eq.s32.totalorder %s13, 1
    %p31 = por %p29, %p30
    %p32 = scmp.ne.s32.totalorder %s21, %s22
    %p33 = scmp.eq.s32.totalorder %s13, 0
    %p34 = por %p32, %p33
    %p35 = scmp.ne.s32.totalorder %s21, %s22
    %p36 = scmp.eq.s32.totalorder %s14, 1
    %p37 = por %p35, %p36
    %p39 = scmp.ne.s32.totalorder %s22, %s38
    %p40 = scmp.eq.s32.totalorder %s14, 0
    %p41 = por %p39, %p40
    %s42 = ssub.s32 %s8, %s15
    %p43 = scmp.eq.s32.totalorder %s42, 0
    %s45 = sadd.s32 %s44, 1
    %s46 = scalar_select %p43, %s44, %s45
    %p49 = pneg %p43
    %p50 = scmp.eq.s32.totalorder %s8, 1
    %p51 = por %p49, %p50
    %p52 = scmp.ne.s32.totalorder %s44, %s47
    %p53 = scmp.eq.s32.totalorder %s8, 0
    %p54 = por %p52, %p53
    %p55 = scmp.ne.s32.totalorder %s44, %s47
    %p56 = scmp.eq.s32.totalorder %s13, 1
    %p57 = por %p55, %p56
    %p58 = scmp.ne.s32.totalorder %s47, %s48
    %p59 = scmp.eq.s32.totalorder %s13, 0
    %p60 = por %p58, %p59
    %p61 = scmp.ne.s32.totalorder %s47, %s48
    %p62 = scmp.eq.s32.totalorder %s14, 1
    %p63 = por %p61, %p62
    %p65 = scmp.ne.s32.totalorder %s48, %s64
    %p66 = scmp.eq.s32.totalorder %s14, 0
    %p67 = por %p65, %p66
    %s68 = ssub.s32 %s8, %s15
    %p69 = scmp.eq.s32.totalorder %s68, 0
    %s71 = sadd.s32 %s70, 1
    %s72 = scalar_select %p69, %s70, %s71
    %p75 = pneg %p69
    %p76 = scmp.eq.s32.totalorder %s8, 1
    %p77 = por %p75, %p76
    %p78 = scmp.ne.s32.totalorder %s70, %s73
    %p79 = scmp.eq.s32.totalorder %s8, 0
    %p80 = por %p78, %p79
    %p81 = scmp.ne.s32.totalorder %s70, %s73
    %p82 = scmp.eq.s32.totalorder %s13, 1
    %p83 = por %p81, %p82
    %p84 = scmp.ne.s32.totalorder %s73, %s74
    %p85 = scmp.eq.s32.totalorder %s13, 0
    %p86 = por %p84, %p85
    %p87 = scmp.ne.s32.totalorder %s73, %s74
    %p88 = scmp.eq.s32.totalorder %s14, 1
    %p89 = por %p87, %p88
    %p91 = scmp.ne.s32.totalorder %s74, %s90
    %p92 = scmp.eq.s32.totalorder %s14, 0
    %p93 = por %p91, %p92
    %p94 = scmp.le.s32.totalorder 1, %s8
    %p95 = scmp.lt.s32.totalorder %s8, 3
    %p96 = pnand %p94, %p95
    %p97 = pneg %p96
    // Predicated region
    $region9: #{align_grapher_forward.6} parent=5 // pred_check
      _
    $region10: #{align_grapher_forward.6} parent=5 // pred_check_branch
      %99 = sbr.rel (%p96) target = $region12
    $region11: #{align_grapher_forward.6} parent=5 // pred_region
      %s100 = ssub.s32 %s8, 1
    $region12: #{align_grapher_forward.6} parent=5 // pred_fallthru
      _
    %p101 = scmp.lt.s32.totalorder %s8, 2
    // Predicated region
    $region13: #{align_grapher_forward.6} parent=5 // pred_check
      %p102 = pneg %p101
    $region14: #{align_grapher_forward.6} parent=5 // pred_check_branch
      %104 = sbr.rel (%p102) target = $region16
    $region15: #{align_grapher_forward.6} parent=5 // pred_region
      // Predicated region
      $region17: #{align_grapher_forward.6} parent=15 // pred_check
        %p105 = pneg %p28
      $region18: #{align_grapher_forward.6} parent=15 // pred_check_branch
        %107 = sbr.rel (%p105) target = $region20
      $region19: #{align_grapher_forward.6} parent=15 // pred_region
        %p108 = scmp.lt.s32.totalorder %s8, 1
        %s109 = scalar_select %p108, %s8, 1
        %s110 = smul.addr %s109, 32
        %s111 = smul.addr %s110, 8
        %s112 = scalar_lea.vmem %s0, %s111
      $region20: #{align_grapher_forward.6} parent=15 // pred_fallthru
        _
      // Predicated region
      $region21: #{align_grapher_forward.6} parent=15 // pred_check
        %p113 = pneg %p54
      $region22: #{align_grapher_forward.6} parent=15 // pred_check_branch
        %115 = sbr.rel (%p113) target = $region24
      $region23: #{align_grapher_forward.6} parent=15 // pred_region
        %p116 = scmp.lt.s32.totalorder %s8, 1
        %s117 = scalar_select %p116, %s8, 1
        %s118 = smul.addr %s117, 4
        %s119 = scalar_lea.vmem %s1, %s118
      $region24: #{align_grapher_forward.6} parent=15 // pred_fallthru
        _
    $region16: #{align_grapher_forward.6} parent=5 // pred_fallthru
      _
    %p120 = scmp.le.s32.totalorder 1, %s8
    %p121 = scmp.lt.s32.totalorder %s8, 3
    %p122 = pnand %p120, %p121
    %p123 = pneg %p122
    // Predicated region
    $region25: #{align_grapher_forward.6} parent=5 // pred_check
      _
    $region26: #{align_grapher_forward.6} parent=5 // pred_check_branch
      %125 = sbr.rel (%p122) target = $region28
    $region27: #{align_grapher_forward.6} parent=5 // pred_region
      %s126 = ssub.s32 %s8, 1
      %p127 = scmp.lt.s32.totalorder %s13, 1
      %s128 = scalar_select %p127, %s13, 1
      %s129 = smul.addr %s128, 32
      %s130 = smul.addr %s129, 8
      %s131 = scalar_lea.vmem %s0, %s130
      %p132 = pneg %p34
      %p133 = pneg %p31
      %p134 = scmp.lt.s32.totalorder %s13, 1
      %s135 = scalar_select %p134, %s13, 1
      %s136 = smul.addr %s135, 4
      %s137 = scalar_lea.vmem %s1, %s136
      %p138 = pneg %p60
      %p139 = pneg %p57
      %p140 = pneg %p86
      %p141 = pneg %p83
      %p142 = scmp.lt.s32.totalorder %s13, 1
      %s143 = scalar_select %p142, %s13, 1
      %s144 = smul.addr %s143, 32
      %s145 = smul.addr %s144, 8
      %s146 = scalar_lea.vmem %s2, %s145
      %p147 = scmp.lt.s32.totalorder %s13, 1
      %s148 = scalar_select %p147, %s13, 1
      %s149 = smul.addr %s148, 32
      %s150 = smul.addr %s149, 8
      %s151 = scalar_lea.vmem %s0, %s150
      %p152 = scmp.lt.s32.totalorder %s13, 1
      %s153 = scalar_select %p152, %s13, 1
      %s154 = smul.addr %s153, 4
      %s155 = scalar_lea.vmem %s1, %s154
      %p156 = scmp.lt.s32.totalorder %s13, 1
      %s157 = scalar_select %p156, %s13, 1
      %s158 = smul.addr %s157, 32
      %s159 = smul.addr %s158, 8
      %s160 = scalar_lea.vmem %s2, %s159
      %v162 = vld [vmem:[%s151] sm:$0xff]
      %v163 = vld [vmem:[%s151 + $0x8] sm:$0xff]
      %v164 = vld [vmem:[%s151 + $0x10] sm:$0xff]
      %v165 = vld [vmem:[%s151 + $0x18] sm:$0xff]
      %v166 = vld [vmem:[%s151 + $0x20] sm:$0xff]
      %v167 = vld [vmem:[%s151 + $0x28] sm:$0xff]
      %v168 = vld [vmem:[%s151 + $0x30] sm:$0xff]
      %v169 = vld [vmem:[%s151 + $0x38] sm:$0xff]
      %v170 = vld [vmem:[%s151 + $0x40] sm:$0xff]
      %v171 = vld [vmem:[%s151 + $0x48] sm:$0xff]
      %v172 = vld [vmem:[%s151 + $0x50] sm:$0xff]
      %v173 = vld [vmem:[%s151 + $0x58] sm:$0xff]
      %v174 = vld [vmem:[%s151 + $0x60] sm:$0xff]
      %v175 = vld [vmem:[%s151 + $0x68] sm:$0xff]
      %v176 = vld [vmem:[%s151 + $0x70] sm:$0xff]
      %v177 = vld [vmem:[%s151 + $0x78] sm:$0xff]
      %v178 = vld [vmem:[%s151 + $0x80] sm:$0xff]
      %v179 = vld [vmem:[%s151 + $0x88] sm:$0xff]
      %v180 = vld [vmem:[%s151 + $0x90] sm:$0xff]
      %v181 = vld [vmem:[%s151 + $0x98] sm:$0xff]
      %v182 = vld [vmem:[%s151 + $0xa0] sm:$0xff]
      %v183 = vld [vmem:[%s151 + $0xa8] sm:$0xff]
      %v184 = vld [vmem:[%s151 + $0xb0] sm:$0xff]
      %v185 = vld [vmem:[%s151 + $0xb8] sm:$0xff]
      %v186 = vld [vmem:[%s151 + $0xc0] sm:$0xff]
      %v187 = vld [vmem:[%s151 + $0xc8] sm:$0xff]
      %v188 = vld [vmem:[%s151 + $0xd0] sm:$0xff]
      %v189 = vld [vmem:[%s151 + $0xd8] sm:$0xff]
      %v190 = vld [vmem:[%s151 + $0xe0] sm:$0xff]
      %v191 = vld [vmem:[%s151 + $0xe8] sm:$0xff]
      %v192 = vld [vmem:[%s151 + $0xf0] sm:$0xff]
      %v193 = vld [vmem:[%s151 + $0xf8] sm:$0xff]
      %v194 = vld [vmem:[%s155] sm:$0xf]
      %v195 = vmul.f32 %v162, %v162
      %v196 = vmul.f32 %v163, %v163
      %v197 = vmul.f32 %v164, %v164
      %v198 = vmul.f32 %v165, %v165
      %v199 = vmul.f32 %v166, %v166
      %v200 = vmul.f32 %v167, %v167
      %v201 = vmul.f32 %v168, %v168
      %v202 = vmul.f32 %v169, %v169
      %v203 = vmul.f32 %v170, %v170
      %v204 = vmul.f32 %v171, %v171
      %v205 = vmul.f32 %v172, %v172
      %v206 = vmul.f32 %v173, %v173
      %v207 = vmul.f32 %v174, %v174
      %v208 = vmul.f32 %v175, %v175
      %v209 = vmul.f32 %v176, %v176
      %v210 = vmul.f32 %v177, %v177
      %v211 = vmul.f32 %v178, %v178
      %v212 = vmul.f32 %v179, %v179
      %v213 = vmul.f32 %v180, %v180
      %v214 = vmul.f32 %v181, %v181
      %v215 = vmul.f32 %v182, %v182
      %v216 = vmul.f32 %v183, %v183
      %v217 = vmul.f32 %v184, %v184
      %v218 = vmul.f32 %v185, %v185
      %v219 = vmul.f32 %v186, %v186
      %v220 = vmul.f32 %v187, %v187
      %v221 = vmul.f32 %v188, %v188
      %v222 = vmul.f32 %v189, %v189
      %v223 = vmul.f32 %v190, %v190
      %v224 = vmul.f32 %v191, %v191
      %v225 = vmul.f32 %v192, %v192
      %v226 = vmul.f32 %v193, %v193
      %vm227 = vcmask 31744
      %v228 = vsel %vm227, %v195, 0.0
      %229 = vadd.xlane.f32.xlu0 %v228
      %v230 = vpop.xlane.xlu0 %229
      %v231 = vsel %vm227, %v196, 0.0
      %232 = vadd.xlane.f32.xlu0 %v231
      %v233 = vpop.xlane.xlu0 %232
      %v234 = vsel %vm227, %v197, 0.0
      %235 = vadd.xlane.f32.xlu0 %v234
      %v236 = vpop.xlane.xlu0 %235
      %v237 = vsel %vm227, %v198, 0.0
      %238 = vadd.xlane.f32.xlu0 %v237
      %v239 = vpop.xlane.xlu0 %238
      %v240 = vsel %vm227, %v199, 0.0
      %241 = vadd.xlane.f32.xlu0 %v240
      %v242 = vpop.xlane.xlu0 %241
      %v243 = vsel %vm227, %v200, 0.0
      %244 = vadd.xlane.f32.xlu0 %v243
      %v245 = vpop.xlane.xlu0 %244
      %v246 = vsel %vm227, %v201, 0.0
      %247 = vadd.xlane.f32.xlu0 %v246
      %v248 = vpop.xlane.xlu0 %247
      %v249 = vsel %vm227, %v202, 0.0
      %250 = vadd.xlane.f32.xlu0 %v249
      %v251 = vpop.xlane.xlu0 %250
      %v252 = vsel %vm227, %v203, 0.0
      %253 = vadd.xlane.f32.xlu0 %v252
      %v254 = vpop.xlane.xlu0 %253
      %v255 = vsel %vm227, %v204, 0.0
      %256 = vadd.xlane.f32.xlu0 %v255
      %v257 = vpop.xlane.xlu0 %256
      %v258 = vsel %vm227, %v205, 0.0
      %259 = vadd.xlane.f32.xlu0 %v258
      %v260 = vpop.xlane.xlu0 %259
      %v261 = vsel %vm227, %v206, 0.0
      %262 = vadd.xlane.f32.xlu0 %v261
      %v263 = vpop.xlane.xlu0 %262
      %v264 = vsel %vm227, %v207, 0.0
      %265 = vadd.xlane.f32.xlu0 %v264
      %v266 = vpop.xlane.xlu0 %265
      %v267 = vsel %vm227, %v208, 0.0
      %268 = vadd.xlane.f32.xlu0 %v267
      %v269 = vpop.xlane.xlu0 %268
      %v270 = vsel %vm227, %v209, 0.0
      %271 = vadd.xlane.f32.xlu0 %v270
      %v272 = vpop.xlane.xlu0 %271
      %v273 = vsel %vm227, %v210, 0.0
      %274 = vadd.xlane.f32.xlu0 %v273
      %v275 = vpop.xlane.xlu0 %274
      %v276 = vsel %vm227, %v211, 0.0
      %277 = vadd.xlane.f32.xlu0 %v276
      %v278 = vpop.xlane.xlu0 %277
      %v279 = vsel %vm227, %v212, 0.0
      %280 = vadd.xlane.f32.xlu0 %v279
      %v281 = vpop.xlane.xlu0 %280
      %v282 = vsel %vm227, %v213, 0.0
      %283 = vadd.xlane.f32.xlu0 %v282
      %v284 = vpop.xlane.xlu0 %283
      %v285 = vsel %vm227, %v214, 0.0
      %286 = vadd.xlane.f32.xlu0 %v285
      %v287 = vpop.xlane.xlu0 %286
      %v288 = vsel %vm227, %v215, 0.0
      %289 = vadd.xlane.f32.xlu0 %v288
      %v290 = vpop.xlane.xlu0 %289
      %v291 = vsel %vm227, %v216, 0.0
      %292 = vadd.xlane.f32.xlu0 %v291
      %v293 = vpop.xlane.xlu0 %292
      %v294 = vsel %vm227, %v217, 0.0
      %295 = vadd.xlane.f32.xlu0 %v294
      %v296 = vpop.xlane.xlu0 %295
      %v297 = vsel %vm227, %v218, 0.0
      %298 = vadd.xlane.f32.xlu0 %v297
      %v299 = vpop.xlane.xlu0 %298
      %v300 = vsel %vm227, %v219, 0.0
      %301 = vadd.xlane.f32.xlu0 %v300
      %v302 = vpop.xlane.xlu0 %301
      %v303 = vsel %vm227, %v220, 0.0
      %304 = vadd.xlane.f32.xlu0 %v303
      %v305 = vpop.xlane.xlu0 %304
      %v306 = vsel %vm227, %v221, 0.0
      %307 = vadd.xlane.f32.xlu0 %v306
      %v308 = vpop.xlane.xlu0 %307
      %v309 = vsel %vm227, %v222, 0.0
      %310 = vadd.xlane.f32.xlu0 %v309
      %v311 = vpop.xlane.xlu0 %310
      %v312 = vsel %vm227, %v223, 0.0
      %313 = vadd.xlane.f32.xlu0 %v312
      %v314 = vpop.xlane.xlu0 %313
      %v315 = vsel %vm227, %v224, 0.0
      %316 = vadd.xlane.f32.xlu0 %v315
      %v317 = vpop.xlane.xlu0 %316
      %v318 = vsel %vm227, %v225, 0.0
      %319 = vadd.xlane.f32.xlu0 %v318
      %v320 = vpop.xlane.xlu0 %319
      %v321 = vsel %vm227, %v226, 0.0
      %322 = vadd.xlane.f32.xlu0 %v321
      %v323 = vpop.xlane.xlu0 %322
      %v324 = vrsqrt.pop %v230
      %v325 = vmul.f32 %v230, %v324
      %vm326 = vcmp.eq.f32.partialorder %v230, inf
      %v327 = vsel %vm326, %v230, %v325
      %vm328 = vcmp.eq.f32.partialorder %v230, 0.0
      %v329 = vand.u32 %v230, 2147483648
      %v330 = vsel %vm328, %v329, %v327
      %v331 = vrsqrt.pop %v233
      %v332 = vmul.f32 %v233, %v331
      %vm333 = vcmp.eq.f32.partialorder %v233, inf
      %v334 = vsel %vm333, %v233, %v332
      %vm335 = vcmp.eq.f32.partialorder %v233, 0.0
      %v336 = vand.u32 %v233, 2147483648
      %v337 = vsel %vm335, %v336, %v334
      %v338 = vrsqrt.pop %v236
      %v339 = vmul.f32 %v236, %v338
      %vm340 = vcmp.eq.f32.partialorder %v236, inf
      %v341 = vsel %vm340, %v236, %v339
      %vm342 = vcmp.eq.f32.partialorder %v236, 0.0
      %v343 = vand.u32 %v236, 2147483648
      %v344 = vsel %vm342, %v343, %v341
      %v345 = vrsqrt.pop %v239
      %v346 = vmul.f32 %v239, %v345
      %vm347 = vcmp.eq.f32.partialorder %v239, inf
      %v348 = vsel %vm347, %v239, %v346
      %vm349 = vcmp.eq.f32.partialorder %v239, 0.0
      %v350 = vand.u32 %v239, 2147483648
      %v351 = vsel %vm349, %v350, %v348
      %v352 = vrsqrt.pop %v242
      %v353 = vmul.f32 %v242, %v352
      %vm354 = vcmp.eq.f32.partialorder %v242, inf
      %v355 = vsel %vm354, %v242, %v353
      %vm356 = vcmp.eq.f32.partialorder %v242, 0.0
      %v357 = vand.u32 %v242, 2147483648
      %v358 = vsel %vm356, %v357, %v355
      %v359 = vrsqrt.pop %v245
      %v360 = vmul.f32 %v245, %v359
      %vm361 = vcmp.eq.f32.partialorder %v245, inf
      %v362 = vsel %vm361, %v245, %v360
      %vm363 = vcmp.eq.f32.partialorder %v245, 0.0
      %v364 = vand.u32 %v245, 2147483648
      %v365 = vsel %vm363, %v364, %v362
      %v366 = vrsqrt.pop %v248
      %v367 = vmul.f32 %v248, %v366
      %vm368 = vcmp.eq.f32.partialorder %v248, inf
      %v369 = vsel %vm368, %v248, %v367
      %vm370 = vcmp.eq.f32.partialorder %v248, 0.0
      %v371 = vand.u32 %v248, 2147483648
      %v372 = vsel %vm370, %v371, %v369
      %v373 = vrsqrt.pop %v251
      %v374 = vmul.f32 %v251, %v373
      %vm375 = vcmp.eq.f32.partialorder %v251, inf
      %v376 = vsel %vm375, %v251, %v374
      %vm377 = vcmp.eq.f32.partialorder %v251, 0.0
      %v378 = vand.u32 %v251, 2147483648
      %v379 = vsel %vm377, %v378, %v376
      %v380 = vrsqrt.pop %v254
      %v381 = vmul.f32 %v254, %v380
      %vm382 = vcmp.eq.f32.partialorder %v254, inf
      %v383 = vsel %vm382, %v254, %v381
      %vm384 = vcmp.eq.f32.partialorder %v254, 0.0
      %v385 = vand.u32 %v254, 2147483648
      %v386 = vsel %vm384, %v385, %v383
      %v387 = vrsqrt.pop %v257
      %v388 = vmul.f32 %v257, %v387
      %vm389 = vcmp.eq.f32.partialorder %v257, inf
      %v390 = vsel %vm389, %v257, %v388
      %vm391 = vcmp.eq.f32.partialorder %v257, 0.0
      %v392 = vand.u32 %v257, 2147483648
      %v393 = vsel %vm391, %v392, %v390
      %v394 = vrsqrt.pop %v260
      %v395 = vmul.f32 %v260, %v394
      %vm396 = vcmp.eq.f32.partialorder %v260, inf
      %v397 = vsel %vm396, %v260, %v395
      %vm398 = vcmp.eq.f32.partialorder %v260, 0.0
      %v399 = vand.u32 %v260, 2147483648
      %v400 = vsel %vm398, %v399, %v397
      %v401 = vrsqrt.pop %v263
      %v402 = vmul.f32 %v263, %v401
      %vm403 = vcmp.eq.f32.partialorder %v263, inf
      %v404 = vsel %vm403, %v263, %v402
      %vm405 = vcmp.eq.f32.partialorder %v263, 0.0
      %v406 = vand.u32 %v263, 2147483648
      %v407 = vsel %vm405, %v406, %v404
      %v408 = vrsqrt.pop %v266
      %v409 = vmul.f32 %v266, %v408
      %vm410 = vcmp.eq.f32.partialorder %v266, inf
      %v411 = vsel %vm410, %v266, %v409
      %vm412 = vcmp.eq.f32.partialorder %v266, 0.0
      %v413 = vand.u32 %v266, 2147483648
      %v414 = vsel %vm412, %v413, %v411
      %v415 = vrsqrt.pop %v269
      %v416 = vmul.f32 %v269, %v415
      %vm417 = vcmp.eq.f32.partialorder %v269, inf
      %v418 = vsel %vm417, %v269, %v416
      %vm419 = vcmp.eq.f32.partialorder %v269, 0.0
      %v420 = vand.u32 %v269, 2147483648
      %v421 = vsel %vm419, %v420, %v418
      %v422 = vrsqrt.pop %v272
      %v423 = vmul.f32 %v272, %v422
      %vm424 = vcmp.eq.f32.partialorder %v272, inf
      %v425 = vsel %vm424, %v272, %v423
      %vm426 = vcmp.eq.f32.partialorder %v272, 0.0
      %v427 = vand.u32 %v272, 2147483648
      %v428 = vsel %vm426, %v427, %v425
      %v429 = vrsqrt.pop %v275
      %v430 = vmul.f32 %v275, %v429
      %vm431 = vcmp.eq.f32.partialorder %v275, inf
      %v432 = vsel %vm431, %v275, %v430
      %vm433 = vcmp.eq.f32.partialorder %v275, 0.0
      %v434 = vand.u32 %v275, 2147483648
      %v435 = vsel %vm433, %v434, %v432
      %v436 = vrsqrt.pop %v278
      %v437 = vmul.f32 %v278, %v436
      %vm438 = vcmp.eq.f32.partialorder %v278, inf
      %v439 = vsel %vm438, %v278, %v437
      %vm440 = vcmp.eq.f32.partialorder %v278, 0.0
      %v441 = vand.u32 %v278, 2147483648
      %v442 = vsel %vm440, %v441, %v439
      %v443 = vrsqrt.pop %v281
      %v444 = vmul.f32 %v281, %v443
      %vm445 = vcmp.eq.f32.partialorder %v281, inf
      %v446 = vsel %vm445, %v281, %v444
      %vm447 = vcmp.eq.f32.partialorder %v281, 0.0
      %v448 = vand.u32 %v281, 2147483648
      %v449 = vsel %vm447, %v448, %v446
      %v450 = vrsqrt.pop %v284
      %v451 = vmul.f32 %v284, %v450
      %vm452 = vcmp.eq.f32.partialorder %v284, inf
      %v453 = vsel %vm452, %v284, %v451
      %vm454 = vcmp.eq.f32.partialorder %v284, 0.0
      %v455 = vand.u32 %v284, 2147483648
      %v456 = vsel %vm454, %v455, %v453
      %v457 = vrsqrt.pop %v287
      %v458 = vmul.f32 %v287, %v457
      %vm459 = vcmp.eq.f32.partialorder %v287, inf
      %v460 = vsel %vm459, %v287, %v458
      %vm461 = vcmp.eq.f32.partialorder %v287, 0.0
      %v462 = vand.u32 %v287, 2147483648
      %v463 = vsel %vm461, %v462, %v460
      %v464 = vrsqrt.pop %v290
      %v465 = vmul.f32 %v290, %v464
      %vm466 = vcmp.eq.f32.partialorder %v290, inf
      %v467 = vsel %vm466, %v290, %v465
      %vm468 = vcmp.eq.f32.partialorder %v290, 0.0
      %v469 = vand.u32 %v290, 2147483648
      %v470 = vsel %vm468, %v469, %v467
      %v471 = vrsqrt.pop %v293
      %v472 = vmul.f32 %v293, %v471
      %vm473 = vcmp.eq.f32.partialorder %v293, inf
      %v474 = vsel %vm473, %v293, %v472
      %vm475 = vcmp.eq.f32.partialorder %v293, 0.0
      %v476 = vand.u32 %v293, 2147483648
      %v477 = vsel %vm475, %v476, %v474
      %v478 = vrsqrt.pop %v296
      %v479 = vmul.f32 %v296, %v478
      %vm480 = vcmp.eq.f32.partialorder %v296, inf
      %v481 = vsel %vm480, %v296, %v479
      %vm482 = vcmp.eq.f32.partialorder %v296, 0.0
      %v483 = vand.u32 %v296, 2147483648
      %v484 = vsel %vm482, %v483, %v481
      %v485 = vrsqrt.pop %v299
      %v486 = vmul.f32 %v299, %v485
      %vm487 = vcmp.eq.f32.partialorder %v299, inf
      %v488 = vsel %vm487, %v299, %v486
      %vm489 = vcmp.eq.f32.partialorder %v299, 0.0
      %v490 = vand.u32 %v299, 2147483648
      %v491 = vsel %vm489, %v490, %v488
      %v492 = vrsqrt.pop %v302
      %v493 = vmul.f32 %v302, %v492
      %vm494 = vcmp.eq.f32.partialorder %v302, inf
      %v495 = vsel %vm494, %v302, %v493
      %vm496 = vcmp.eq.f32.partialorder %v302, 0.0
      %v497 = vand.u32 %v302, 2147483648
      %v498 = vsel %vm496, %v497, %v495
      %v499 = vrsqrt.pop %v305
      %v500 = vmul.f32 %v305, %v499
      %vm501 = vcmp.eq.f32.partialorder %v305, inf
      %v502 = vsel %vm501, %v305, %v500
      %vm503 = vcmp.eq.f32.partialorder %v305, 0.0
      %v504 = vand.u32 %v305, 2147483648
      %v505 = vsel %vm503, %v504, %v502
      %v506 = vrsqrt.pop %v308
      %v507 = vmul.f32 %v308, %v506
      %vm508 = vcmp.eq.f32.partialorder %v308, inf
      %v509 = vsel %vm508, %v308, %v507
      %vm510 = vcmp.eq.f32.partialorder %v308, 0.0
      %v511 = vand.u32 %v308, 2147483648
      %v512 = vsel %vm510, %v511, %v509
      %v513 = vrsqrt.pop %v311
      %v514 = vmul.f32 %v311, %v513
      %vm515 = vcmp.eq.f32.partialorder %v311, inf
      %v516 = vsel %vm515, %v311, %v514
      %vm517 = vcmp.eq.f32.partialorder %v311, 0.0
      %v518 = vand.u32 %v311, 2147483648
      %v519 = vsel %vm517, %v518, %v516
      %v520 = vrsqrt.pop %v314
      %v521 = vmul.f32 %v314, %v520
      %vm522 = vcmp.eq.f32.partialorder %v314, inf
      %v523 = vsel %vm522, %v314, %v521
      %vm524 = vcmp.eq.f32.partialorder %v314, 0.0
      %v525 = vand.u32 %v314, 2147483648
      %v526 = vsel %vm524, %v525, %v523
      %v527 = vrsqrt.pop %v317
      %v528 = vmul.f32 %v317, %v527
      %vm529 = vcmp.eq.f32.partialorder %v317, inf
      %v530 = vsel %vm529, %v317, %v528
      %vm531 = vcmp.eq.f32.partialorder %v317, 0.0
      %v532 = vand.u32 %v317, 2147483648
      %v533 = vsel %vm531, %v532, %v530
      %v534 = vrsqrt.pop %v320
      %v535 = vmul.f32 %v320, %v534
      %vm536 = vcmp.eq.f32.partialorder %v320, inf
      %v537 = vsel %vm536, %v320, %v535
      %vm538 = vcmp.eq.f32.partialorder %v320, 0.0
      %v539 = vand.u32 %v320, 2147483648
      %v540 = vsel %vm538, %v539, %v537
      %v541 = vrsqrt.pop %v323
      %v542 = vmul.f32 %v323, %v541
      %vm543 = vcmp.eq.f32.partialorder %v323, inf
      %v544 = vsel %vm543, %v323, %v542
      %vm545 = vcmp.eq.f32.partialorder %v323, 0.0
      %v546 = vand.u32 %v323, 2147483648
      %v547 = vsel %vm545, %v546, %v544
      %v548 = vmax.f32 %v330, 1e-12
      %v549 = vmax.f32 %v337, 1e-12
      %v550 = vmax.f32 %v344, 1e-12
      %v551 = vmax.f32 %v351, 1e-12
      %v552 = vmax.f32 %v358, 1e-12
      %v553 = vmax.f32 %v365, 1e-12
      %v554 = vmax.f32 %v372, 1e-12
      %v555 = vmax.f32 %v379, 1e-12
      %v556 = vmax.f32 %v386, 1e-12
      %v557 = vmax.f32 %v393, 1e-12
      %v558 = vmax.f32 %v400, 1e-12
      %v559 = vmax.f32 %v407, 1e-12
      %v560 = vmax.f32 %v414, 1e-12
      %v561 = vmax.f32 %v421, 1e-12
      %v562 = vmax.f32 %v428, 1e-12
      %v563 = vmax.f32 %v435, 1e-12
      %v564 = vmax.f32 %v442, 1e-12
      %v565 = vmax.f32 %v449, 1e-12
      %v566 = vmax.f32 %v456, 1e-12
      %v567 = vmax.f32 %v463, 1e-12
      %v568 = vmax.f32 %v470, 1e-12
      %v569 = vmax.f32 %v477, 1e-12
      %v570 = vmax.f32 %v484, 1e-12
      %v571 = vmax.f32 %v491, 1e-12
      %v572 = vmax.f32 %v498, 1e-12
      %v573 = vmax.f32 %v505, 1e-12
      %v574 = vmax.f32 %v512, 1e-12
      %v575 = vmax.f32 %v519, 1e-12
      %v576 = vmax.f32 %v526, 1e-12
      %v577 = vmax.f32 %v533, 1e-12
      %v578 = vmax.f32 %v540, 1e-12
      %v579 = vmax.f32 %v547, 1e-12
      %v580 = vrcp.pop %v548
      %v581 = vmul.f32 %v162, %v580
      %v582 = vrcp.pop %v549
      %v583 = vmul.f32 %v163, %v582
      %v584 = vrcp.pop %v550
      %v585 = vmul.f32 %v164, %v584
      %v586 = vrcp.pop %v551
      %v587 = vmul.f32 %v165, %v586
      %v588 = vrcp.pop %v552
      %v589 = vmul.f32 %v166, %v588
      %v590 = vrcp.pop %v553
      %v591 = vmul.f32 %v167, %v590
      %v592 = vrcp.pop %v554
      %v593 = vmul.f32 %v168, %v592
      %v594 = vrcp.pop %v555
      %v595 = vmul.f32 %v169, %v594
      %v596 = vrcp.pop %v556
      %v597 = vmul.f32 %v170, %v596
      %v598 = vrcp.pop %v557
      %v599 = vmul.f32 %v171, %v598
      %v600 = vrcp.pop %v558
      %v601 = vmul.f32 %v172, %v600
      %v602 = vrcp.pop %v559
      %v603 = vmul.f32 %v173, %v602
      %v604 = vrcp.pop %v560
      %v605 = vmul.f32 %v174, %v604
      %v606 = vrcp.pop %v561
      %v607 = vmul.f32 %v175, %v606
      %v608 = vrcp.pop %v562
      %v609 = vmul.f32 %v176, %v608
      %v610 = vrcp.pop %v563
      %v611 = vmul.f32 %v177, %v610
      %v612 = vrcp.pop %v564
      %v613 = vmul.f32 %v178, %v612
      %v614 = vrcp.pop %v565
      %v615 = vmul.f32 %v179, %v614
      %v616 = vrcp.pop %v566
      %v617 = vmul.f32 %v180, %v616
      %v618 = vrcp.pop %v567
      %v619 = vmul.f32 %v181, %v618
      %v620 = vrcp.pop %v568
      %v621 = vmul.f32 %v182, %v620
      %v622 = vrcp.pop %v569
      %v623 = vmul.f32 %v183, %v622
      %v624 = vrcp.pop %v570
      %v625 = vmul.f32 %v184, %v624
      %v626 = vrcp.pop %v571
      %v627 = vmul.f32 %v185, %v626
      %v628 = vrcp.pop %v572
      %v629 = vmul.f32 %v186, %v628
      %v630 = vrcp.pop %v573
      %v631 = vmul.f32 %v187, %v630
      %v632 = vrcp.pop %v574
      %v633 = vmul.f32 %v188, %v632
      %v634 = vrcp.pop %v575
      %v635 = vmul.f32 %v189, %v634
      %v636 = vrcp.pop %v576
      %v637 = vmul.f32 %v190, %v636
      %v638 = vrcp.pop %v577
      %v639 = vmul.f32 %v191, %v638
      %v640 = vrcp.pop %v578
      %v641 = vmul.f32 %v192, %v640
      %v642 = vrcp.pop %v579
      %v643 = vmul.f32 %v193, %v642
      %v644 = vmul.f32 %v194, %v194
      %v646 = vrot.slane %v644, 1
      %v648 = vadd.f32 %v644, %v646
      %v649 = vrot.slane %v644, 2
      %v651 = vadd.f32 %v648, %v649
      %v652 = vrot.slane %v644, 3
      %v654 = vadd.f32 %v651, %v652
      %v655 = vrsqrt.pop %v654
      %v656 = vmul.f32 %v654, %v655
      %vm657 = vcmp.eq.f32.partialorder %v654, inf
      %v658 = vsel %vm657, %v654, %v656
      %vm659 = vcmp.eq.f32.partialorder %v654, 0.0
      %v660 = vand.u32 %v654, 2147483648
      %v661 = vsel %vm659, %v660, %v658
      %v662 = vmax.f32 %v661, 1e-12
      %v663 = vlaneseq
      %v664 = vshrl.u32 %v663, 7
      %v665 = vsub.s32 0, %v664
      %v666 = vrot.slane %v662, %v665
      %v667 = vrcp.pop %v666
      %v668 = vmul.f32 %v194, %v667
      %v669 = vpack.c.bf16 %v583, %v581
      %v670 = vpack.c.bf16 %v587, %v585
      %v671 = vpack.c.bf16 %v591, %v589
      %v672 = vpack.c.bf16 %v595, %v593
      %v673 = vpack.c.bf16 %v599, %v597
      %v674 = vpack.c.bf16 %v603, %v601
      %v675 = vpack.c.bf16 %v607, %v605
      %v676 = vpack.c.bf16 %v611, %v609
      %v677 = vpack.c.bf16 %v615, %v613
      %v678 = vpack.c.bf16 %v619, %v617
      %v679 = vpack.c.bf16 %v623, %v621
      %v680 = vpack.c.bf16 %v627, %v625
      %v681 = vpack.c.bf16 %v631, %v629
      %v682 = vpack.c.bf16 %v635, %v633
      %v683 = vpack.c.bf16 %v639, %v637
      %v684 = vpack.c.bf16 %v643, %v641
      %v685 = vpack.c.bf16 %v668, %v668
      %v687 = vsel %vm227, %v669, 0
      %v690 = vsel %vm227, %v670, 0
      %v693 = vsel %vm227, %v671, 0
      %v696 = vsel %vm227, %v672, 0
      %v699 = vsel %vm227, %v673, 0
      %v702 = vsel %vm227, %v674, 0
      %v705 = vsel %vm227, %v675, 0
      %v708 = vsel %vm227, %v676, 0
      %v711 = vsel %vm227, %v677, 0
      %v714 = vsel %vm227, %v678, 0
      %v717 = vsel %vm227, %v679, 0
      %v720 = vsel %vm227, %v680, 0
      %v723 = vsel %vm227, %v681, 0
      %v726 = vsel %vm227, %v682, 0
      %v729 = vsel %vm227, %v683, 0
      %v732 = vsel %vm227, %v684, 0
      %vm734 = vcmask 1041408
      %v736 = vsel %vm734, %v685, 0
      %738 = vmatprep.subr.bf16.mxu0 0
      %739 = vmatpush1.bf16.msra.mxu0 %v736
      %740 = vmatprep.subr.bf16.mxu0 0
      %741 = vmatpush1.bf16.msra.mxu0 0
      %742 = vmatprep.subr.bf16.mxu0 0
      %743 = vmatpush1.bf16.msra.mxu0 0
      %744 = vmatprep.subr.bf16.mxu0 0
      %745 = vmatpush1.bf16.msra.mxu0 0
      %746 = vmatprep.subr.bf16.mxu0 0
      %747 = vmatpush1.bf16.msra.mxu0 0
      %748 = vmatprep.subr.bf16.mxu0 0
      %749 = vmatpush1.bf16.msra.mxu0 0
      %750 = vmatprep.subr.bf16.mxu0 0
      %751 = vmatpush1.bf16.msra.mxu0 0
      %752 = vmatprep.subr.bf16.mxu0 0
      %753 = vmatpush1.bf16.msra.mxu0 0
      %754 = vmatprep.subr.bf16.mxu0 0
      %755 = vmatpush1.bf16.msra.mxu0 0
      %756 = vmatprep.subr.bf16.mxu0 0
      %757 = vmatpush1.bf16.msra.mxu0 0
      %758 = vmatprep.subr.bf16.mxu0 0
      %759 = vmatpush1.bf16.msra.mxu0 0
      %760 = vmatprep.subr.bf16.mxu0 0
      %761 = vmatpush1.bf16.msra.mxu0 0
      %762 = vmatprep.subr.bf16.mxu0 0
      %763 = vmatpush1.bf16.msra.mxu0 0
      %764 = vmatprep.subr.bf16.mxu0 0
      %765 = vmatpush1.bf16.msra.mxu0 0
      %766 = vmatprep.subr.bf16.mxu0 0
      %767 = vmatpush1.bf16.msra.mxu0 0
      %768 = vmatprep.subr.bf16.mxu0 0
      %769 = vmatpush1.bf16.msra.mxu0 0
      %770 = vmatprep.mubr.bf16.mxu0 0
      %771 = vmatmul.mubr.bf16.gmra.mrb[0].mxu0 %v687
      %v772 = vpop.f32.mrb[0].mxu0
      %v773 = vadd.f32 0.0, %v772
      %v774 = vpop.f32.mrb[0].mxu0
      %v775 = vpop.f32.mrb[0].mxu0
      %v776 = vadd.f32 0.0, %v775
      %v777 = vpop.f32.mrb[0].mxu0
      %778 = vmatprep.mubr.bf16.mxu0 0
      %779 = vmatmul.mubr.bf16.gmra.mrb[0].mxu0 %v690
      %v780 = vpop.f32.mrb[0].mxu0
      %v781 = vadd.f32 0.0, %v780
      %v782 = vpop.f32.mrb[0].mxu0
      %v783 = vpop.f32.mrb[0].mxu0
      %v784 = vadd.f32 0.0, %v783
      %v785 = vpop.f32.mrb[0].mxu0
      %786 = vmatprep.mubr.bf16.mxu0 0
      %787 = vmatmul.mubr.bf16.gmra.mrb[0].mxu0 %v693
      %v788 = vpop.f32.mrb[0].mxu0
      %v789 = vadd.f32 0.0, %v788
      %v790 = vpop.f32.mrb[0].mxu0
      %v791 = vpop.f32.mrb[0].mxu0
      %v792 = vadd.f32 0.0, %v791
      %v793 = vpop.f32.mrb[0].mxu0
      %794 = vmatprep.mubr.bf16.mxu0 0
      %795 = vmatmul.mubr.bf16.gmra.mrb[0].mxu0 %v696
      %v796 = vpop.f32.mrb[0].mxu0
      %v797 = vadd.f32 0.0, %v796
      %v798 = vpop.f32.mrb[0].mxu0
      %v799 = vpop.f32.mrb[0].mxu0
      %v800 = vadd.f32 0.0, %v799
      %v801 = vpop.f32.mrb[0].mxu0
      %802 = vmatprep.mubr.bf16.mxu0 0
      %803 = vmatmul.mubr.bf16.gmra.mrb[0].mxu0 %v699
      %v804 = vpop.f32.mrb[0].mxu0
      %v805 = vadd.f32 0.0, %v804
      %v806 = vpop.f32.mrb[0].mxu0
      %v807 = vpop.f32.mrb[0].mxu0
      %v808 = vadd.f32 0.0, %v807
      %v809 = vpop.f32.mrb[0].mxu0
      %810 = vmatprep.mubr.bf16.mxu0 0
      %811 = vmatmul.mubr.bf16.gmra.mrb[0].mxu0 %v702
      %v812 = vpop.f32.mrb[0].mxu0
      %v813 = vadd.f32 0.0, %v812
      %v814 = vpop.f32.mrb[0].mxu0
      %v815 = vpop.f32.mrb[0].mxu0
      %v816 = vadd.f32 0.0, %v815
      %v817 = vpop.f32.mrb[0].mxu0
      %818 = vmatprep.mubr.bf16.mxu0 0
      %819 = vmatmul.mubr.bf16.gmra.mrb[0].mxu0 %v705
      %v820 = vpop.f32.mrb[0].mxu0
      %v821 = vadd.f32 0.0, %v820
      %v822 = vpop.f32.mrb[0].mxu0
      %v823 = vpop.f32.mrb[0].mxu0
      %v824 = vadd.f32 0.0, %v823
      %v825 = vpop.f32.mrb[0].mxu0
      %826 = vmatprep.mubr.bf16.mxu0 0
      %827 = vmatmul.mubr.bf16.gmra.mrb[0].mxu0 %v708
      %v828 = vpop.f32.mrb[0].mxu0
      %v829 = vadd.f32 0.0, %v828
      %v830 = vpop.f32.mrb[0].mxu0
      %v831 = vpop.f32.mrb[0].mxu0
      %v832 = vadd.f32 0.0, %v831
      %v833 = vpop.f32.mrb[0].mxu0
      %834 = vmatprep.mubr.bf16.mxu0 0
      %835 = vmatmul.mubr.bf16.gmra.mrb[0].mxu0 %v711
      %v836 = vpop.f32.mrb[0].mxu0
      %v837 = vadd.f32 0.0, %v836
      %v838 = vpop.f32.mrb[0].mxu0
      %v839 = vpop.f32.mrb[0].mxu0
      %v840 = vadd.f32 0.0, %v839
      %v841 = vpop.f32.mrb[0].mxu0
      %842 = vmatprep.mubr.bf16.mxu0 0
      %843 = vmatmul.mubr.bf16.gmra.mrb[0].mxu0 %v714
      %v844 = vpop.f32.mrb[0].mxu0
      %v845 = vadd.f32 0.0, %v844
      %v846 = vpop.f32.mrb[0].mxu0
      %v847 = vpop.f32.mrb[0].mxu0
      %v848 = vadd.f32 0.0, %v847
      %v849 = vpop.f32.mrb[0].mxu0
      %850 = vmatprep.mubr.bf16.mxu0 0
      %851 = vmatmul.mubr.bf16.gmra.mrb[0].mxu0 %v717
      %v852 = vpop.f32.mrb[0].mxu0
      %v853 = vadd.f32 0.0, %v852
      %v854 = vpop.f32.mrb[0].mxu0
      %v855 = vpop.f32.mrb[0].mxu0
      %v856 = vadd.f32 0.0, %v855
      %v857 = vpop.f32.mrb[0].mxu0
      %858 = vmatprep.mubr.bf16.mxu0 0
      %859 = vmatmul.mubr.bf16.gmra.mrb[0].mxu0 %v720
      %v860 = vpop.f32.mrb[0].mxu0
      %v861 = vadd.f32 0.0, %v860
      %v862 = vpop.f32.mrb[0].mxu0
      %v863 = vpop.f32.mrb[0].mxu0
      %v864 = vadd.f32 0.0, %v863
      %v865 = vpop.f32.mrb[0].mxu0
      %866 = vmatprep.mubr.bf16.mxu0 0
      %867 = vmatmul.mubr.bf16.gmra.mrb[0].mxu0 %v723
      %v868 = vpop.f32.mrb[0].mxu0
      %v869 = vadd.f32 0.0, %v868
      %v870 = vpop.f32.mrb[0].mxu0
      %v871 = vpop.f32.mrb[0].mxu0
      %v872 = vadd.f32 0.0, %v871
      %v873 = vpop.f32.mrb[0].mxu0
      %874 = vmatprep.mubr.bf16.mxu0 0
      %875 = vmatmul.mubr.bf16.gmra.mrb[0].mxu0 %v726
      %v876 = vpop.f32.mrb[0].mxu0
      %v877 = vadd.f32 0.0, %v876
      %v878 = vpop.f32.mrb[0].mxu0
      %v879 = vpop.f32.mrb[0].mxu0
      %v880 = vadd.f32 0.0, %v879
      %v881 = vpop.f32.mrb[0].mxu0
      %882 = vmatprep.mubr.bf16.mxu0 0
      %883 = vmatmul.mubr.bf16.gmra.mrb[0].mxu0 %v729
      %v884 = vpop.f32.mrb[0].mxu0
      %v885 = vadd.f32 0.0, %v884
      %v886 = vpop.f32.mrb[0].mxu0
      %v887 = vpop.f32.mrb[0].mxu0
      %v888 = vadd.f32 0.0, %v887
      %v889 = vpop.f32.mrb[0].mxu0
      %890 = vmatprep.mubr.bf16.mxu0 0
      %891 = vmatmul.mubr.bf16.gmra.mrb[0].mxu0 %v732
      %v892 = vpop.f32.mrb[0].mxu0
      %v893 = vadd.f32 0.0, %v892
      %v894 = vpop.f32.mrb[0].mxu0
      %v895 = vpop.f32.mrb[0].mxu0
      %v896 = vadd.f32 0.0, %v895
      %v897 = vpop.f32.mrb[0].mxu0
      %898 = vdwg.mxu0
      %vm899 = vcmask 523264
      %900 = vst.msk [vmem:[%s160] sm:$0xff] %vm899, %v773
      %901 = vst.msk [vmem:[%s160 + $0x8] sm:$0xff] %vm899, %v776
      %902 = vst.msk [vmem:[%s160 + $0x10] sm:$0xff] %vm899, %v781
      %903 = vst.msk [vmem:[%s160 + $0x18] sm:$0xff] %vm899, %v784
      %904 = vst.msk [vmem:[%s160 + $0x20] sm:$0xff] %vm899, %v789
      %905 = vst.msk [vmem:[%s160 + $0x28] sm:$0xff] %vm899, %v792
      %906 = vst.msk [vmem:[%s160 + $0x30] sm:$0xff] %vm899, %v797
      %907 = vst.msk [vmem:[%s160 + $0x38] sm:$0xff] %vm899, %v800
      %908 = vst.msk [vmem:[%s160 + $0x40] sm:$0xff] %vm899, %v805
      %909 = vst.msk [vmem:[%s160 + $0x48] sm:$0xff] %vm899, %v808
      %910 = vst.msk [vmem:[%s160 + $0x50] sm:$0xff] %vm899, %v813
      %911 = vst.msk [vmem:[%s160 + $0x58] sm:$0xff] %vm899, %v816
      %912 = vst.msk [vmem:[%s160 + $0x60] sm:$0xff] %vm899, %v821
      %913 = vst.msk [vmem:[%s160 + $0x68] sm:$0xff] %vm899, %v824
      %914 = vst.msk [vmem:[%s160 + $0x70] sm:$0xff] %vm899, %v829
      %915 = vst.msk [vmem:[%s160 + $0x78] sm:$0xff] %vm899, %v832
      %916 = vst.msk [vmem:[%s160 + $0x80] sm:$0xff] %vm899, %v837
      %917 = vst.msk [vmem:[%s160 + $0x88] sm:$0xff] %vm899, %v840
      %918 = vst.msk [vmem:[%s160 + $0x90] sm:$0xff] %vm899, %v845
      %919 = vst.msk [vmem:[%s160 + $0x98] sm:$0xff] %vm899, %v848
      %920 = vst.msk [vmem:[%s160 + $0xa0] sm:$0xff] %vm899, %v853
      %921 = vst.msk [vmem:[%s160 + $0xa8] sm:$0xff] %vm899, %v856
      %922 = vst.msk [vmem:[%s160 + $0xb0] sm:$0xff] %vm899, %v861
      %923 = vst.msk [vmem:[%s160 + $0xb8] sm:$0xff] %vm899, %v864
      %924 = vst.msk [vmem:[%s160 + $0xc0] sm:$0xff] %vm899, %v869
      %925 = vst.msk [vmem:[%s160 + $0xc8] sm:$0xff] %vm899, %v872
      %926 = vst.msk [vmem:[%s160 + $0xd0] sm:$0xff] %vm899, %v877
      %927 = vst.msk [vmem:[%s160 + $0xd8] sm:$0xff] %vm899, %v880
      %928 = vst.msk [vmem:[%s160 + $0xe0] sm:$0xff] %vm899, %v885
      %929 = vst.msk [vmem:[%s160 + $0xe8] sm:$0xff] %vm899, %v888
      %930 = vst.msk [vmem:[%s160 + $0xf0] sm:$0xff] %vm899, %v893
      %931 = vst.msk [vmem:[%s160 + $0xf8] sm:$0xff] %vm899, %v896
      %p932 = scmp.lt.s32.totalorder %s13, 1
      %s933 = scalar_select %p932, %s13, 1
      %s934 = smul.addr %s933, 32
      %s935 = smul.addr %s934, 8
      %s936 = scalar_lea.vmem %s2, %s935
      // Predicated region
      $region29: #{align_grapher_forward.6} parent=27 // pred_check
        %p937 = pneg %p83
      $region30: #{align_grapher_forward.6} parent=27 // pred_check_branch
        %939 = sbr.rel (%p937) target = $region32
      $region31: #{align_grapher_forward.6} parent=27 // pred_region
        _
      $region32: #{align_grapher_forward.6} parent=27 // pred_fallthru
        _
    $region28: #{align_grapher_forward.6} parent=5 // pred_fallthru
      _
    %p940 = scmp.le.s32.totalorder 2, %s8
    // Predicated region
    $region33: #{align_grapher_forward.6} parent=5 // pred_check
      %p941 = pneg %p940
    $region34: #{align_grapher_forward.6} parent=5 // pred_check_branch
      %943 = sbr.rel (%p941) target = $region36
    $region35: #{align_grapher_forward.6} parent=5 // pred_region
      %s944 = ssub.s32 %s8, 2
      // Predicated region
      $region37: #{align_grapher_forward.6} parent=35 // pred_check
        %p945 = pneg %p89
      $region38: #{align_grapher_forward.6} parent=35 // pred_check_branch
        %947 = sbr.rel (%p945) target = $region40
      $region39: #{align_grapher_forward.6} parent=35 // pred_region
        %p948 = scmp.lt.s32.totalorder %s14, 1
        %s949 = scalar_select %p948, %s14, 1
        %s950 = smul.addr %s949, 32
        %s951 = smul.addr %s950, 8
        %s952 = scalar_lea.vmem %s2, %s951
      $region40: #{align_grapher_forward.6} parent=35 // pred_fallthru
        _
    $region36: #{align_grapher_forward.6} parent=5 // pred_fallthru
      _
  $region6: #{align_grapher_forward.6} parent=0 // loop_footer
    %s12 = sadd.s32 1, %s8
  $region7: #{align_grapher_forward.6} parent=0 // loop_footer_branch
    %7 = sbr.rel target = $region3
  $region8: #{align_grapher_forward.6} parent=0 // loop_exit
    _

// kernel: align_grapher_forward.7
$region0: #{align_grapher_forward.7}
  #allocation0 [shape = 'u32[]', space=smem, size = 0x4, offset = 0x4, fixed_abs, tag = 'smem constant byte address 0x4 - core index']
  #allocation1 [shape = 'u32[144,128]{1,0:T(1,128)}', space=vmem, size = 0x12000, scoped, tag = 'internal scratch']
  %s0 = inlined_call_operand.vmem [shape: s32[2,9,256], index: 0, kind: input, shape index: {}]
  %s1 = inlined_call_operand.vmem [shape: f32[4,1024], index: 1, kind: input, shape index: {}]
  %s2 = inlined_call_operand.vmem [shape: f32[2,4,64], index: 2, kind: input, shape index: {}]
  %s3 = inlined_call_operand.vmem [shape: f32[2,4,256], index: 3, kind: input, shape index: {}]
  %s4 = inlined_call_operand.vmem [shape: f32[2,4,256], index: 4, kind: input, shape index: {}]
  %s5 = inlined_call_operand.vmem [shape: bf16[8,4], index: 5, kind: input, shape index: {}]
  %s6 = inlined_call_operand.vmem [shape: bf16[8,4], index: 6, kind: input, shape index: {}]
  %s7 = inlined_call_operand.vmem [shape: f32[8,1], index: 7, kind: input, shape index: {}]
  %s8 = inlined_call_operand.vmem [shape: bf16[4,8], index: 8, kind: input, shape index: {}]
  %s9 = inlined_call_operand.vmem [shape: f32[4,1], index: 9, kind: input, shape index: {}]
  %s10 = inlined_call_operand.vmem [shape: f32[2,4,256], index: 10, kind: output, shape index: {0}]
  %s11 = inlined_call_operand.vmem [shape: f32[2,4,256], index: 11, kind: output, shape index: {1}]
  %12 = xla_tuple %s10, %s11
  %s13 = sld [smem:[#allocation0]]
  $region81: #{align_grapher_forward.7} parent=0
    _
  %s15 = ssub.s32 1, %s13
  %s16 = scalar_select 0, %s15, %s13
  loop: start=0, step=1, limit=4
  $region2: #{align_grapher_forward.7} parent=0 // loop_pre_header
    _
  $region3: #{align_grapher_forward.7} parent=0 // loop_header
    %s18 = sphi 0, %s22
    %p19 = scmp.ge.s32.totalorder %s18, 4
    %s28 = sphi 0, %s30
    %s31 = sphi 0, %s28
    %s32 = sphi 0, %s31
    %s48 = sphi 0, %s32
    %s54 = sphi 0, %s56
    %s57 = sphi 0, %s54
    %s58 = sphi 0, %s57
    %s74 = sphi 0, %s58
    %s80 = sphi 0, %s82
    %s83 = sphi 0, %s80
    %s84 = sphi 0, %s83
    %s100 = sphi 0, %s84
    %s106 = sphi 0, %s108
    %s109 = sphi 0, %s106
    %s110 = sphi 0, %s109
    %s126 = sphi 0, %s110
    %s132 = sphi 0, %s134
    %s135 = sphi 0, %s132
    %s136 = sphi 0, %s135
    %s152 = sphi 0, %s136
    %s156 = sphi 0, %s156
    %s158 = sphi 0, %s156
    %s159 = sphi 0, %s158
    %s173 = sphi 0, %s159
    %s177 = sphi 0, %s177
    %s179 = sphi 0, %s177
    %s180 = sphi 0, %s179
    %s194 = sphi 0, %s180
    %s198 = sphi 0, %s198
    %s200 = sphi 0, %s198
    %s201 = sphi 0, %s200
    %s215 = sphi 0, %s201
    %s219 = sphi 0, %s219
    %s221 = sphi 0, %s219
    %s222 = sphi 0, %s221
    %s236 = sphi 0, %s222
    %s240 = sphi 0, %s240
    %s242 = sphi 0, %s240
    %s243 = sphi 0, %s242
    %s257 = sphi 0, %s243
    %s263 = sphi 0, %s265
    %s266 = sphi 0, %s263
    %s267 = sphi 0, %s266
    %s283 = sphi 0, %s267
    %s289 = sphi 0, %s291
    %s292 = sphi 0, %s289
    %s293 = sphi 0, %s292
    %s309 = sphi 0, %s293
  $region4: #{align_grapher_forward.7} parent=0 // loop_header_branch
    %21 = sbr.rel (%p19) target = $region8
  $region5: #{align_grapher_forward.7} parent=0 // loop_body
    %s23 = ssub.s32 %s18, 1
    %s24 = ssub.s32 %s18, 2
    %s25 = sadd.s32 %s18, 1
    %s26 = ssub.s32 %s18, %s25
    %p27 = scmp.eq.s32.totalorder %s26, 0
    %s29 = sadd.s32 %s28, 1
    %s30 = scalar_select %p27, %s28, %s29
    %p33 = pneg %p27
    %p34 = scmp.eq.s32.totalorder %s18, 1
    %p35 = por %p33, %p34
    %p36 = scmp.ne.s32.totalorder %s28, %s31
    %p37 = scmp.eq.s32.totalorder %s18, 0
    %p38 = por %p36, %p37
    %p39 = scmp.ne.s32.totalorder %s28, %s31
    %p40 = scmp.eq.s32.totalorder %s23, 1
    %p41 = por %p39, %p40
    %p42 = scmp.ne.s32.totalorder %s31, %s32
    %p43 = scmp.eq.s32.totalorder %s23, 0
    %p44 = por %p42, %p43
    %p45 = scmp.ne.s32.totalorder %s31, %s32
    %p46 = scmp.eq.s32.totalorder %s24, 1
    %p47 = por %p45, %p46
    %p49 = scmp.ne.s32.totalorder %s32, %s48
    %p50 = scmp.eq.s32.totalorder %s24, 0
    %p51 = por %p49, %p50
    %s52 = ssub.s32 %s18, %s25
    %p53 = scmp.eq.s32.totalorder %s52, 0
    %s55 = sadd.s32 %s54, 1
    %s56 = scalar_select %p53, %s54, %s55
    %p59 = pneg %p53
    %p60 = scmp.eq.s32.totalorder %s18, 1
    %p61 = por %p59, %p60
    %p62 = scmp.ne.s32.totalorder %s54, %s57
    %p63 = scmp.eq.s32.totalorder %s18, 0
    %p64 = por %p62, %p63
    %p65 = scmp.ne.s32.totalorder %s54, %s57
    %p66 = scmp.eq.s32.totalorder %s23, 1
    %p67 = por %p65, %p66
    %p68 = scmp.ne.s32.totalorder %s57, %s58
    %p69 = scmp.eq.s32.totalorder %s23, 0
    %p70 = por %p68, %p69
    %p71 = scmp.ne.s32.totalorder %s57, %s58
    %p72 = scmp.eq.s32.totalorder %s24, 1
    %p73 = por %p71, %p72
    %p75 = scmp.ne.s32.totalorder %s58, %s74
    %p76 = scmp.eq.s32.totalorder %s24, 0
    %p77 = por %p75, %p76
    %s78 = ssub.s32 %s18, %s25
    %p79 = scmp.eq.s32.totalorder %s78, 0
    %s81 = sadd.s32 %s80, 1
    %s82 = scalar_select %p79, %s80, %s81
    %p85 = pneg %p79
    %p86 = scmp.eq.s32.totalorder %s18, 1
    %p87 = por %p85, %p86
    %p88 = scmp.ne.s32.totalorder %s80, %s83
    %p89 = scmp.eq.s32.totalorder %s18, 0
    %p90 = por %p88, %p89
    %p91 = scmp.ne.s32.totalorder %s80, %s83
    %p92 = scmp.eq.s32.totalorder %s23, 1
    %p93 = por %p91, %p92
    %p94 = scmp.ne.s32.totalorder %s83, %s84
    %p95 = scmp.eq.s32.totalorder %s23, 0
    %p96 = por %p94, %p95
    %p97 = scmp.ne.s32.totalorder %s83, %s84
    %p98 = scmp.eq.s32.totalorder %s24, 1
    %p99 = por %p97, %p98
    %p101 = scmp.ne.s32.totalorder %s84, %s100
    %p102 = scmp.eq.s32.totalorder %s24, 0
    %p103 = por %p101, %p102
    %s104 = ssub.s32 %s18, %s25
    %p105 = scmp.eq.s32.totalorder %s104, 0
    %s107 = sadd.s32 %s106, 1
    %s108 = scalar_select %p105, %s106, %s107
    %p111 = pneg %p105
    %p112 = scmp.eq.s32.totalorder %s18, 1
    %p113 = por %p111, %p112
    %p114 = scmp.ne.s32.totalorder %s106, %s109
    %p115 = scmp.eq.s32.totalorder %s18, 0
    %p116 = por %p114, %p115
    %p117 = scmp.ne.s32.totalorder %s106, %s109
    %p118 = scmp.eq.s32.totalorder %s23, 1
    %p119 = por %p117, %p118
    %p120 = scmp.ne.s32.totalorder %s109, %s110
    %p121 = scmp.eq.s32.totalorder %s23, 0
    %p122 = por %p120, %p121
    %p123 = scmp.ne.s32.totalorder %s109, %s110
    %p124 = scmp.eq.s32.totalorder %s24, 1
    %p125 = por %p123, %p124
    %p127 = scmp.ne.s32.totalorder %s110, %s126
    %p128 = scmp.eq.s32.totalorder %s24, 0
    %p129 = por %p127, %p128
    %s130 = ssub.s32 %s18, %s25
    %p131 = scmp.eq.s32.totalorder %s130, 0
    %s133 = sadd.s32 %s132, 1
    %s134 = scalar_select %p131, %s132, %s133
    %p137 = pneg %p131
    %p138 = scmp.eq.s32.totalorder %s18, 1
    %p139 = por %p137, %p138
    %p140 = scmp.ne.s32.totalorder %s132, %s135
    %p141 = scmp.eq.s32.totalorder %s18, 0
    %p142 = por %p140, %p141
    %p143 = scmp.ne.s32.totalorder %s132, %s135
    %p144 = scmp.eq.s32.totalorder %s23, 1
    %p145 = por %p143, %p144
    %p146 = scmp.ne.s32.totalorder %s135, %s136
    %p147 = scmp.eq.s32.totalorder %s23, 0
    %p148 = por %p146, %p147
    %p149 = scmp.ne.s32.totalorder %s135, %s136
    %p150 = scmp.eq.s32.totalorder %s24, 1
    %p151 = por %p149, %p150
    %p153 = scmp.ne.s32.totalorder %s136, %s152
    %p154 = scmp.eq.s32.totalorder %s24, 0
    %p155 = por %p153, %p154
    %s157 = sadd.s32 %s156, 1
    %p160 = scmp.eq.s32.totalorder %s18, 1
    %p161 = scmp.ne.s32.totalorder %s156, %s158
    %p162 = scmp.eq.s32.totalorder %s18, 0
    %p163 = por %p161, %p162
    %p164 = scmp.ne.s32.totalorder %s156, %s158
    %p165 = scmp.eq.s32.totalorder %s23, 1
    %p166 = por %p164, %p165
    %p167 = scmp.ne.s32.totalorder %s158, %s159
    %p168 = scmp.eq.s32.totalorder %s23, 0
    %p169 = por %p167, %p168
    %p170 = scmp.ne.s32.totalorder %s158, %s159
    %p171 = scmp.eq.s32.totalorder %s24, 1
    %p172 = por %p170, %p171
    %p174 = scmp.ne.s32.totalorder %s159, %s173
    %p175 = scmp.eq.s32.totalorder %s24, 0
    %p176 = por %p174, %p175
    %s178 = sadd.s32 %s177, 1
    %p181 = scmp.eq.s32.totalorder %s18, 1
    %p182 = scmp.ne.s32.totalorder %s177, %s179
    %p183 = scmp.eq.s32.totalorder %s18, 0
    %p184 = por %p182, %p183
    %p185 = scmp.ne.s32.totalorder %s177, %s179
    %p186 = scmp.eq.s32.totalorder %s23, 1
    %p187 = por %p185, %p186
    %p188 = scmp.ne.s32.totalorder %s179, %s180
    %p189 = scmp.eq.s32.totalorder %s23, 0
    %p190 = por %p188, %p189
    %p191 = scmp.ne.s32.totalorder %s179, %s180
    %p192 = scmp.eq.s32.totalorder %s24, 1
    %p193 = por %p191, %p192
    %p195 = scmp.ne.s32.totalorder %s180, %s194
    %p196 = scmp.eq.s32.totalorder %s24, 0
    %p197 = por %p195, %p196
    %s199 = sadd.s32 %s198, 1
    %p202 = scmp.eq.s32.totalorder %s18, 1
    %p203 = scmp.ne.s32.totalorder %s198, %s200
    %p204 = scmp.eq.s32.totalorder %s18, 0
    %p205 = por %p203, %p204
    %p206 = scmp.ne.s32.totalorder %s198, %s200
    %p207 = scmp.eq.s32.totalorder %s23, 1
    %p208 = por %p206, %p207
    %p209 = scmp.ne.s32.totalorder %s200, %s201
    %p210 = scmp.eq.s32.totalorder %s23, 0
    %p211 = por %p209, %p210
    %p212 = scmp.ne.s32.totalorder %s200, %s201
    %p213 = scmp.eq.s32.totalorder %s24, 1
    %p214 = por %p212, %p213
    %p216 = scmp.ne.s32.totalorder %s201, %s215
    %p217 = scmp.eq.s32.totalorder %s24, 0
    %p218 = por %p216, %p217
    %s220 = sadd.s32 %s219, 1
    %p223 = scmp.eq.s32.totalorder %s18, 1
    %p224 = scmp.ne.s32.totalorder %s219, %s221
    %p225 = scmp.eq.s32.totalorder %s18, 0
    %p226 = por %p224, %p225
    %p227 = scmp.ne.s32.totalorder %s219, %s221
    %p228 = scmp.eq.s32.totalorder %s23, 1
    %p229 = por %p227, %p228
    %p230 = scmp.ne.s32.totalorder %s221, %s222
    %p231 = scmp.eq.s32.totalorder %s23, 0
    %p232 = por %p230, %p231
    %p233 = scmp.ne.s32.totalorder %s221, %s222
    %p234 = scmp.eq.s32.totalorder %s24, 1
    %p235 = por %p233, %p234
    %p237 = scmp.ne.s32.totalorder %s222, %s236
    %p238 = scmp.eq.s32.totalorder %s24, 0
    %p239 = por %p237, %p238
    %s241 = sadd.s32 %s240, 1
    %p244 = scmp.eq.s32.totalorder %s18, 1
    %p245 = scmp.ne.s32.totalorder %s240, %s242
    %p246 = scmp.eq.s32.totalorder %s18, 0
    %p247 = por %p245, %p246
    %p248 = scmp.ne.s32.totalorder %s240, %s242
    %p249 = scmp.eq.s32.totalorder %s23, 1
    %p250 = por %p248, %p249
    %p251 = scmp.ne.s32.totalorder %s242, %s243
    %p252 = scmp.eq.s32.totalorder %s23, 0
    %p253 = por %p251, %p252
    %p254 = scmp.ne.s32.totalorder %s242, %s243
    %p255 = scmp.eq.s32.totalorder %s24, 1
    %p256 = por %p254, %p255
    %p258 = scmp.ne.s32.totalorder %s243, %s257
    %p259 = scmp.eq.s32.totalorder %s24, 0
    %p260 = por %p258, %p259
    %s261 = ssub.s32 %s18, %s25
    %p262 = scmp.eq.s32.totalorder %s261, 0
    %s264 = sadd.s32 %s263, 1
    %s265 = scalar_select %p262, %s263, %s264
    %p268 = pneg %p262
    %p269 = scmp.eq.s32.totalorder %s18, 1
    %p270 = por %p268, %p269
    %p271 = scmp.ne.s32.totalorder %s263, %s266
    %p272 = scmp.eq.s32.totalorder %s18, 0
    %p273 = por %p271, %p272
    %p274 = scmp.ne.s32.totalorder %s263, %s266
    %p275 = scmp.eq.s32.totalorder %s23, 1
    %p276 = por %p274, %p275
    %p277 = scmp.ne.s32.totalorder %s266, %s267
    %p278 = scmp.eq.s32.totalorder %s23, 0
    %p279 = por %p277, %p278
    %p280 = scmp.ne.s32.totalorder %s266, %s267
    %p281 = scmp.eq.s32.totalorder %s24, 1
    %p282 = por %p280, %p281
    %p284 = scmp.ne.s32.totalorder %s267, %s283
    %p285 = scmp.eq.s32.totalorder %s24, 0
    %p286 = por %p284, %p285
    %s287 = ssub.s32 %s18, %s25
    %p288 = scmp.eq.s32.totalorder %s287, 0
    %s290 = sadd.s32 %s289, 1
    %s291 = scalar_select %p288, %s289, %s290
    %p294 = pneg %p288
    %p295 = scmp.eq.s32.totalorder %s18, 1
    %p296 = por %p294, %p295
    %p297 = scmp.ne.s32.totalorder %s289, %s292
    %p298 = scmp.eq.s32.totalorder %s18, 0
    %p299 = por %p297, %p298
    %p300 = scmp.ne.s32.totalorder %s289, %s292
    %p301 = scmp.eq.s32.totalorder %s23, 1
    %p302 = por %p300, %p301
    %p303 = scmp.ne.s32.totalorder %s292, %s293
    %p304 = scmp.eq.s32.totalorder %s23, 0
    %p305 = por %p303, %p304
    %p306 = scmp.ne.s32.totalorder %s292, %s293
    %p307 = scmp.eq.s32.totalorder %s24, 1
    %p308 = por %p306, %p307
    %p310 = scmp.ne.s32.totalorder %s293, %s309
    %p311 = scmp.eq.s32.totalorder %s24, 0
    %p312 = por %p310, %p311
    %p313 = scmp.le.s32.totalorder 1, %s18
    %p314 = scmp.lt.s32.totalorder %s18, 3
    %p315 = pnand %p313, %p314
    %p316 = pneg %p315
    // Predicated region
    $region9: #{align_grapher_forward.7} parent=5 // pred_check
      _
    $region10: #{align_grapher_forward.7} parent=5 // pred_check_branch
      %318 = sbr.rel (%p315) target = $region12
    $region11: #{align_grapher_forward.7} parent=5 // pred_region
      %s319 = ssub.s32 %s18, 1
      // Predicated region
      $region13: #{align_grapher_forward.7} parent=11 // pred_check
        %p320 = pneg %p169
      $region14: #{align_grapher_forward.7} parent=11 // pred_check_branch
        %322 = sbr.rel (%p320) target = $region16
      $region15: #{align_grapher_forward.7} parent=11 // pred_region
        _
      $region16: #{align_grapher_forward.7} parent=11 // pred_fallthru
        _
      // Predicated region
      $region17: #{align_grapher_forward.7} parent=11 // pred_check
        %p323 = pneg %p190
      $region18: #{align_grapher_forward.7} parent=11 // pred_check_branch
        %325 = sbr.rel (%p323) target = $region20
      $region19: #{align_grapher_forward.7} parent=11 // pred_region
        _
      $region20: #{align_grapher_forward.7} parent=11 // pred_fallthru
        _
      // Predicated region
      $region21: #{align_grapher_forward.7} parent=11 // pred_check
        %p326 = pneg %p211
      $region22: #{align_grapher_forward.7} parent=11 // pred_check_branch
        %328 = sbr.rel (%p326) target = $region24
      $region23: #{align_grapher_forward.7} parent=11 // pred_region
        _
      $region24: #{align_grapher_forward.7} parent=11 // pred_fallthru
        _
      // Predicated region
      $region25: #{align_grapher_forward.7} parent=11 // pred_check
        %p329 = pneg %p232
      $region26: #{align_grapher_forward.7} parent=11 // pred_check_branch
        %331 = sbr.rel (%p329) target = $region28
      $region27: #{align_grapher_forward.7} parent=11 // pred_region
        _
      $region28: #{align_grapher_forward.7} parent=11 // pred_fallthru
        _
      // Predicated region
      $region29: #{align_grapher_forward.7} parent=11 // pred_check
        %p332 = pneg %p253
      $region30: #{align_grapher_forward.7} parent=11 // pred_check_branch
        %334 = sbr.rel (%p332) target = $region32
      $region31: #{align_grapher_forward.7} parent=11 // pred_region
        _
      $region32: #{align_grapher_forward.7} parent=11 // pred_fallthru
        _
    $region12: #{align_grapher_forward.7} parent=5 // pred_fallthru
      _
    %p335 = scmp.lt.s32.totalorder %s18, 2
    // Predicated region
    $region33: #{align_grapher_forward.7} parent=5 // pred_check
      %p336 = pneg %p335
    $region34: #{align_grapher_forward.7} parent=5 // pred_check_branch
      %338 = sbr.rel (%p336) target = $region36
    $region35: #{align_grapher_forward.7} parent=5 // pred_region
      // Predicated region
      $region37: #{align_grapher_forward.7} parent=35 // pred_check
        %p339 = pneg %p38
      $region38: #{align_grapher_forward.7} parent=35 // pred_check_branch
        %341 = sbr.rel (%p339) target = $region40
      $region39: #{align_grapher_forward.7} parent=35 // pred_region
        %p342 = scmp.lt.s32.totalorder %s18, 1
        %s343 = scalar_select %p342, %s18, 1
        %s344 = smul.addr %s343, 4
        %s345 = smul.addr %s344, 8
        %s346 = scalar_lea.vmem %s0, %s345
      $region40: #{align_grapher_forward.7} parent=35 // pred_fallthru
        _
      // Predicated region
      $region41: #{align_grapher_forward.7} parent=35 // pred_check
        %p347 = pneg %p64
      $region42: #{align_grapher_forward.7} parent=35 // pred_check_branch
        %349 = sbr.rel (%p347) target = $region44
      $region43: #{align_grapher_forward.7} parent=35 // pred_region
        %s350 = smul.u32 2, %s18
        %p351 = scmp.lt.s32.totalorder %s350, 7
        %s352 = scalar_select %p351, %s350, 7
        %s353 = smul.addr %s352, 4
        %s354 = scalar_lea.vmem %s1, %s353
        %s355 = smul.u32 2, %s18
      $region44: #{align_grapher_forward.7} parent=35 // pred_fallthru
        _
      // Predicated region
      $region45: #{align_grapher_forward.7} parent=35 // pred_check
        %p356 = pneg %p90
      $region46: #{align_grapher_forward.7} parent=35 // pred_check_branch
        %358 = sbr.rel (%p356) target = $region48
      $region47: #{align_grapher_forward.7} parent=35 // pred_region
        %p359 = scmp.lt.s32.totalorder %s18, 1
        %s360 = scalar_select %p359, %s18, 1
        %s361 = smul.addr %s360, 4
        %s362 = scalar_lea.vmem %s2, %s361
      $region48: #{align_grapher_forward.7} parent=35 // pred_fallthru
        _
      // Predicated region
      $region49: #{align_grapher_forward.7} parent=35 // pred_check
        %p363 = pneg %p116
      $region50: #{align_grapher_forward.7} parent=35 // pred_check_branch
        %365 = sbr.rel (%p363) target = $region52
      $region51: #{align_grapher_forward.7} parent=35 // pred_region
        %p366 = scmp.lt.s32.totalorder %s18, 1
        %s367 = scalar_select %p366, %s18, 1
        %s368 = smul.addr %s367, 2
        %s369 = smul.addr %s368, 4
        %s370 = scalar_lea.vmem %s3, %s369
      $region52: #{align_grapher_forward.7} parent=35 // pred_fallthru
        _
      // Predicated region
      $region53: #{align_grapher_forward.7} parent=35 // pred_check
        %p371 = pneg %p142
      $region54: #{align_grapher_forward.7} parent=35 // pred_check_branch
        %373 = sbr.rel (%p371) target = $region56
      $region55: #{align_grapher_forward.7} parent=35 // pred_region
        %p374 = scmp.lt.s32.totalorder %s18, 1
        %s375 = scalar_select %p374, %s18, 1
        %s376 = smul.addr %s375, 2
        %s377 = smul.addr %s376, 4
        %s378 = scalar_lea.vmem %s4, %s377
      $region56: #{align_grapher_forward.7} parent=35 // pred_fallthru
        _
    $region36: #{align_grapher_forward.7} parent=5 // pred_fallthru
      _
    %p379 = scmp.le.s32.totalorder 1, %s18
    %p380 = scmp.lt.s32.totalorder %s18, 3
    %p381 = pnand %p379, %p380
    %p382 = pneg %p381
    // Predicated region
    $region57: #{align_grapher_forward.7} parent=5 // pred_check
      _
    $region58: #{align_grapher_forward.7} parent=5 // pred_check_branch
      %384 = sbr.rel (%p381) target = $region60
    $region59: #{align_grapher_forward.7} parent=5 // pred_region
      %s385 = ssub.s32 %s18, 1
      %p386 = scmp.lt.s32.totalorder %s23, 1
      %s387 = scalar_select %p386, %s23, 1
      %s388 = smul.addr %s387, 4
      %s389 = smul.addr %s388, 8
      %s390 = scalar_lea.vmem %s0, %s389
      %p391 = pneg %p44
      %p392 = pneg %p41
      %s393 = smul.u32 2, %s23
      %p394 = scmp.lt.s32.totalorder %s393, 7
      %s395 = scalar_select %p394, %s393, 7
      %s396 = smul.addr %s395, 4
      %s397 = scalar_lea.vmem %s1, %s396
      %p398 = pneg %p70
      %p399 = pneg %p67
      %p400 = scmp.lt.s32.totalorder %s23, 1
      %s401 = scalar_select %p400, %s23, 1
      %s402 = smul.addr %s401, 4
      %s403 = scalar_lea.vmem %s2, %s402
      %p404 = pneg %p96
      %p405 = pneg %p93
      %p406 = scmp.lt.s32.totalorder %s23, 1
      %s407 = scalar_select %p406, %s23, 1
      %s408 = smul.addr %s407, 2
      %s409 = smul.addr %s408, 4
      %s410 = scalar_lea.vmem %s3, %s409
      %p411 = pneg %p122
      %p412 = pneg %p119
      %p413 = scmp.lt.s32.totalorder %s23, 1
      %s414 = scalar_select %p413, %s23, 1
      %s415 = smul.addr %s414, 2
      %s416 = smul.addr %s415, 4
      %s417 = scalar_lea.vmem %s4, %s416
      %p418 = pneg %p148
      %p419 = pneg %p145
      %p420 = pneg %p169
      %p421 = pneg %p166
      %p422 = pneg %p190
      %p423 = pneg %p187
      %p424 = pneg %p211
      %p425 = pneg %p208
      %p426 = pneg %p232
      %p427 = pneg %p229
      %p428 = pneg %p253
      %p429 = pneg %p250
      %p430 = pneg %p279
      %p431 = pneg %p276
      %p432 = scmp.lt.s32.totalorder %s23, 1
      %s433 = scalar_select %p432, %s23, 1
      %s434 = smul.addr %s433, 2
      %s435 = smul.addr %s434, 4
      %s436 = scalar_lea.vmem %s10, %s435
      %p437 = pneg %p305
      %p438 = pneg %p302
      %p439 = scmp.lt.s32.totalorder %s23, 1
      %s440 = scalar_select %p439, %s23, 1
      %s441 = smul.addr %s440, 2
      %s442 = smul.addr %s441, 4
      %s443 = scalar_lea.vmem %s11, %s442
      %p444 = scmp.lt.s32.totalorder %s23, 1
      %s445 = scalar_select %p444, %s23, 1
      %s446 = smul.addr %s445, 4
      %s447 = smul.addr %s446, 8
      %s448 = scalar_lea.vmem %s0, %s447
      %s449 = smul.u32 2, %s23
      %p450 = scmp.lt.s32.totalorder %s449, 7
      %s451 = scalar_select %p450, %s449, 7
      %s452 = smul.addr %s451, 4
      %s453 = scalar_lea.vmem %s1, %s452
      %s454 = smul.u32 2, %s23
      %p455 = scmp.lt.s32.totalorder %s23, 1
      %s456 = scalar_select %p455, %s23, 1
      %s457 = smul.addr %s456, 4
      %s458 = scalar_lea.vmem %s2, %s457
      %p459 = scmp.lt.s32.totalorder %s23, 1
      %s460 = scalar_select %p459, %s23, 1
      %s461 = smul.addr %s460, 2
      %s462 = smul.addr %s461, 4
      %s463 = scalar_lea.vmem %s3, %s462
      %p464 = scmp.lt.s32.totalorder %s23, 1
      %s465 = scalar_select %p464, %s23, 1
      %s466 = smul.addr %s465, 2
      %s467 = smul.addr %s466, 4
      %s468 = scalar_lea.vmem %s4, %s467
      %p469 = scmp.lt.s32.totalorder %s23, 1
      %s470 = scalar_select %p469, %s23, 1
      %s471 = smul.addr %s470, 2
      %s472 = smul.addr %s471, 4
      %s473 = scalar_lea.vmem %s10, %s472
      %p474 = scmp.lt.s32.totalorder %s23, 1
      %s475 = scalar_select %p474, %s23, 1
      %s476 = smul.addr %s475, 2
      %s477 = smul.addr %s476, 4
      %s478 = scalar_lea.vmem %s11, %s477
      %v480 = vld [vmem:[%s453] sm:$0xff]
      %v482 = vcombine.high %v480, %v480
      %v484 = vpack.c.bf16 %v480, %v480
      %v485 = vpack.c.bf16 %v482, %v482
      %v486 = vld [vmem:[%s458] sm:$0xf]
      %v487 = vpack.c.bf16 %v486, %v486
      %v488 = vld [vmem:[%s448] sm:$0xff]
      %v489 = vld [vmem:[%s448 + $0x8] sm:$0xff]
      %v490 = vld [vmem:[%s448 + $0x10] sm:$0x1]
      %v491 = vld [vmem:[%s448 + $0x18] sm:$0x1]
      %v492 = vld [vmem:[%s5] sm:$0xf]
      %v493 = vld [vmem:[%s7] sm:$0xff]
      %495 = vset.pattern.permute.xlu0 0
      %496 = vperm.xlu0 %495, %v493
      %v497 = vpop.permute.xlu0 %496
      %vm499 = vcmask 31744
      %v501 = vsel %vm499, %v492, 0
      %vm503 = vcmask 1041408
      %v505 = vsel %vm503, %v484, 0
      %v508 = vsel %vm503, %v485, 0
      %510 = vmatprep.subr.bf16.mxu0 %v508
      %511 = vmatpush1.bf16.msra.mxu0 %v505
      %512 = vmatprep.subr.bf16.mxu0 0
      %513 = vmatpush1.bf16.msra.mxu0 0
      %514 = vmatprep.subr.bf16.mxu0 0
      %515 = vmatpush1.bf16.msra.mxu0 0
      %516 = vmatprep.subr.bf16.mxu0 0
      %517 = vmatpush1.bf16.msra.mxu0 0
      %518 = vmatprep.subr.bf16.mxu0 0
      %519 = vmatpush1.bf16.msra.mxu0 0
      %520 = vmatprep.subr.bf16.mxu0 0
      %521 = vmatpush1.bf16.msra.mxu0 0
      %522 = vmatprep.subr.bf16.mxu0 0
      %523 = vmatpush1.bf16.msra.mxu0 0
      %524 = vmatprep.subr.bf16.mxu0 0
      %525 = vmatpush1.bf16.msra.mxu0 0
      %526 = vmatprep.subr.bf16.mxu0 0
      %527 = vmatpush1.bf16.msra.mxu0 0
      %528 = vmatprep.subr.bf16.mxu0 0
      %529 = vmatpush1.bf16.msra.mxu0 0
      %530 = vmatprep.subr.bf16.mxu0 0
      %531 = vmatpush1.bf16.msra.mxu0 0
      %532 = vmatprep.subr.bf16.mxu0 0
      %533 = vmatpush1.bf16.msra.mxu0 0
      %534 = vmatprep.subr.bf16.mxu0 0
      %535 = vmatpush1.bf16.msra.mxu0 0
      %536 = vmatprep.subr.bf16.mxu0 0
      %537 = vmatpush1.bf16.msra.mxu0 0
      %538 = vmatprep.subr.bf16.mxu0 0
      %539 = vmatpush1.bf16.msra.mxu0 0
      %540 = vmatprep.subr.bf16.mxu0 0
      %541 = vmatpush1.bf16.msra.mxu0 0
      %542 = vmatprep.mubr.bf16.mxu0 0
      %543 = vmatmul.mubr.bf16.gmra.mrb[0].mxu0 %v501
      %v544 = vpop.f32.mrb[0].mxu0
      %v545 = vadd.f32 %v497, %v544
      %v546 = vpop.f32.mrb[0].mxu0
      %v547 = vadd.f32 %v497, %v546
      %v548 = vpop.f32.mrb[0].mxu0
      %v549 = vpop.f32.mrb[0].mxu0
      %550 = vdwg.mxu0
      %v551 = vld [vmem:[%s6] sm:$0xf]
      %v553 = vsel %vm499, %v551, 0
      %v556 = vsel %vm503, %v487, 0
      %558 = vmatprep.subr.bf16.mxu0 0
      %559 = vmatpush1.bf16.msra.mxu0 %v556
      %560 = vmatprep.subr.bf16.mxu0 0
      %561 = vmatpush1.bf16.msra.mxu0 0
      %562 = vmatprep.subr.bf16.mxu0 0
      %563 = vmatpush1.bf16.msra.mxu0 0
      %564 = vmatprep.subr.bf16.mxu0 0
      %565 = vmatpush1.bf16.msra.mxu0 0
      %566 = vmatprep.subr.bf16.mxu0 0
      %567 = vmatpush1.bf16.msra.mxu0 0
      %568 = vmatprep.subr.bf16.mxu0 0
      %569 = vmatpush1.bf16.msra.mxu0 0
      %570 = vmatprep.subr.bf16.mxu0 0
      %571 = vmatpush1.bf16.msra.mxu0 0
      %572 = vmatprep.subr.bf16.mxu0 0
      %573 = vmatpush1.bf16.msra.mxu0 0
      %574 = vmatprep.subr.bf16.mxu0 0
      %575 = vmatpush1.bf16.msra.mxu0 0
      %576 = vmatprep.subr.bf16.mxu0 0
      %577 = vmatpush1.bf16.msra.mxu0 0
      %578 = vmatprep.subr.bf16.mxu0 0
      %579 = vmatpush1.bf16.msra.mxu0 0
      %580 = vmatprep.subr.bf16.mxu0 0
      %581 = vmatpush1.bf16.msra.mxu0 0
      %582 = vmatprep.subr.bf16.mxu0 0
      %583 = vmatpush1.bf16.msra.mxu0 0
      %584 = vmatprep.subr.bf16.mxu0 0
      %585 = vmatpush1.bf16.msra.mxu0 0
      %586 = vmatprep.subr.bf16.mxu0 0
      %587 = vmatpush1.bf16.msra.mxu0 0
      %588 = vmatprep.subr.bf16.mxu0 0
      %589 = vmatpush1.bf16.msra.mxu0 0
      %590 = vmatprep.mubr.bf16.mxu0 0
      %591 = vmatmul.mubr.bf16.gmra.mrb[0].mxu0 %v553
      %v592 = vpop.f32.mrb[0].mxu0
      %v593 = vadd.f32 0.0, %v592
      %v594 = vpop.f32.mrb[0].mxu0
      %v595 = vpop.f32.mrb[0].mxu0
      %v596 = vpop.f32.mrb[0].mxu0
      %597 = vdwg.mxu0
      %v598 = vpack.c.bf16 %v593, %v593
      %v599 = vlaneseq
      %v600 = vshrl.u32 %v599, 7
      %v601 = vadd.s32 %v600, 8
      %v602 = vadd.s32 %v600, 16
      %v603 = vadd.s32 %v600, 24
      %v604 = vadd.s32 %v600, 32
      %v605 = vadd.s32 %v600, 40
      %v606 = vadd.s32 %v600, 48
      %v607 = vadd.s32 %v600, 56
      %v608 = vlaneseq
      %v609 = vshrl.u32 %v608, 7
      %v610 = vsub.s32 0, %v609
      %v611 = vrot.slane %v488, %v610
      %v612 = vlaneseq
      %v613 = vshrl.u32 %v612, 7
      %v614 = vsub.s32 0, %v613
      %v615 = vrot.slane %v489, %v614
      %vm616 = vcmp.eq.s32.totalorder %v600, %v611
      %vm617 = vcmp.eq.s32.totalorder %v600, %v615
      %vm618 = vcmp.eq.s32.totalorder %v601, %v611
      %vm619 = vcmp.eq.s32.totalorder %v601, %v615
      %vm620 = vcmp.eq.s32.totalorder %v602, %v611
      %vm621 = vcmp.eq.s32.totalorder %v602, %v615
      %vm622 = vcmp.eq.s32.totalorder %v603, %v611
      %vm623 = vcmp.eq.s32.totalorder %v603, %v615
      %vm624 = vcmp.eq.s32.totalorder %v604, %v611
      %vm625 = vcmp.eq.s32.totalorder %v604, %v615
      %vm626 = vcmp.eq.s32.totalorder %v605, %v611
      %vm627 = vcmp.eq.s32.totalorder %v605, %v615
      %vm628 = vcmp.eq.s32.totalorder %v606, %v611
      %vm629 = vcmp.eq.s32.totalorder %v606, %v615
      %vm630 = vcmp.eq.s32.totalorder %v607, %v611
      %vm631 = vcmp.eq.s32.totalorder %v607, %v615
      %v632 = vsel %vm616, 1.0, 0.0
      %v633 = vsel %vm617, 1.0, 0.0
      %v634 = vsel %vm618, 1.0, 0.0
      %v635 = vsel %vm619, 1.0, 0.0
      %v636 = vsel %vm620, 1.0, 0.0
      %v637 = vsel %vm621, 1.0, 0.0
      %v638 = vsel %vm622, 1.0, 0.0
      %v639 = vsel %vm623, 1.0, 0.0
      %v640 = vsel %vm624, 1.0, 0.0
      %v641 = vsel %vm625, 1.0, 0.0
      %v642 = vsel %vm626, 1.0, 0.0
      %v643 = vsel %vm627, 1.0, 0.0
      %v644 = vsel %vm628, 1.0, 0.0
      %v645 = vsel %vm629, 1.0, 0.0
      %v646 = vsel %vm630, 1.0, 0.0
      %v647 = vsel %vm631, 1.0, 0.0
      %v648 = vpack.c.bf16 %v634, %v632
      %v649 = vpack.c.bf16 %v635, %v633
      %v650 = vpack.c.bf16 %v638, %v636
      %v651 = vpack.c.bf16 %v639, %v637
      %v652 = vpack.c.bf16 %v642, %v640
      %v653 = vpack.c.bf16 %v643, %v641
      %v654 = vpack.c.bf16 %v646, %v644
      %v655 = vpack.c.bf16 %v647, %v645
      %vm656 = vcmask 523264
      %v658 = vsel %vm656, %v598, 0
      %660 = vmatprep.subr.bf16.mxu0 %v649
      %661 = vmatpush1.bf16.msra.mxu0 %v648
      %662 = vmatprep.subr.bf16.mxu0 %v651
      %663 = vmatpush1.bf16.msra.mxu0 %v650
      %664 = vmatprep.subr.bf16.mxu0 %v653
      %665 = vmatpush1.bf16.msra.mxu0 %v652
      %666 = vmatprep.subr.bf16.mxu0 %v655
      %667 = vmatpush1.bf16.msra.mxu0 %v654
      %668 = vmatprep.subr.bf16.mxu0 0
      %669 = vmatpush1.bf16.msra.mxu0 0
      %670 = vmatprep.subr.bf16.mxu0 0
      %671 = vmatpush1.bf16.msra.mxu0 0
      %672 = vmatprep.subr.bf16.mxu0 0
      %673 = vmatpush1.bf16.msra.mxu0 0
      %674 = vmatprep.subr.bf16.mxu0 0
      %675 = vmatpush1.bf16.msra.mxu0 0
      %676 = vmatprep.subr.bf16.mxu0 0
      %677 = vmatpush1.bf16.msra.mxu0 0
      %678 = vmatprep.subr.bf16.mxu0 0
      %679 = vmatpush1.bf16.msra.mxu0 0
      %680 = vmatprep.subr.bf16.mxu0 0
      %681 = vmatpush1.bf16.msra.mxu0 0
      %682 = vmatprep.subr.bf16.mxu0 0
      %683 = vmatpush1.bf16.msra.mxu0 0
      %684 = vmatprep.subr.bf16.mxu0 0
      %685 = vmatpush1.bf16.msra.mxu0 0
      %686 = vmatprep.subr.bf16.mxu0 0
      %687 = vmatpush1.bf16.msra.mxu0 0
      %688 = vmatprep.subr.bf16.mxu0 0
      %689 = vmatpush1.bf16.msra.mxu0 0
      %690 = vmatprep.subr.bf16.mxu0 0
      %691 = vmatpush1.bf16.msra.mxu0 0
      %692 = vmatprep.mubr.bf16.mxu0 0
      %693 = vmatmul.mubr.bf16.gmra.mrb[0].mxu0 %v658
      %v694 = vpop.f32.mrb[0].mxu0
      %v695 = vadd.f32 0.0, %v694
      %v696 = vpop.f32.mrb[0].mxu0
      %v697 = vadd.f32 0.0, %v696
      %v698 = vpop.f32.mrb[0].mxu0
      %v699 = vpop.f32.mrb[0].mxu0
      %700 = vdwg.mxu0
      %v701 = vadd.f32 %v545, %v695
      %v702 = vadd.f32 %v547, %v697
      %v703 = vmax.f32 %v701, 0.0
      %v704 = vmax.f32 %v702, 0.0
      %v705 = vlaneseq
      %v706 = vshrl.u32 %v705, 7
      %v707 = vsub.s32 1, %v706
      %v708 = vrot.slane %v488, %v707
      %v709 = vlaneseq
      %v710 = vshrl.u32 %v709, 7
      %v711 = vsub.s32 1, %v710
      %v712 = vrot.slane %v489, %v711
      %vm713 = vcmp.eq.s32.totalorder %v600, %v708
      %vm714 = vcmp.eq.s32.totalorder %v600, %v712
      %vm715 = vcmp.eq.s32.totalorder %v601, %v708
      %vm716 = vcmp.eq.s32.totalorder %v601, %v712
      %vm717 = vcmp.eq.s32.totalorder %v602, %v708
      %vm718 = vcmp.eq.s32.totalorder %v602, %v712
      %vm719 = vcmp.eq.s32.totalorder %v603, %v708
      %vm720 = vcmp.eq.s32.totalorder %v603, %v712
      %vm721 = vcmp.eq.s32.totalorder %v604, %v708
      %vm722 = vcmp.eq.s32.totalorder %v604, %v712
      %vm723 = vcmp.eq.s32.totalorder %v605, %v708
      %vm724 = vcmp.eq.s32.totalorder %v605, %v712
      %vm725 = vcmp.eq.s32.totalorder %v606, %v708
      %vm726 = vcmp.eq.s32.totalorder %v606, %v712
      %vm727 = vcmp.eq.s32.totalorder %v607, %v708
      %vm728 = vcmp.eq.s32.totalorder %v607, %v712
      %v729 = vsel %vm713, 1.0, 0.0
      %v730 = vsel %vm714, 1.0, 0.0
      %v731 = vsel %vm715, 1.0, 0.0
      %v732 = vsel %vm716, 1.0, 0.0
      %v733 = vsel %vm717, 1.0, 0.0
      %v734 = vsel %vm718, 1.0, 0.0
      %v735 = vsel %vm719, 1.0, 0.0
      %v736 = vsel %vm720, 1.0, 0.0
      %v737 = vsel %vm721, 1.0, 0.0
      %v738 = vsel %vm722, 1.0, 0.0
      %v739 = vsel %vm723, 1.0, 0.0
      %v740 = vsel %vm724, 1.0, 0.0
      %v741 = vsel %vm725, 1.0, 0.0
      %v742 = vsel %vm726, 1.0, 0.0
      %v743 = vsel %vm727, 1.0, 0.0
      %v744 = vsel %vm728, 1.0, 0.0
      %v745 = vpack.c.bf16 %v731, %v729
      %v746 = vpack.c.bf16 %v732, %v730
      %v747 = vpack.c.bf16 %v735, %v733
      %v748 = vpack.c.bf16 %v736, %v734
      %v749 = vpack.c.bf16 %v739, %v737
      %v750 = vpack.c.bf16 %v740, %v738
      %v751 = vpack.c.bf16 %v743, %v741
      %v752 = vpack.c.bf16 %v744, %v742
      %753 = vmatprep.subr.bf16.mxu0 %v746
      %754 = vmatpush1.bf16.msra.mxu0 %v745
      %755 = vmatprep.subr.bf16.mxu0 %v748
      %756 = vmatpush1.bf16.msra.mxu0 %v747
      %757 = vmatprep.subr.bf16.mxu0 %v750
      %758 = vmatpush1.bf16.msra.mxu0 %v749
      %759 = vmatprep.subr.bf16.mxu0 %v752
      %760 = vmatpush1.bf16.msra.mxu0 %v751
      %761 = vmatprep.subr.bf16.mxu0 0
      %762 = vmatpush1.bf16.msra.mxu0 0
      %763 = vmatprep.subr.bf16.mxu0 0
      %764 = vmatpush1.bf16.msra.mxu0 0
      %765 = vmatprep.subr.bf16.mxu0 0
      %766 = vmatpush1.bf16.msra.mxu0 0
      %767 = vmatprep.subr.bf16.mxu0 0
      %768 = vmatpush1.bf16.msra.mxu0 0
      %769 = vmatprep.subr.bf16.mxu0 0
      %770 = vmatpush1.bf16.msra.mxu0 0
      %771 = vmatprep.subr.bf16.mxu0 0
      %772 = vmatpush1.bf16.msra.mxu0 0
      %773 = vmatprep.subr.bf16.mxu0 0
      %774 = vmatpush1.bf16.msra.mxu0 0
      %775 = vmatprep.subr.bf16.mxu0 0
      %776 = vmatpush1.bf16.msra.mxu0 0
      %777 = vmatprep.subr.bf16.mxu0 0
      %778 = vmatpush1.bf16.msra.mxu0 0
      %779 = vmatprep.subr.bf16.mxu0 0
      %780 = vmatpush1.bf16.msra.mxu0 0
      %781 = vmatprep.subr.bf16.mxu0 0
      %782 = vmatpush1.bf16.msra.mxu0 0
      %783 = vmatprep.subr.bf16.mxu0 0
      %784 = vmatpush1.bf16.msra.mxu0 0
      %785 = vmatprep.mubr.bf16.mxu0 0
      %786 = vmatmul.mubr.bf16.gmra.mrb[0].mxu0 %v658
      %v787 = vpop.f32.mrb[0].mxu0
      %v788 = vadd.f32 0.0, %v787
      %v789 = vpop.f32.mrb[0].mxu0
      %v790 = vadd.f32 0.0, %v789
      %v791 = vpop.f32.mrb[0].mxu0
      %v792 = vpop.f32.mrb[0].mxu0
      %793 = vdwg.mxu0
      %v794 = vadd.f32 %v545, %v788
      %v795 = vadd.f32 %v547, %v790
      %v796 = vmax.f32 %v794, 0.0
      %v797 = vmax.f32 %v795, 0.0
      %v798 = vmax.f32 %v703, %v796
      %v799 = vmax.f32 %v704, %v797
      %v800 = vlaneseq
      %v801 = vshrl.u32 %v800, 7
      %v802 = vsub.s32 2, %v801
      %v803 = vrot.slane %v488, %v802
      %v804 = vlaneseq
      %v805 = vshrl.u32 %v804, 7
      %v806 = vsub.s32 2, %v805
      %v807 = vrot.slane %v489, %v806
      %vm808 = vcmp.eq.s32.totalorder %v600, %v803
      %vm809 = vcmp.eq.s32.totalorder %v600, %v807
      %vm810 = vcmp.eq.s32.totalorder %v601, %v803
      %vm811 = vcmp.eq.s32.totalorder %v601, %v807
      %vm812 = vcmp.eq.s32.totalorder %v602, %v803
      %vm813 = vcmp.eq.s32.totalorder %v602, %v807
      %vm814 = vcmp.eq.s32.totalorder %v603, %v803
      %vm815 = vcmp.eq.s32.totalorder %v603, %v807
      %vm816 = vcmp.eq.s32.totalorder %v604, %v803
      %vm817 = vcmp.eq.s32.totalorder %v604, %v807
      %vm818 = vcmp.eq.s32.totalorder %v605, %v803
      %vm819 = vcmp.eq.s32.totalorder %v605, %v807
      %vm820 = vcmp.eq.s32.totalorder %v606, %v803
      %vm821 = vcmp.eq.s32.totalorder %v606, %v807
      %vm822 = vcmp.eq.s32.totalorder %v607, %v803
      %vm823 = vcmp.eq.s32.totalorder %v607, %v807
      %v824 = vsel %vm808, 1.0, 0.0
      %v825 = vsel %vm809, 1.0, 0.0
      %v826 = vsel %vm810, 1.0, 0.0
      %v827 = vsel %vm811, 1.0, 0.0
      %v828 = vsel %vm812, 1.0, 0.0
      %v829 = vsel %vm813, 1.0, 0.0
      %v830 = vsel %vm814, 1.0, 0.0
      %v831 = vsel %vm815, 1.0, 0.0
      %v832 = vsel %vm816, 1.0, 0.0
      %v833 = vsel %vm817, 1.0, 0.0
      %v834 = vsel %vm818, 1.0, 0.0
      %v835 = vsel %vm819, 1.0, 0.0
      %v836 = vsel %vm820, 1.0, 0.0
      %v837 = vsel %vm821, 1.0, 0.0
      %v838 = vsel %vm822, 1.0, 0.0
      %v839 = vsel %vm823, 1.0, 0.0
      %v840 = vpack.c.bf16 %v826, %v824
      %v841 = vpack.c.bf16 %v827, %v825
      %v842 = vpack.c.bf16 %v830, %v828
      %v843 = vpack.c.bf16 %v831, %v829
      %v844 = vpack.c.bf16 %v834, %v832
      %v845 = vpack.c.bf16 %v835, %v833
      %v846 = vpack.c.bf16 %v838, %v836
      %v847 = vpack.c.bf16 %v839, %v837
      %848 = vmatprep.subr.bf16.mxu0 %v841
      %849 = vmatpush1.bf16.msra.mxu0 %v840
      %850 = vmatprep.subr.bf16.mxu0 %v843
      %851 = vmatpush1.bf16.msra.mxu0 %v842
      %852 = vmatprep.subr.bf16.mxu0 %v845
      %853 = vmatpush1.bf16.msra.mxu0 %v844
      %854 = vmatprep.subr.bf16.mxu0 %v847
      %855 = vmatpush1.bf16.msra.mxu0 %v846
      %856 = vmatprep.subr.bf16.mxu0 0
      %857 = vmatpush1.bf16.msra.mxu0 0
      %858 = vmatprep.subr.bf16.mxu0 0
      %859 = vmatpush1.bf16.msra.mxu0 0
      %860 = vmatprep.subr.bf16.mxu0 0
      %861 = vmatpush1.bf16.msra.mxu0 0
      %862 = vmatprep.subr.bf16.mxu0 0
      %863 = vmatpush1.bf16.msra.mxu0 0
      %864 = vmatprep.subr.bf16.mxu0 0
      %865 = vmatpush1.bf16.msra.mxu0 0
      %866 = vmatprep.subr.bf16.mxu0 0
      %867 = vmatpush1.bf16.msra.mxu0 0
      %868 = vmatprep.subr.bf16.mxu0 0
      %869 = vmatpush1.bf16.msra.mxu0 0
      %870 = vmatprep.subr.bf16.mxu0 0
      %871 = vmatpush1.bf16.msra.mxu0 0
      %872 = vmatprep.subr.bf16.mxu0 0
      %873 = vmatpush1.bf16.msra.mxu0 0
      %874 = vmatprep.subr.bf16.mxu0 0
      %875 = vmatpush1.bf16.msra.mxu0 0
      %876 = vmatprep.subr.bf16.mxu0 0
      %877 = vmatpush1.bf16.msra.mxu0 0
      %878 = vmatprep.subr.bf16.mxu0 0
      %879 = vmatpush1.bf16.msra.mxu0 0
      %880 = vmatprep.mubr.bf16.mxu0 0
      %881 = vmatmul.mubr.bf16.gmra.mrb[0].mxu0 %v658
      %v882 = vpop.f32.mrb[0].mxu0
      %v883 = vadd.f32 0.0, %v882
      %v884 = vpop.f32.mrb[0].mxu0
      %v885 = vadd.f32 0.0, %v884
      %v886 = vpop.f32.mrb[0].mxu0
      %v887 = vpop.f32.mrb[0].mxu0
      %888 = vdwg.mxu0
      %v889 = vadd.f32 %v545, %v883
      %v890 = vadd.f32 %v547, %v885
      %v891 = vmax.f32 %v889, 0.0
      %v892 = vmax.f32 %v890, 0.0
      %v893 = vmax.f32 %v798, %v891
      %v894 = vmax.f32 %v799, %v892
      %v895 = vlaneseq
      %v896 = vshrl.u32 %v895, 7
      %v897 = vsub.s32 3, %v896
      %v898 = vrot.slane %v488, %v897
      %v899 = vlaneseq
      %v900 = vshrl.u32 %v899, 7
      %v901 = vsub.s32 3, %v900
      %v902 = vrot.slane %v489, %v901
      %vm903 = vcmp.eq.s32.totalorder %v600, %v898
      %vm904 = vcmp.eq.s32.totalorder %v600, %v902
      %vm905 = vcmp.eq.s32.totalorder %v601, %v898
      %vm906 = vcmp.eq.s32.totalorder %v601, %v902
      %vm907 = vcmp.eq.s32.totalorder %v602, %v898
      %vm908 = vcmp.eq.s32.totalorder %v602, %v902
      %vm909 = vcmp.eq.s32.totalorder %v603, %v898
      %vm910 = vcmp.eq.s32.totalorder %v603, %v902
      %vm911 = vcmp.eq.s32.totalorder %v604, %v898
      %vm912 = vcmp.eq.s32.totalorder %v604, %v902
      %vm913 = vcmp.eq.s32.totalorder %v605, %v898
      %vm914 = vcmp.eq.s32.totalorder %v605, %v902
      %vm915 = vcmp.eq.s32.totalorder %v606, %v898
      %vm916 = vcmp.eq.s32.totalorder %v606, %v902
      %vm917 = vcmp.eq.s32.totalorder %v607, %v898
      %vm918 = vcmp.eq.s32.totalorder %v607, %v902
      %v919 = vsel %vm903, 1.0, 0.0
      %v920 = vsel %vm904, 1.0, 0.0
      %v921 = vsel %vm905, 1.0, 0.0
      %v922 = vsel %vm906, 1.0, 0.0
      %v923 = vsel %vm907, 1.0, 0.0
      %v924 = vsel %vm908, 1.0, 0.0
      %v925 = vsel %vm909, 1.0, 0.0
      %v926 = vsel %vm910, 1.0, 0.0
      %v927 = vsel %vm911, 1.0, 0.0
      %v928 = vsel %vm912, 1.0, 0.0
      %v929 = vsel %vm913, 1.0, 0.0
      %v930 = vsel %vm914, 1.0, 0.0
      %v931 = vsel %vm915, 1.0, 0.0
      %v932 = vsel %vm916, 1.0, 0.0
      %v933 = vsel %vm917, 1.0, 0.0
      %v934 = vsel %vm918, 1.0, 0.0
      %v935 = vpack.c.bf16 %v921, %v919
      %v936 = vpack.c.bf16 %v922, %v920
      %v937 = vpack.c.bf16 %v925, %v923
      %v938 = vpack.c.bf16 %v926, %v924
      %v939 = vpack.c.bf16 %v929, %v927
      %v940 = vpack.c.bf16 %v930, %v928
      %v941 = vpack.c.bf16 %v933, %v931
      %v942 = vpack.c.bf16 %v934, %v932
      %943 = vmatprep.subr.bf16.mxu0 %v936
      %944 = vmatpush1.bf16.msra.mxu0 %v935
      %945 = vmatprep.subr.bf16.mxu0 %v938
      %946 = vmatpush1.bf16.msra.mxu0 %v937
      %947 = vmatprep.subr.bf16.mxu0 %v940
      %948 = vmatpush1.bf16.msra.mxu0 %v939
      %949 = vmatprep.subr.bf16.mxu0 %v942
      %950 = vmatpush1.bf16.msra.mxu0 %v941
      %951 = vmatprep.subr.bf16.mxu0 0
      %952 = vmatpush1.bf16.msra.mxu0 0
      %953 = vmatprep.subr.bf16.mxu0 0
      %954 = vmatpush1.bf16.msra.mxu0 0
      %955 = vmatprep.subr.bf16.mxu0 0
      %956 = vmatpush1.bf16.msra.mxu0 0
      %957 = vmatprep.subr.bf16.mxu0 0
      %958 = vmatpush1.bf16.msra.mxu0 0
      %959 = vmatprep.subr.bf16.mxu0 0
      %960 = vmatpush1.bf16.msra.mxu0 0
      %961 = vmatprep.subr.bf16.mxu0 0
      %962 = vmatpush1.bf16.msra.mxu0 0
      %963 = vmatprep.subr.bf16.mxu0 0
      %964 = vmatpush1.bf16.msra.mxu0 0
      %965 = vmatprep.subr.bf16.mxu0 0
      %966 = vmatpush1.bf16.msra.mxu0 0
      %967 = vmatprep.subr.bf16.mxu0 0
      %968 = vmatpush1.bf16.msra.mxu0 0
      %969 = vmatprep.subr.bf16.mxu0 0
      %970 = vmatpush1.bf16.msra.mxu0 0
      %971 = vmatprep.subr.bf16.mxu0 0
      %972 = vmatpush1.bf16.msra.mxu0 0
      %973 = vmatprep.subr.bf16.mxu0 0
      %974 = vmatpush1.bf16.msra.mxu0 0
      %975 = vmatprep.mubr.bf16.mxu0 0
      %976 = vmatmul.mubr.bf16.gmra.mrb[0].mxu0 %v658
      %v977 = vpop.f32.mrb[0].mxu0
      %v978 = vadd.f32 0.0, %v977
      %v979 = vpop.f32.mrb[0].mxu0
      %v980 = vadd.f32 0.0, %v979
      %v981 = vpop.f32.mrb[0].mxu0
      %v982 = vpop.f32.mrb[0].mxu0
      %983 = vdwg.mxu0
      %v984 = vadd.f32 %v545, %v978
      %v985 = vadd.f32 %v547, %v980
      %v986 = vmax.f32 %v984, 0.0
      %v987 = vmax.f32 %v985, 0.0
      %v988 = vmax.f32 %v893, %v986
      %v989 = vmax.f32 %v894, %v987
      %v990 = vlaneseq
      %v991 = vshrl.u32 %v990, 7
      %v992 = vsub.s32 4, %v991
      %v993 = vrot.slane %v488, %v992
      %v994 = vlaneseq
      %v995 = vshrl.u32 %v994, 7
      %v996 = vsub.s32 4, %v995
      %v997 = vrot.slane %v489, %v996
      %vm998 = vcmp.eq.s32.totalorder %v600, %v993
      %vm999 = vcmp.eq.s32.totalorder %v600, %v997
      %vm1000 = vcmp.eq.s32.totalorder %v601, %v993
      %vm1001 = vcmp.eq.s32.totalorder %v601, %v997
      %vm1002 = vcmp.eq.s32.totalorder %v602, %v993
      %vm1003 = vcmp.eq.s32.totalorder %v602, %v997
      %vm1004 = vcmp.eq.s32.totalorder %v603, %v993
      %vm1005 = vcmp.eq.s32.totalorder %v603, %v997
      %vm1006 = vcmp.eq.s32.totalorder %v604, %v993
      %vm1007 = vcmp.eq.s32.totalorder %v604, %v997
      %vm1008 = vcmp.eq.s32.totalorder %v605, %v993
      %vm1009 = vcmp.eq.s32.totalorder %v605, %v997
      %vm1010 = vcmp.eq.s32.totalorder %v606, %v993
      %vm1011 = vcmp.eq.s32.totalorder %v606, %v997
      %vm1012 = vcmp.eq.s32.totalorder %v607, %v993
      %vm1013 = vcmp.eq.s32.totalorder %v607, %v997
      %v1014 = vsel %vm998, 1.0, 0.0
      %v1015 = vsel %vm999, 1.0, 0.0
      %v1016 = vsel %vm1000, 1.0, 0.0
      %v1017 = vsel %vm1001, 1.0, 0.0
      %v1018 = vsel %vm1002, 1.0, 0.0
      %v1019 = vsel %vm1003, 1.0, 0.0
      %v1020 = vsel %vm1004, 1.0, 0.0
      %v1021 = vsel %vm1005, 1.0, 0.0
      %v1022 = vsel %vm1006, 1.0, 0.0
      %v1023 = vsel %vm1007, 1.0, 0.0
      %v1024 = vsel %vm1008, 1.0, 0.0
      %v1025 = vsel %vm1009, 1.0, 0.0
      %v1026 = vsel %vm1010, 1.0, 0.0
      %v1027 = vsel %vm1011, 1.0, 0.0
      %v1028 = vsel %vm1012, 1.0, 0.0
      %v1029 = vsel %vm1013, 1.0, 0.0
      %v1030 = vpack.c.bf16 %v1016, %v1014
      %v1031 = vpack.c.bf16 %v1017, %v1015
      %v1032 = vpack.c.bf16 %v1020, %v1018
      %v1033 = vpack.c.bf16 %v1021, %v1019
      %v1034 = vpack.c.bf16 %v1024, %v1022
      %v1035 = vpack.c.bf16 %v1025, %v1023
      %v1036 = vpack.c.bf16 %v1028, %v1026
      %v1037 = vpack.c.bf16 %v1029, %v1027
      %1038 = vmatprep.subr.bf16.mxu0 %v1031
      %1039 = vmatpush1.bf16.msra.mxu0 %v1030
      %1040 = vmatprep.subr.bf16.mxu0 %v1033
      %1041 = vmatpush1.bf16.msra.mxu0 %v1032
      %1042 = vmatprep.subr.bf16.mxu0 %v1035
      %1043 = vmatpush1.bf16.msra.mxu0 %v1034
      %1044 = vmatprep.subr.bf16.mxu0 %v1037
      %1045 = vmatpush1.bf16.msra.mxu0 %v1036
      %1046 = vmatprep.subr.bf16.mxu0 0
      %1047 = vmatpush1.bf16.msra.mxu0 0
      %1048 = vmatprep.subr.bf16.mxu0 0
      %1049 = vmatpush1.bf16.msra.mxu0 0
      %1050 = vmatprep.subr.bf16.mxu0 0
      %1051 = vmatpush1.bf16.msra.mxu0 0
      %1052 = vmatprep.subr.bf16.mxu0 0
      %1053 = vmatpush1.bf16.msra.mxu0 0
      %1054 = vmatprep.subr.bf16.mxu0 0
      %1055 = vmatpush1.bf16.msra.mxu0 0
      %1056 = vmatprep.subr.bf16.mxu0 0
      %1057 = vmatpush1.bf16.msra.mxu0 0
      %1058 = vmatprep.subr.bf16.mxu0 0
      %1059 = vmatpush1.bf16.msra.mxu0 0
      %1060 = vmatprep.subr.bf16.mxu0 0
      %1061 = vmatpush1.bf16.msra.mxu0 0
      %1062 = vmatprep.subr.bf16.mxu0 0
      %1063 = vmatpush1.bf16.msra.mxu0 0
      %1064 = vmatprep.subr.bf16.mxu0 0
      %1065 = vmatpush1.bf16.msra.mxu0 0
      %1066 = vmatprep.subr.bf16.mxu0 0
      %1067 = vmatpush1.bf16.msra.mxu0 0
      %1068 = vmatprep.subr.bf16.mxu0 0
      %1069 = vmatpush1.bf16.msra.mxu0 0
      %1070 = vmatprep.mubr.bf16.mxu0 0
      %1071 = vmatmul.mubr.bf16.gmra.mrb[0].mxu0 %v658
      %v1072 = vpop.f32.mrb[0].mxu0
      %v1073 = vadd.f32 0.0, %v1072
      %v1074 = vpop.f32.mrb[0].mxu0
      %v1075 = vadd.f32 0.0, %v1074
      %v1076 = vpop.f32.mrb[0].mxu0
      %v1077 = vpop.f32.mrb[0].mxu0
      %1078 = vdwg.mxu0
      %v1079 = vadd.f32 %v545, %v1073
      %v1080 = vadd.f32 %v547, %v1075
      %v1081 = vmax.f32 %v1079, 0.0
      %v1082 = vmax.f32 %v1080, 0.0
      %v1083 = vmax.f32 %v988, %v1081
      %v1084 = vmax.f32 %v989, %v1082
      %v1085 = vlaneseq
      %v1086 = vshrl.u32 %v1085, 7
      %v1087 = vsub.s32 5, %v1086
      %v1088 = vrot.slane %v488, %v1087
      %v1089 = vlaneseq
      %v1090 = vshrl.u32 %v1089, 7
      %v1091 = vsub.s32 5, %v1090
      %v1092 = vrot.slane %v489, %v1091
      %vm1093 = vcmp.eq.s32.totalorder %v600, %v1088
      %vm1094 = vcmp.eq.s32.totalorder %v600, %v1092
      %vm1095 = vcmp.eq.s32.totalorder %v601, %v1088
      %vm1096 = vcmp.eq.s32.totalorder %v601, %v1092
      %vm1097 = vcmp.eq.s32.totalorder %v602, %v1088
      %vm1098 = vcmp.eq.s32.totalorder %v602, %v1092
      %vm1099 = vcmp.eq.s32.totalorder %v603, %v1088
      %vm1100 = vcmp.eq.s32.totalorder %v603, %v1092
      %vm1101 = vcmp.eq.s32.totalorder %v604, %v1088
      %vm1102 = vcmp.eq.s32.totalorder %v604, %v1092
      %vm1103 = vcmp.eq.s32.totalorder %v605, %v1088
      %vm1104 = vcmp.eq.s32.totalorder %v605, %v1092
      %vm1105 = vcmp.eq.s32.totalorder %v606, %v1088
      %vm1106 = vcmp.eq.s32.totalorder %v606, %v1092
      %vm1107 = vcmp.eq.s32.totalorder %v607, %v1088
      %vm1108 = vcmp.eq.s32.totalorder %v607, %v1092
      %v1109 = vsel %vm1093, 1.0, 0.0
      %v1110 = vsel %vm1094, 1.0, 0.0
      %v1111 = vsel %vm1095, 1.0, 0.0
      %v1112 = vsel %vm1096, 1.0, 0.0
      %v1113 = vsel %vm1097, 1.0, 0.0
      %v1114 = vsel %vm1098, 1.0, 0.0
      %v1115 = vsel %vm1099, 1.0, 0.0
      %v1116 = vsel %vm1100, 1.0, 0.0
      %v1117 = vsel %vm1101, 1.0, 0.0
      %v1118 = vsel %vm1102, 1.0, 0.0
      %v1119 = vsel %vm1103, 1.0, 0.0
      %v1120 = vsel %vm1104, 1.0, 0.0
      %v1121 = vsel %vm1105, 1.0, 0.0
      %v1122 = vsel %vm1106, 1.0, 0.0
      %v1123 = vsel %vm1107, 1.0, 0.0
      %v1124 = vsel %vm1108, 1.0, 0.0
      %v1125 = vpack.c.bf16 %v1111, %v1109
      %v1126 = vpack.c.bf16 %v1112, %v1110
      %v1127 = vpack.c.bf16 %v1115, %v1113
      %v1128 = vpack.c.bf16 %v1116, %v1114
      %v1129 = vpack.c.bf16 %v1119, %v1117
      %v1130 = vpack.c.bf16 %v1120, %v1118
      %v1131 = vpack.c.bf16 %v1123, %v1121
      %v1132 = vpack.c.bf16 %v1124, %v1122
      %1133 = vmatprep.subr.bf16.mxu0 %v1126
      %1134 = vmatpush1.bf16.msra.mxu0 %v1125
      %1135 = vmatprep.subr.bf16.mxu0 %v1128
      %1136 = vmatpush1.bf16.msra.mxu0 %v1127
      %1137 = vmatprep.subr.bf16.mxu0 %v1130
      %1138 = vmatpush1.bf16.msra.mxu0 %v1129
      %1139 = vmatprep.subr.bf16.mxu0 %v1132
      %1140 = vmatpush1.bf16.msra.mxu0 %v1131
      %1141 = vmatprep.subr.bf16.mxu0 0
      %1142 = vmatpush1.bf16.msra.mxu0 0
      %1143 = vmatprep.subr.bf16.mxu0 0
      %1144 = vmatpush1.bf16.msra.mxu0 0
      %1145 = vmatprep.subr.bf16.mxu0 0
      %1146 = vmatpush1.bf16.msra.mxu0 0
      %1147 = vmatprep.subr.bf16.mxu0 0
      %1148 = vmatpush1.bf16.msra.mxu0 0
      %1149 = vmatprep.subr.bf16.mxu0 0
      %1150 = vmatpush1.bf16.msra.mxu0 0
      %1151 = vmatprep.subr.bf16.mxu0 0
      %1152 = vmatpush1.bf16.msra.mxu0 0
      %1153 = vmatprep.subr.bf16.mxu0 0
      %1154 = vmatpush1.bf16.msra.mxu0 0
      %1155 = vmatprep.subr.bf16.mxu0 0
      %1156 = vmatpush1.bf16.msra.mxu0 0
      %1157 = vmatprep.subr.bf16.mxu0 0
      %1158 = vmatpush1.bf16.msra.mxu0 0
      %1159 = vmatprep.subr.bf16.mxu0 0
      %1160 = vmatpush1.bf16.msra.mxu0 0
      %1161 = vmatprep.subr.bf16.mxu0 0
      %1162 = vmatpush1.bf16.msra.mxu0 0
      %1163 = vmatprep.subr.bf16.mxu0 0
      %1164 = vmatpush1.bf16.msra.mxu0 0
      %1165 = vmatprep.mubr.bf16.mxu0 0
      %1166 = vmatmul.mubr.bf16.gmra.mrb[0].mxu0 %v658
      %v1167 = vpop.f32.mrb[0].mxu0
      %v1168 = vadd.f32 0.0, %v1167
      %v1169 = vpop.f32.mrb[0].mxu0
      %v1170 = vadd.f32 0.0, %v1169
      %v1171 = vpop.f32.mrb[0].mxu0
      %v1172 = vpop.f32.mrb[0].mxu0
      %1173 = vdwg.mxu0
      %v1174 = vadd.f32 %v545, %v1168
      %v1175 = vadd.f32 %v547, %v1170
      %v1176 = vmax.f32 %v1174, 0.0
      %v1177 = vmax.f32 %v1175, 0.0
      %v1178 = vmax.f32 %v1083, %v1176
      %v1179 = vmax.f32 %v1084, %v1177
      %v1180 = vlaneseq
      %v1181 = vshrl.u32 %v1180, 7
      %v1182 = vsub.s32 6, %v1181
      %v1183 = vrot.slane %v488, %v1182
      %v1184 = vlaneseq
      %v1185 = vshrl.u32 %v1184, 7
      %v1186 = vsub.s32 6, %v1185
      %v1187 = vrot.slane %v489, %v1186
      %vm1188 = vcmp.eq.s32.totalorder %v600, %v1183
      %vm1189 = vcmp.eq.s32.totalorder %v600, %v1187
      %vm1190 = vcmp.eq.s32.totalorder %v601, %v1183
      %vm1191 = vcmp.eq.s32.totalorder %v601, %v1187
      %vm1192 = vcmp.eq.s32.totalorder %v602, %v1183
      %vm1193 = vcmp.eq.s32.totalorder %v602, %v1187
      %vm1194 = vcmp.eq.s32.totalorder %v603, %v1183
      %vm1195 = vcmp.eq.s32.totalorder %v603, %v1187
      %vm1196 = vcmp.eq.s32.totalorder %v604, %v1183
      %vm1197 = vcmp.eq.s32.totalorder %v604, %v1187
      %vm1198 = vcmp.eq.s32.totalorder %v605, %v1183
      %vm1199 = vcmp.eq.s32.totalorder %v605, %v1187
      %vm1200 = vcmp.eq.s32.totalorder %v606, %v1183
      %vm1201 = vcmp.eq.s32.totalorder %v606, %v1187
      %vm1202 = vcmp.eq.s32.totalorder %v607, %v1183
      %vm1203 = vcmp.eq.s32.totalorder %v607, %v1187
      %v1204 = vsel %vm1188, 1.0, 0.0
      %v1205 = vsel %vm1189, 1.0, 0.0
      %v1206 = vsel %vm1190, 1.0, 0.0
      %v1207 = vsel %vm1191, 1.0, 0.0
      %v1208 = vsel %vm1192, 1.0, 0.0
      %v1209 = vsel %vm1193, 1.0, 0.0
      %v1210 = vsel %vm1194, 1.0, 0.0
      %v1211 = vsel %vm1195, 1.0, 0.0
      %v1212 = vsel %vm1196, 1.0, 0.0
      %v1213 = vsel %vm1197, 1.0, 0.0
      %v1214 = vsel %vm1198, 1.0, 0.0
      %v1215 = vsel %vm1199, 1.0, 0.0
      %v1216 = vsel %vm1200, 1.0, 0.0
      %v1217 = vsel %vm1201, 1.0, 0.0
      %v1218 = vsel %vm1202, 1.0, 0.0
      %v1219 = vsel %vm1203, 1.0, 0.0
      %v1220 = vpack.c.bf16 %v1206, %v1204
      %v1221 = vpack.c.bf16 %v1207, %v1205
      %v1222 = vpack.c.bf16 %v1210, %v1208
      %v1223 = vpack.c.bf16 %v1211, %v1209
      %v1224 = vpack.c.bf16 %v1214, %v1212
      %v1225 = vpack.c.bf16 %v1215, %v1213
      %v1226 = vpack.c.bf16 %v1218, %v1216
      %v1227 = vpack.c.bf16 %v1219, %v1217
      %1228 = vmatprep.subr.bf16.mxu0 %v1221
      %1229 = vmatpush1.bf16.msra.mxu0 %v1220
      %1230 = vmatprep.subr.bf16.mxu0 %v1223
      %1231 = vmatpush1.bf16.msra.mxu0 %v1222
      %1232 = vmatprep.subr.bf16.mxu0 %v1225
      %1233 = vmatpush1.bf16.msra.mxu0 %v1224
      %1234 = vmatprep.subr.bf16.mxu0 %v1227
      %1235 = vmatpush1.bf16.msra.mxu0 %v1226
      %1236 = vmatprep.subr.bf16.mxu0 0
      %1237 = vmatpush1.bf16.msra.mxu0 0
      %1238 = vmatprep.subr.bf16.mxu0 0
      %1239 = vmatpush1.bf16.msra.mxu0 0
      %1240 = vmatprep.subr.bf16.mxu0 0
      %1241 = vmatpush1.bf16.msra.mxu0 0
      %1242 = vmatprep.subr.bf16.mxu0 0
      %1243 = vmatpush1.bf16.msra.mxu0 0
      %1244 = vmatprep.subr.bf16.mxu0 0
      %1245 = vmatpush1.bf16.msra.mxu0 0
      %1246 = vmatprep.subr.bf16.mxu0 0
      %1247 = vmatpush1.bf16.msra.mxu0 0
      %1248 = vmatprep.subr.bf16.mxu0 0
      %1249 = vmatpush1.bf16.msra.mxu0 0
      %1250 = vmatprep.subr.bf16.mxu0 0
      %1251 = vmatpush1.bf16.msra.mxu0 0
      %1252 = vmatprep.subr.bf16.mxu0 0
      %1253 = vmatpush1.bf16.msra.mxu0 0
      %1254 = vmatprep.subr.bf16.mxu0 0
      %1255 = vmatpush1.bf16.msra.mxu0 0
      %1256 = vmatprep.subr.bf16.mxu0 0
      %1257 = vmatpush1.bf16.msra.mxu0 0
      %1258 = vmatprep.subr.bf16.mxu0 0
      %1259 = vmatpush1.bf16.msra.mxu0 0
      %1260 = vmatprep.mubr.bf16.mxu0 0
      %1261 = vmatmul.mubr.bf16.gmra.mrb[0].mxu0 %v658
      %v1262 = vpop.f32.mrb[0].mxu0
      %v1263 = vadd.f32 0.0, %v1262
      %v1264 = vpop.f32.mrb[0].mxu0
      %v1265 = vadd.f32 0.0, %v1264
      %v1266 = vpop.f32.mrb[0].mxu0
      %v1267 = vpop.f32.mrb[0].mxu0
      %1268 = vdwg.mxu0
      %v1269 = vadd.f32 %v545, %v1263
      %v1270 = vadd.f32 %v547, %v1265
      %v1271 = vmax.f32 %v1269, 0.0
      %v1272 = vmax.f32 %v1270, 0.0
      %v1273 = vmax.f32 %v1178, %v1271
      %v1274 = vmax.f32 %v1179, %v1272
      %v1275 = vlaneseq
      %v1276 = vshrl.u32 %v1275, 7
      %v1277 = vsub.s32 7, %v1276
      %v1278 = vrot.slane %v488, %v1277
      %v1279 = vlaneseq
      %v1280 = vshrl.u32 %v1279, 7
      %v1281 = vsub.s32 7, %v1280
      %v1282 = vrot.slane %v489, %v1281
      %vm1283 = vcmp.eq.s32.totalorder %v600, %v1278
      %vm1284 = vcmp.eq.s32.totalorder %v600, %v1282
      %vm1285 = vcmp.eq.s32.totalorder %v601, %v1278
      %vm1286 = vcmp.eq.s32.totalorder %v601, %v1282
      %vm1287 = vcmp.eq.s32.totalorder %v602, %v1278
      %vm1288 = vcmp.eq.s32.totalorder %v602, %v1282
      %vm1289 = vcmp.eq.s32.totalorder %v603, %v1278
      %vm1290 = vcmp.eq.s32.totalorder %v603, %v1282
      %vm1291 = vcmp.eq.s32.totalorder %v604, %v1278
      %vm1292 = vcmp.eq.s32.totalorder %v604, %v1282
      %vm1293 = vcmp.eq.s32.totalorder %v605, %v1278
      %vm1294 = vcmp.eq.s32.totalorder %v605, %v1282
      %vm1295 = vcmp.eq.s32.totalorder %v606, %v1278
      %vm1296 = vcmp.eq.s32.totalorder %v606, %v1282
      %vm1297 = vcmp.eq.s32.totalorder %v607, %v1278
      %vm1298 = vcmp.eq.s32.totalorder %v607, %v1282
      %v1299 = vsel %vm1283, 1.0, 0.0
      %v1300 = vsel %vm1284, 1.0, 0.0
      %v1301 = vsel %vm1285, 1.0, 0.0
      %v1302 = vsel %vm1286, 1.0, 0.0
      %v1303 = vsel %vm1287, 1.0, 0.0
      %v1304 = vsel %vm1288, 1.0, 0.0
      %v1305 = vsel %vm1289, 1.0, 0.0
      %v1306 = vsel %vm1290, 1.0, 0.0
      %v1307 = vsel %vm1291, 1.0, 0.0
      %v1308 = vsel %vm1292, 1.0, 0.0
      %v1309 = vsel %vm1293, 1.0, 0.0
      %v1310 = vsel %vm1294, 1.0, 0.0
      %v1311 = vsel %vm1295, 1.0, 0.0
      %v1312 = vsel %vm1296, 1.0, 0.0
      %v1313 = vsel %vm1297, 1.0, 0.0
      %v1314 = vsel %vm1298, 1.0, 0.0
      %v1315 = vpack.c.bf16 %v1301, %v1299
      %v1316 = vpack.c.bf16 %v1302, %v1300
      %v1317 = vpack.c.bf16 %v1305, %v1303
      %v1318 = vpack.c.bf16 %v1306, %v1304
      %v1319 = vpack.c.bf16 %v1309, %v1307
      %v1320 = vpack.c.bf16 %v1310, %v1308
      %v1321 = vpack.c.bf16 %v1313, %v1311
      %v1322 = vpack.c.bf16 %v1314, %v1312
      %1323 = vmatprep.subr.bf16.mxu0 %v1316
      %1324 = vmatpush1.bf16.msra.mxu0 %v1315
      %1325 = vmatprep.subr.bf16.mxu0 %v1318
      %1326 = vmatpush1.bf16.msra.mxu0 %v1317
      %1327 = vmatprep.subr.bf16.mxu0 %v1320
      %1328 = vmatpush1.bf16.msra.mxu0 %v1319
      %1329 = vmatprep.subr.bf16.mxu0 %v1322
      %1330 = vmatpush1.bf16.msra.mxu0 %v1321
      %1331 = vmatprep.subr.bf16.mxu0 0
      %1332 = vmatpush1.bf16.msra.mxu0 0
      %1333 = vmatprep.subr.bf16.mxu0 0
      %1334 = vmatpush1.bf16.msra.mxu0 0
      %1335 = vmatprep.subr.bf16.mxu0 0
      %1336 = vmatpush1.bf16.msra.mxu0 0
      %1337 = vmatprep.subr.bf16.mxu0 0
      %1338 = vmatpush1.bf16.msra.mxu0 0
      %1339 = vmatprep.subr.bf16.mxu0 0
      %1340 = vmatpush1.bf16.msra.mxu0 0
      %1341 = vmatprep.subr.bf16.mxu0 0
      %1342 = vmatpush1.bf16.msra.mxu0 0
      %1343 = vmatprep.subr.bf16.mxu0 0
      %1344 = vmatpush1.bf16.msra.mxu0 0
      %1345 = vmatprep.subr.bf16.mxu0 0
      %1346 = vmatpush1.bf16.msra.mxu0 0
      %1347 = vmatprep.subr.bf16.mxu0 0
      %1348 = vmatpush1.bf16.msra.mxu0 0
      %1349 = vmatprep.subr.bf16.mxu0 0
      %1350 = vmatpush1.bf16.msra.mxu0 0
      %1351 = vmatprep.subr.bf16.mxu0 0
      %1352 = vmatpush1.bf16.msra.mxu0 0
      %1353 = vmatprep.subr.bf16.mxu0 0
      %1354 = vmatpush1.bf16.msra.mxu0 0
      %1355 = vmatprep.mubr.bf16.mxu0 0
      %1356 = vmatmul.mubr.bf16.gmra.mrb[0].mxu0 %v658
      %v1357 = vpop.f32.mrb[0].mxu0
      %v1358 = vadd.f32 0.0, %v1357
      %v1359 = vpop.f32.mrb[0].mxu0
      %v1360 = vadd.f32 0.0, %v1359
      %v1361 = vpop.f32.mrb[0].mxu0
      %v1362 = vpop.f32.mrb[0].mxu0
      %1363 = vdwg.mxu0
      %v1364 = vadd.f32 %v545, %v1358
      %v1365 = vadd.f32 %v547, %v1360
      %v1366 = vmax.f32 %v1364, 0.0
      %v1367 = vmax.f32 %v1365, 0.0
      %v1368 = vmax.f32 %v1273, %v1366
      %v1369 = vmax.f32 %v1274, %v1367
      %v1370 = vlaneseq
      %v1371 = vshrl.u32 %v1370, 7
      %v1372 = vsub.s32 0, %v1371
      %v1373 = vrot.slane %v490, %v1372
      %v1374 = vlaneseq
      %v1375 = vshrl.u32 %v1374, 7
      %v1376 = vsub.s32 0, %v1375
      %v1377 = vrot.slane %v491, %v1376
      %vm1378 = vcmp.eq.s32.totalorder %v600, %v1373
      %vm1379 = vcmp.eq.s32.totalorder %v600, %v1377
      %vm1380 = vcmp.eq.s32.totalorder %v601, %v1373
      %vm1381 = vcmp.eq.s32.totalorder %v601, %v1377
      %vm1382 = vcmp.eq.s32.totalorder %v602, %v1373
      %vm1383 = vcmp.eq.s32.totalorder %v602, %v1377
      %vm1384 = vcmp.eq.s32.totalorder %v603, %v1373
      %vm1385 = vcmp.eq.s32.totalorder %v603, %v1377
      %vm1386 = vcmp.eq.s32.totalorder %v604, %v1373
      %vm1387 = vcmp.eq.s32.totalorder %v604, %v1377
      %vm1388 = vcmp.eq.s32.totalorder %v605, %v1373
      %vm1389 = vcmp.eq.s32.totalorder %v605, %v1377
      %vm1390 = vcmp.eq.s32.totalorder %v606, %v1373
      %vm1391 = vcmp.eq.s32.totalorder %v606, %v1377
      %vm1392 = vcmp.eq.s32.totalorder %v607, %v1373
      %vm1393 = vcmp.eq.s32.totalorder %v607, %v1377
      %v1394 = vsel %vm1378, 1.0, 0.0
      %v1395 = vsel %vm1379, 1.0, 0.0
      %v1396 = vsel %vm1380, 1.0, 0.0
      %v1397 = vsel %vm1381, 1.0, 0.0
      %v1398 = vsel %vm1382, 1.0, 0.0
      %v1399 = vsel %vm1383, 1.0, 0.0
      %v1400 = vsel %vm1384, 1.0, 0.0
      %v1401 = vsel %vm1385, 1.0, 0.0
      %v1402 = vsel %vm1386, 1.0, 0.0
      %v1403 = vsel %vm1387, 1.0, 0.0
      %v1404 = vsel %vm1388, 1.0, 0.0
      %v1405 = vsel %vm1389, 1.0, 0.0
      %v1406 = vsel %vm1390, 1.0, 0.0
      %v1407 = vsel %vm1391, 1.0, 0.0
      %v1408 = vsel %vm1392, 1.0, 0.0
      %v1409 = vsel %vm1393, 1.0, 0.0
      %v1410 = vpack.c.bf16 %v1396, %v1394
      %v1411 = vpack.c.bf16 %v1397, %v1395
      %v1412 = vpack.c.bf16 %v1400, %v1398
      %v1413 = vpack.c.bf16 %v1401, %v1399
      %v1414 = vpack.c.bf16 %v1404, %v1402
      %v1415 = vpack.c.bf16 %v1405, %v1403
      %v1416 = vpack.c.bf16 %v1408, %v1406
      %v1417 = vpack.c.bf16 %v1409, %v1407
      %1418 = vmatprep.subr.bf16.mxu0 %v1411
      %1419 = vmatpush1.bf16.msra.mxu0 %v1410
      %1420 = vmatprep.subr.bf16.mxu0 %v1413
      %1421 = vmatpush1.bf16.msra.mxu0 %v1412
      %1422 = vmatprep.subr.bf16.mxu0 %v1415
      %1423 = vmatpush1.bf16.msra.mxu0 %v1414
      %1424 = vmatprep.subr.bf16.mxu0 %v1417
      %1425 = vmatpush1.bf16.msra.mxu0 %v1416
      %1426 = vmatprep.subr.bf16.mxu0 0
      %1427 = vmatpush1.bf16.msra.mxu0 0
      %1428 = vmatprep.subr.bf16.mxu0 0
      %1429 = vmatpush1.bf16.msra.mxu0 0
      %1430 = vmatprep.subr.bf16.mxu0 0
      %1431 = vmatpush1.bf16.msra.mxu0 0
      %1432 = vmatprep.subr.bf16.mxu0 0
      %1433 = vmatpush1.bf16.msra.mxu0 0
      %1434 = vmatprep.subr.bf16.mxu0 0
      %1435 = vmatpush1.bf16.msra.mxu0 0
      %1436 = vmatprep.subr.bf16.mxu0 0
      %1437 = vmatpush1.bf16.msra.mxu0 0
      %1438 = vmatprep.subr.bf16.mxu0 0
      %1439 = vmatpush1.bf16.msra.mxu0 0
      %1440 = vmatprep.subr.bf16.mxu0 0
      %1441 = vmatpush1.bf16.msra.mxu0 0
      %1442 = vmatprep.subr.bf16.mxu0 0
      %1443 = vmatpush1.bf16.msra.mxu0 0
      %1444 = vmatprep.subr.bf16.mxu0 0
      %1445 = vmatpush1.bf16.msra.mxu0 0
      %1446 = vmatprep.subr.bf16.mxu0 0
      %1447 = vmatpush1.bf16.msra.mxu0 0
      %1448 = vmatprep.subr.bf16.mxu0 0
      %1449 = vmatpush1.bf16.msra.mxu0 0
      %1450 = vmatprep.mubr.bf16.mxu0 0
      %1451 = vmatmul.mubr.bf16.gmra.mrb[0].mxu0 %v658
      %v1452 = vpop.f32.mrb[0].mxu0
      %v1453 = vadd.f32 0.0, %v1452
      %v1454 = vpop.f32.mrb[0].mxu0
      %v1455 = vadd.f32 0.0, %v1454
      %v1456 = vpop.f32.mrb[0].mxu0
      %v1457 = vpop.f32.mrb[0].mxu0
      %1458 = vdwg.mxu0
      %v1459 = vadd.f32 %v545, %v1453
      %v1460 = vadd.f32 %v547, %v1455
      %v1461 = vmax.f32 %v1459, 0.0
      %v1462 = vmax.f32 %v1460, 0.0
      %v1463 = vmax.f32 %v1368, %v1461
      %v1464 = vmax.f32 %v1369, %v1462
      %v1465 = vld [vmem:[%s8] sm:$0x3]
      %v1466 = vpack.c.bf16 %v1463, %v1463
      %v1467 = vpack.c.bf16 %v1464, %v1464
      %v1468 = vld [vmem:[%s9] sm:$0xf]
      %1470 = vset.pattern.permute.xlu0 0
      %1471 = vperm.xlu0 %1470, %v1468
      %v1472 = vpop.permute.xlu0 %1471
      %vm1474 = vcmask 64512
      %v1476 = vsel %vm1474, %v1465, 0
      %vm1478 = vcmask 1043456
      %v1480 = vsel %vm1478, %v1466, 0
      %v1483 = vsel %vm1478, %v1467, 0
      %1485 = vmatprep.subr.bf16.mxu0 %v1483
      %1486 = vmatpush1.bf16.msra.mxu0 %v1480
      %1487 = vmatprep.subr.bf16.mxu0 0
      %1488 = vmatpush1.bf16.msra.mxu0 0
      %1489 = vmatprep.subr.bf16.mxu0 0
      %1490 = vmatpush1.bf16.msra.mxu0 0
      %1491 = vmatprep.subr.bf16.mxu0 0
      %1492 = vmatpush1.bf16.msra.mxu0 0
      %1493 = vmatprep.subr.bf16.mxu0 0
      %1494 = vmatpush1.bf16.msra.mxu0 0
      %1495 = vmatprep.subr.bf16.mxu0 0
      %1496 = vmatpush1.bf16.msra.mxu0 0
      %1497 = vmatprep.subr.bf16.mxu0 0
      %1498 = vmatpush1.bf16.msra.mxu0 0
      %1499 = vmatprep.subr.bf16.mxu0 0
      %1500 = vmatpush1.bf16.msra.mxu0 0
      %1501 = vmatprep.subr.bf16.mxu0 0
      %1502 = vmatpush1.bf16.msra.mxu0 0
      %1503 = vmatprep.subr.bf16.mxu0 0
      %1504 = vmatpush1.bf16.msra.mxu0 0
      %1505 = vmatprep.subr.bf16.mxu0 0
      %1506 = vmatpush1.bf16.msra.mxu0 0
      %1507 = vmatprep.subr.bf16.mxu0 0
      %1508 = vmatpush1.bf16.msra.mxu0 0
      %1509 = vmatprep.subr.bf16.mxu0 0
      %1510 = vmatpush1.bf16.msra.mxu0 0
      %1511 = vmatprep.subr.bf16.mxu0 0
      %1512 = vmatpush1.bf16.msra.mxu0 0
      %1513 = vmatprep.subr.bf16.mxu0 0
      %1514 = vmatpush1.bf16.msra.mxu0 0
      %1515 = vmatprep.subr.bf16.mxu0 0
      %1516 = vmatpush1.bf16.msra.mxu0 0
      %1517 = vmatprep.mubr.bf16.mxu0 0
      %1518 = vmatmul.mubr.bf16.gmra.mrb[0].mxu0 %v1476
      %v1519 = vpop.f32.mrb[0].mxu0
      %v1520 = vadd.f32 %v1472, %v1519
      %v1521 = vpop.f32.mrb[0].mxu0
      %v1522 = vadd.f32 %v1472, %v1521
      %v1523 = vpop.f32.mrb[0].mxu0
      %v1524 = vpop.f32.mrb[0].mxu0
      %1525 = vdwg.mxu0
      %v1526 = vld [vmem:[%s463] sm:$0xff]
      %v1528 = vcombine.high %v1526, %v1526
      %v1530 = vadd.f32 %v1520, %v1526
      %v1531 = vadd.f32 %v1522, %v1528
      %v1534 = vcombine.low %v1530, %v1531
      %1536 = vst [vmem:[%s473] sm:$0xff] %v1534
      %v1537 = vld [vmem:[%s468] sm:$0xff]
      %v1539 = vcombine.high %v1537, %v1537
      %v1541 = vadd.f32 %v1520, %v1537
      %v1542 = vadd.f32 %v1522, %v1539
      %v1545 = vcombine.low %v1541, %v1542
      %1547 = vst [vmem:[%s478] sm:$0xff] %v1545
      %p1548 = scmp.lt.s32.totalorder %s23, 1
      %s1549 = scalar_select %p1548, %s23, 1
      %s1550 = smul.addr %s1549, 2
      %s1551 = smul.addr %s1550, 4
      %s1552 = scalar_lea.vmem %s10, %s1551
      %p1553 = scmp.lt.s32.totalorder %s23, 1
      %s1554 = scalar_select %p1553, %s23, 1
      %s1555 = smul.addr %s1554, 2
      %s1556 = smul.addr %s1555, 4
      %s1557 = scalar_lea.vmem %s11, %s1556
      // Predicated region
      $region61: #{align_grapher_forward.7} parent=59 // pred_check
        %p1558 = pneg %p276
      $region62: #{align_grapher_forward.7} parent=59 // pred_check_branch
        %1560 = sbr.rel (%p1558) target = $region64
      $region63: #{align_grapher_forward.7} parent=59 // pred_region
        _
      $region64: #{align_grapher_forward.7} parent=59 // pred_fallthru
        _
      // Predicated region
      $region65: #{align_grapher_forward.7} parent=59 // pred_check
        %p1561 = pneg %p302
      $region66: #{align_grapher_forward.7} parent=59 // pred_check_branch
        %1563 = sbr.rel (%p1561) target = $region68
      $region67: #{align_grapher_forward.7} parent=59 // pred_region
        _
      $region68: #{align_grapher_forward.7} parent=59 // pred_fallthru
        _
    $region60: #{align_grapher_forward.7} parent=5 // pred_fallthru
      _
    %p1564 = scmp.le.s32.totalorder 2, %s18
    // Predicated region
    $region69: #{align_grapher_forward.7} parent=5 // pred_check
      %p1565 = pneg %p1564
    $region70: #{align_grapher_forward.7} parent=5 // pred_check_branch
      %1567 = sbr.rel (%p1565) target = $region72
    $region71: #{align_grapher_forward.7} parent=5 // pred_region
      %s1568 = ssub.s32 %s18, 2
      // Predicated region
      $region73: #{align_grapher_forward.7} parent=71 // pred_check
        %p1569 = pneg %p282
      $region74: #{align_grapher_forward.7} parent=71 // pred_check_branch
        %1571 = sbr.rel (%p1569) target = $region76
      $region75: #{align_grapher_forward.7} parent=71 // pred_region
        %p1572 = scmp.lt.s32.totalorder %s24, 1
        %s1573 = scalar_select %p1572, %s24, 1
        %s1574 = smul.addr %s1573, 2
        %s1575 = smul.addr %s1574, 4
        %s1576 = scalar_lea.vmem %s10, %s1575
      $region76: #{align_grapher_forward.7} parent=71 // pred_fallthru
        _
      // Predicated region
      $region77: #{align_grapher_forward.7} parent=71 // pred_check
        %p1577 = pneg %p308
      $region78: #{align_grapher_forward.7} parent=71 // pred_check_branch
        %1579 = sbr.rel (%p1577) target = $region80
      $region79: #{align_grapher_forward.7} parent=71 // pred_region
        %p1580 = scmp.lt.s32.totalorder %s24, 1
        %s1581 = scalar_select %p1580, %s24, 1
        %s1582 = smul.addr %s1581, 2
        %s1583 = smul.addr %s1582, 4
        %s1584 = scalar_lea.vmem %s11, %s1583
      $region80: #{align_grapher_forward.7} parent=71 // pred_fallthru
        _
    $region72: #{align_grapher_forward.7} parent=5 // pred_fallthru
      _
  $region6: #{align_grapher_forward.7} parent=0 // loop_footer
    %s22 = sadd.s32 1, %s18
  $region7: #{align_grapher_forward.7} parent=0 // loop_footer_branch
    %17 = sbr.rel target = $region3
  $region8: #{align_grapher_forward.7} parent=0 // loop_exit
    _

</llo_original>
